<compile_context>
chip_gen: v5e
topology: v5e:2x2
jax: 0.10.0
libtpu: 0.0.40
codegen_flags: <defaults>
</compile_context>

<pallas_src>
import functools

import jax
import jax.numpy as jnp
from jax import lax
from jax.experimental import pallas as pl
from jax.experimental.pallas import tpu as pltpu

EPS = 1e-5
EXPANSION = 4
LANE = 128
VMEM_LIMIT = 48 * 1024 * 1024   # below v7x's 64 MiB physical VMEM


def _round_up(v, m):
    return -(-v // m) * m


def _pick_tm(m):
    """Largest convenient row tile <= 512 (divisor of m when possible)."""
    for cand in (512, 448, 384, 320, 256, 192, 128, 64, 32, 16, 8):
        if cand <= m and m % cand == 0:
            return cand
    return min(512, _round_up(m, 8))


def _pad_rows(x, tm):
    m = x.shape[0]
    m_pad = _round_up(m, tm)
    if m_pad != m:
        x = jnp.pad(x, ((0, m_pad - m), (0, 0)))
    return x


# ---------------------------------------------------------------------------
# Matmul (MXU, f32 acc) + per-tile BN partial statistics
# ---------------------------------------------------------------------------
def _mm_stats_kernel(x_ref, w_ref, y_ref, st_ref):
    y = jnp.dot(x_ref[...], w_ref[...], preferred_element_type=jnp.float32)
    y_ref[...] = y.astype(y_ref.dtype)
    s1 = jnp.sum(y, axis=0, keepdims=True)
    s2 = jnp.sum(y * y, axis=0, keepdims=True)
    st_ref[0] = jnp.concatenate([s1, s2], axis=0)


def _matmul_stats(x_bf16, w_bf16, *, tm, out_dtype=jnp.float32):
    m, k = x_bf16.shape
    cout = w_bf16.shape[1]
    x_bf16 = _pad_rows(x_bf16, tm)          # zero rows: no effect on col stats
    m_pad = x_bf16.shape[0]
    mt = m_pad // tm
    y, st = pl.pallas_call(
        _mm_stats_kernel,
        out_shape=[jax.ShapeDtypeStruct((m_pad, cout), out_dtype),
                   jax.ShapeDtypeStruct((mt, 2, cout), jnp.float32)],
        grid=(mt,),
        in_specs=[pl.BlockSpec((tm, k), lambda i: (i, 0)),
                  pl.BlockSpec((k, cout), lambda i: (0, 0))],      # resident weight
        out_specs=[pl.BlockSpec((tm, cout), lambda i: (i, 0)),
                   pl.BlockSpec((1, 2, cout), lambda i: (i, 0, 0))],
        compiler_params=pltpu.CompilerParams(
            dimension_semantics=("parallel",),
            vmem_limit_bytes=VMEM_LIMIT),
    )(x_bf16, w_bf16)
    return y, st


# ---------------------------------------------------------------------------
# Fused [BN scale/bias + ReLU on the input] -> matmul + stats
# (used for conv3: its input is the raw conv2 output; normalizing inside the
#  consumer kernel removes one full HBM round trip of the activation)
# ---------------------------------------------------------------------------
def _mm_norm_stats_kernel(x_ref, sc_ref, bi_ref, w_ref, y_ref, st_ref, *,
                          m_true, mask_rows):
    tm = x_ref.shape[0]
    a = x_ref[...].astype(jnp.float32) * sc_ref[...] + bi_ref[...]
    a = jnp.maximum(a, 0.0)
    if mask_rows:
        # padded rows were zero pre-normalization; force them back to zero so
        # neither the matmul output rows nor the BN statistics see relu(bias)
        row = pl.program_id(0) * tm + lax.broadcasted_iota(jnp.int32, (tm, 1), 0)
        a = jnp.where(row < m_true, a, 0.0)
    y = jnp.dot(a.astype(jnp.bfloat16), w_ref[...],
                preferred_element_type=jnp.float32)
    y_ref[...] = y.astype(y_ref.dtype)
    s1 = jnp.sum(y, axis=0, keepdims=True)
    s2 = jnp.sum(y * y, axis=0, keepdims=True)
    st_ref[0] = jnp.concatenate([s1, s2], axis=0)


def _matmul_norm_stats(y_in_pad, scale_in, bias_in, w_bf16, *, tm, m_true,
                       out_dtype=jnp.float32):
    m_pad, k = y_in_pad.shape
    cout = w_bf16.shape[1]
    mt = m_pad // tm
    kernel = functools.partial(_mm_norm_stats_kernel, m_true=m_true,
                               mask_rows=(m_pad != m_true))
    vec_spec = pl.BlockSpec((1, k), lambda i: (0, 0))
    y, st = pl.pallas_call(
        kernel,
        out_shape=[jax.ShapeDtypeStruct((m_pad, cout), out_dtype),
                   jax.ShapeDtypeStruct((mt, 2, cout), jnp.float32)],
        grid=(mt,),
        in_specs=[pl.BlockSpec((tm, k), lambda i: (i, 0)),
                  vec_spec, vec_spec,
                  pl.BlockSpec((k, cout), lambda i: (0, 0))],      # resident weight
        out_specs=[pl.BlockSpec((tm, cout), lambda i: (i, 0)),
                   pl.BlockSpec((1, 2, cout), lambda i: (i, 0, 0))],
        compiler_params=pltpu.CompilerParams(
            dimension_semantics=("parallel",),
            vmem_limit_bytes=VMEM_LIMIT),
    )(y_in_pad, scale_in, bias_in, w_bf16)
    return y, st


# ---------------------------------------------------------------------------
# 3x3 conv: 9 accumulated MXU matmuls per image (no 9x im2col in HBM)
# ---------------------------------------------------------------------------
def _conv3x3_stats_kernel(x_ref, w_ref, y_ref, st_ref, *, stride, ho, wo):
    s = stride
    acc = None
    for dy in range(3):
        for dx in range(3):
            slab = dx * s + (dy % s)
            off = (dy // s) * wo
            win = x_ref[0, slab, pl.ds(off, ho * wo), :]
            part = jnp.dot(win, w_ref[dy * 3 + dx],
                           preferred_element_type=jnp.float32)
            acc = part if acc is None else acc + part
    y_ref[0] = acc.astype(y_ref.dtype)
    s1 = jnp.sum(acc, axis=0, keepdims=True)
    s2 = jnp.sum(acc * acc, axis=0, keepdims=True)
    st_ref[0] = jnp.concatenate([s1, s2], axis=0)


def _conv2_slabs(a, stride):
    """Re-pack NHWC (bf16) into per-tap contiguous slabs: tap (dy, dx) is a
    contiguous ho*wo-row window of slab dx*stride + (dy % stride)."""
    n, h, w, c = a.shape
    s = stride
    hp, wp = h + 2, w + 2
    hp_pad = _round_up(hp, s)
    ap = jnp.pad(a, ((0, 0), (1, 1 + hp_pad - hp), (1, 1), (0, 0)))
    ho = (hp - 3) // s + 1
    wo = (wp - 3) // s + 1
    r = hp_pad // s
    slabs = []
    for dx in range(3):
        wsel = ap[:, :, dx:dx + s * (wo - 1) + 1:s, :]     # (n, hp_pad, wo, c)
        for py in range(s):
            hsel = wsel[:, py::s, :, :]                    # (n, r, wo, c)
            slabs.append(hsel.reshape(n, r * wo, c))
    x = jnp.stack(slabs, axis=1)                           # (n, 3*s, r*wo, c)
    return x, ho, wo


def _conv3x3_stats(slabs, w_taps, *, stride, ho, wo):
    # TODO(synk): for very large images, additionally tile over output-row
    # chunks within an image (needs pl.Element halo indexing).
    n, ns, rw, cp = slabs.shape
    cm = w_taps.shape[2]
    kernel = functools.partial(_conv3x3_stats_kernel, stride=stride, ho=ho, wo=wo)
    y, st = pl.pallas_call(
        kernel,
        out_shape=[jax.ShapeDtypeStruct((n, ho * wo, cm), jnp.bfloat16),
                   jax.ShapeDtypeStruct((n, 2, cm), jnp.float32)],
        grid=(n,),
        in_specs=[pl.BlockSpec((1, ns, rw, cp), lambda i: (i, 0, 0, 0)),
                  pl.BlockSpec((9, cp, cm), lambda i: (0, 0, 0))],  # resident weights
        out_specs=[pl.BlockSpec((1, ho * wo, cm), lambda i: (i, 0, 0)),
                   pl.BlockSpec((1, 2, cm), lambda i: (i, 0, 0))],
        compiler_params=pltpu.CompilerParams(
            dimension_semantics=("parallel",),
            vmem_limit_bytes=VMEM_LIMIT),
    )(slabs, w_taps)
    return y, st


# ---------------------------------------------------------------------------
# Normalize kernels: folded BN scale/bias (+ residual scale/bias) (+ ReLU)
# ---------------------------------------------------------------------------
def _norm_kernel(y_ref, sc_ref, bi_ref, o_ref, *, relu):
    out = y_ref[...].astype(jnp.float32) * sc_ref[...] + bi_ref[...]
    if relu:
        out = jnp.maximum(out, 0.0)
    o_ref[...] = out.astype(o_ref.dtype)


def _norm_add_kernel(y_ref, sc_ref, bi_ref, r_ref, rs_ref, rb_ref, o_ref, *, relu):
    out = (y_ref[...].astype(jnp.float32) * sc_ref[...] + bi_ref[...]
           + r_ref[...].astype(jnp.float32) * rs_ref[...] + rb_ref[...])
    if relu:
        out = jnp.maximum(out, 0.0)
    o_ref[...] = out.astype(o_ref.dtype)


def _normalize(y_pad, scale, bias, *, m_true, relu, out_dtype, tm,
               residual=None, rscale=None, rbias=None):
    m_pad, c = y_pad.shape
    mt = m_pad // tm
    row_spec = pl.BlockSpec((tm, c), lambda i: (i, 0))
    vec_spec = pl.BlockSpec((1, c), lambda i: (0, 0))      # stays VMEM-resident
    if residual is None:
        kernel = functools.partial(_norm_kernel, relu=relu)
        in_specs = [row_spec, vec_spec, vec_spec]
        args = (y_pad, scale, bias)
    else:
        kernel = functools.partial(_norm_add_kernel, relu=relu)
        in_specs = [row_spec, vec_spec, vec_spec, row_spec, vec_spec, vec_spec]
        args = (y_pad, scale, bias, residual, rscale, rbias)
    out = pl.pallas_call(
        kernel,
        out_shape=jax.ShapeDtypeStruct((m_pad, c), out_dtype),
        grid=(mt,),
        in_specs=in_specs,
        out_specs=row_spec,
        compiler_params=pltpu.CompilerParams(
            dimension_semantics=("parallel",),
            vmem_limit_bytes=VMEM_LIMIT),
    )(*args)
    return out[:m_true]


def _fold_bn(partial, m_true, gamma, beta, c_pad):
    """Reduce per-tile (sum, sumsq) partials -> folded scale/bias (tiny)."""
    s = jnp.sum(partial, axis=0)                           # (2, C)
    c = gamma.shape[0]
    g = jnp.pad(gamma.astype(jnp.float32), (0, c_pad - c), constant_values=1.0)
    b = jnp.pad(beta.astype(jnp.float32), (0, c_pad - c))
    mean = s[0] / m_true
    var = jnp.maximum(s[1] / m_true - mean * mean, 0.0)    # biased var (PyTorch BN)
    scale = g * jax.lax.rsqrt(var + EPS)
    bias = b - mean * scale
    return scale.reshape(1, c_pad), bias.reshape(1, c_pad)


# ---------------------------------------------------------------------------
# Weight layout prep (pad channels to lane multiples, cast to bf16)
# ---------------------------------------------------------------------------
def _prep_1x1(w, cin_p, cout_p):
    cout, cin = w.shape[0], w.shape[1]
    m = jnp.transpose(w[:, :, 0, 0], (1, 0))               # (cin, cout)
    m = jnp.pad(m, ((0, cin_p - cin), (0, cout_p - cout)))
    return m.astype(jnp.bfloat16)


def _prep_3x3(w, cin_p, cout_p):
    cout, cin = w.shape[0], w.shape[1]
    t = jnp.transpose(w, (2, 3, 1, 0)).reshape(9, cin, cout)   # tap index = dy*3+dx
    t = jnp.pad(t, ((0, 0), (0, cin_p - cin), (0, cout_p - cout)))
    return t.astype(jnp.bfloat16)


# ---------------------------------------------------------------------------
# Parameter init (deterministic, synthetic — mirrors module __init__ shapes)
# ---------------------------------------------------------------------------
def init_bottleneck_params(key, in_planes, planes, stride):
    cexp = EXPANSION * planes
    keys = jax.random.split(key, 4)

    def conv_w(k, cout, cin, kh, kw):
        fan_in = cin * kh * kw
        return jax.random.normal(k, (cout, cin, kh, kw), jnp.float32) * (2.0 / fan_in) ** 0.5

    params = {
        "w1": conv_w(keys[0], planes, in_planes, 1, 1),
        "w2": conv_w(keys[1], planes, planes, 3, 3),
        "w3": conv_w(keys[2], cexp, planes, 1, 1),
        "g1": jnp.ones((planes,), jnp.float32), "b1": jnp.zeros((planes,), jnp.float32),
        "g2": jnp.ones((planes,), jnp.float32), "b2": jnp.zeros((planes,), jnp.float32),
        "g3": jnp.ones((cexp,), jnp.float32), "b3": jnp.zeros((cexp,), jnp.float32),
    }
    if stride != 1 or in_planes != cexp:
        params["ws"] = conv_w(keys[3], cexp, in_planes, 1, 1)
        params["gs"] = jnp.ones((cexp,), jnp.float32)
        params["bs"] = jnp.zeros((cexp,), jnp.float32)
    return params


# ---------------------------------------------------------------------------
# Bottleneck forward (NCHW in / NCHW out, matching the PyTorch module)
# ---------------------------------------------------------------------------
def bottleneck_forward(x_nchw, params, stride):
    x = jnp.transpose(x_nchw, (0, 2, 3, 1)).astype(jnp.float32)   # NCHW -> NHWC
    n, h, w, cin = x.shape
    planes = params["w1"].shape[0]
    cexp = params["w3"].shape[0]
    cin_p = _round_up(cin, LANE)
    cm_p = _round_up(planes, LANE)
    ce_p = _round_up(cexp, LANE)

    xp = jnp.pad(x, ((0, 0), (0, 0), (0, 0), (0, cin_p - cin)))   # lane-dense channels
    m1 = n * h * w
    x2d = xp.reshape(m1, cin_p)
    tm1 = _pick_tm(m1)

    # ---- conv1 (1x1) + bn1 + relu ------------------------------------------
    y1, st1 = _matmul_stats(x2d.astype(jnp.bfloat16),
                            _prep_1x1(params["w1"], cin_p, cm_p),
                            tm=tm1, out_dtype=jnp.bfloat16)
    sc1, bi1 = _fold_bn(st1, m1, params["g1"], params["b1"], cm_p)
    # kept as a separate pass: the 3x3 conv's spatial zero-padding must stay
    # zero *after* BN+ReLU, so normalization cannot be fused past the repack.
    a1 = _normalize(y1, sc1, bi1, m_true=m1, relu=True,
                    out_dtype=jnp.bfloat16, tm=tm1)
    a1 = a1.reshape(n, h, w, cm_p)

    # ---- conv2 (3x3, stride, pad=1): raw bf16 output + stats ----------------
    slabs, ho, wo = _conv2_slabs(a1, stride)
    y2, st2 = _conv3x3_stats(slabs, _prep_3x3(params["w2"], cm_p, cm_p),
                             stride=stride, ho=ho, wo=wo)
    m2 = n * ho * wo
    tm2 = _pick_tm(m2)
    sc2, bi2 = _fold_bn(st2, m2, params["g2"], params["b2"], cm_p)

    # ---- conv3 (1x1) with bn2+relu fused on its input, + bn3 stats ----------
    y2p = _pad_rows(y2.reshape(m2, cm_p), tm2)
    y3, st3 = _matmul_norm_stats(y2p, sc2, bi2,
                                 _prep_1x1(params["w3"], cm_p, ce_p),
                                 tm=tm2, m_true=m2, out_dtype=jnp.float32)
    sc3, bi3 = _fold_bn(st3, m2, params["g3"], params["b3"], ce_p)

    # ---- shortcut branch -----------------------------------------------------
    if "ws" in params:
        # TODO(synk): fold the spatial subsampling into the kernel's BlockSpec
        # instead of slicing in XLA (minor data-movement saving).
        xs = xp[:, ::stride, ::stride, :][:, :ho, :wo, :].reshape(m2, cin_p)
        ys, sts = _matmul_stats(xs.astype(jnp.bfloat16),
                                _prep_1x1(params["ws"], cin_p, ce_p), tm=tm2)
        scs, bis = _fold_bn(sts, m2, params["gs"], params["bs"], ce_p)
        resid = ys
    else:
        # identity shortcut: stride == 1 and cin == cexp  (so cin_p == ce_p)
        resid = _pad_rows(x2d, tm2)
        scs = jnp.ones((1, ce_p), jnp.float32)
        bis = jnp.zeros((1, ce_p), jnp.float32)

    # ---- bn3 + shortcut-BN + residual add + relu, all in one tiled kernel ---
    out = _normalize(y3, sc3, bi3, m_true=m2, relu=True, out_dtype=jnp.float32,
                     residual=resid, rscale=scs, rbias=bis, tm=tm2)

    out = out.reshape(n, ho, wo, ce_p)[..., :cexp]
    # TODO(synk): fold the final NHWC->NCHW transpose into the last kernel's
    # out_spec instead of leaving it to XLA.
    return jnp.transpose(out, (0, 3, 1, 2))


if __name__ == "__main__":
    key = jax.random.PRNGKey(0)
    k_x, k_p = jax.random.split(key)

    batch, in_planes, planes, spatial, stride = 2, 4, 4, 16, 2
    x = jax.random.normal(k_x, (batch, in_planes, spatial, spatial), jnp.float32)
    params = init_bottleneck_params(k_p, in_planes, planes, stride)

    fwd = jax.jit(functools.partial(bottleneck_forward, stride=stride))
    out = fwd(x, params)
    jax.block_until_ready(out)

    expected = (batch, EXPANSION * planes, spatial // stride, spatial // stride)
    assert out.shape == expected, (out.shape, expected)
    assert bool(jnp.all(jnp.isfinite(out)))
    print("KERNEL_OK")
</pallas_src>

<mosaic_0001>
module attributes {stable_mosaic.version = 11 : i64} {
  func.func @_mm_stats_kernel(%arg0: i32, %arg1: memref<512x128xbf16, #tpu.memory_space<vmem>>, %arg2: memref<128x128xbf16, #tpu.memory_space<vmem>>, %arg3: memref<512x128xbf16, #tpu.memory_space<vmem>>, %arg4: memref<1x2x128xf32, #tpu.memory_space<vmem>>) attributes {dimension_semantics = [#tpu.dimension_semantics<parallel>], iteration_bounds = array<i64: 1>, scalar_prefetch = 0 : i64, scratch_operands = 0 : i64, tpu.core_type = #tpu.core_type<tc>, window_params = [{transform_indices = @transform_0, window_bounds = array<i64: 512, 128>}, {pipeline_mode = #tpu.pipeline_mode<synchronous>, transform_indices = @transform_1, window_bounds = array<i64: 128, 128>}, {transform_indices = @transform_2, window_bounds = array<i64: 512, 128>}, {transform_indices = @transform_3, window_bounds = array<i64: 1, 2, 128>}]} {
    %c0 = arith.constant 0 : index
    %c0_0 = arith.constant 0 : index
    %0 = vector.load %arg1[%c0, %c0_0] : memref<512x128xbf16, #tpu.memory_space<vmem>>, vector<512x128xbf16>
    %c0_1 = arith.constant 0 : index
    %c0_2 = arith.constant 0 : index
    %1 = vector.load %arg2[%c0_1, %c0_2] : memref<128x128xbf16, #tpu.memory_space<vmem>>, vector<128x128xbf16>
    %cst = arith.constant dense<0.000000e+00> : vector<512x128xf32>
    %2 = tpu.matmul %0, %1, %cst {dimension_numbers = #tpu.dot_dimension_numbers<[1], [0], [0], [1], [0, 0, 1, 1], [], []>} : vector<512x128xbf16>, vector<128x128xbf16>, vector<512x128xf32> -> vector<512x128xf32>
    %3 = arith.truncf %2 : vector<512x128xf32> to vector<512x128xbf16>
    %c0_3 = arith.constant 0 : index
    %c0_4 = arith.constant 0 : index
    %4 = vector.load %arg3[%c0_3, %c0_4] : memref<512x128xbf16, #tpu.memory_space<vmem>>, vector<512x128xbf16>
    tpu.vector_store %arg3[%c0_3, %c0_4], %3 {strides = array<i32>} : memref<512x128xbf16, #tpu.memory_space<vmem>>, vector<512x128xbf16>,
    %cst_5 = arith.constant dense<0.000000e+00> : vector<128xf32>
    %5 = vector.multi_reduction <add>, %2, %cst_5 [0] : vector<512x128xf32> to vector<128xf32>
    %6 = vector.shape_cast %5 : vector<128xf32> to vector<1x128xf32>
    %7 = arith.mulf %2, %2 : vector<512x128xf32>
    %cst_6 = arith.constant dense<0.000000e+00> : vector<128xf32>
    %8 = vector.multi_reduction <add>, %7, %cst_6 [0] : vector<512x128xf32> to vector<128xf32>
    %9 = vector.shape_cast %8 : vector<128xf32> to vector<1x128xf32>
    %10 = tpu.concatenate %6, %9 in 0 : vector<1x128xf32>, vector<1x128xf32> -> vector<2x128xf32>
    %c0_7 = arith.constant 0 : index
    %c0_8 = arith.constant 0 : index
    %c0_9 = arith.constant 0 : index
    %11 = vector.load %arg4[%c0_7, %c0_8, %c0_9] : memref<1x2x128xf32, #tpu.memory_space<vmem>>, vector<1x2x128xf32>
    %12 = vector.shape_cast %11 : vector<1x2x128xf32> to vector<2x128xf32>
    %13 = vector.shape_cast %10 : vector<2x128xf32> to vector<1x2x128xf32>
    tpu.vector_store %arg4[%c0_7, %c0_8, %c0_9], %13 {strides = array<i32>} : memref<1x2x128xf32, #tpu.memory_space<vmem>>, vector<1x2x128xf32>,
    return
  }
  func.func @transform_0(%arg0: i32) -> (i32, i32) {
    %c0_i32 = arith.constant 0 : i32
    %c0_i32_0 = arith.constant 0 : i32
    return %arg0, %c0_i32 : i32, i32
  }
  func.func @transform_1(%arg0: i32) -> (i32, i32) {
    %c0_i32 = arith.constant 0 : i32
    %c0_i32_0 = arith.constant 0 : i32
    %c0_i32_1 = arith.constant 0 : i32
    return %c0_i32, %c0_i32_0 : i32, i32
  }
  func.func @transform_2(%arg0: i32) -> (i32, i32) {
    %c0_i32 = arith.constant 0 : i32
    %c0_i32_0 = arith.constant 0 : i32
    return %arg0, %c0_i32 : i32, i32
  }
  func.func @transform_3(%arg0: i32) -> (i32, i32, i32) {
    %c0_i32 = arith.constant 0 : i32
    %c0_i32_0 = arith.constant 0 : i32
    %c0_i32_1 = arith.constant 0 : i32
    return %arg0, %c0_i32, %c0_i32_0 : i32, i32, i32
  }
}

module attributes {stable_mosaic.version = 11 : i64} {
  func.func @_norm_kernel(%arg0: i32, %arg1: memref<512x128xbf16, #tpu.memory_space<vmem>>, %arg2: memref<1x128xf32, #tpu.memory_space<vmem>>, %arg3: memref<1x128xf32, #tpu.memory_space<vmem>>, %arg4: memref<512x128xbf16, #tpu.memory_space<vmem>>) attributes {dimension_semantics = [#tpu.dimension_semantics<parallel>], iteration_bounds = array<i64: 1>, scalar_prefetch = 0 : i64, scratch_operands = 0 : i64, tpu.core_type = #tpu.core_type<tc>, window_params = [{transform_indices = @transform_0, window_bounds = array<i64: 512, 128>}, {pipeline_mode = #tpu.pipeline_mode<synchronous>, transform_indices = @transform_1, window_bounds = array<i64: 1, 128>}, {pipeline_mode = #tpu.pipeline_mode<synchronous>, transform_indices = @transform_2, window_bounds = array<i64: 1, 128>}, {transform_indices = @transform_3, window_bounds = array<i64: 512, 128>}]} {
    %c0 = arith.constant 0 : index
    %c0_0 = arith.constant 0 : index
    %0 = vector.load %arg1[%c0, %c0_0] : memref<512x128xbf16, #tpu.memory_space<vmem>>, vector<512x128xbf16>
    %1 = arith.extf %0 : vector<512x128xbf16> to vector<512x128xf32>
    %c0_1 = arith.constant 0 : index
    %c0_2 = arith.constant 0 : index
    %2 = vector.load %arg2[%c0_1, %c0_2] : memref<1x128xf32, #tpu.memory_space<vmem>>, vector<1x128xf32>
    %3 = vector.broadcast %2 : vector<1x128xf32> to vector<512x128xf32>
    %4 = arith.mulf %1, %3 : vector<512x128xf32>
    %c0_3 = arith.constant 0 : index
    %c0_4 = arith.constant 0 : index
    %5 = vector.load %arg3[%c0_3, %c0_4] : memref<1x128xf32, #tpu.memory_space<vmem>>, vector<1x128xf32>
    %6 = vector.broadcast %5 : vector<1x128xf32> to vector<512x128xf32>
    %7 = arith.addf %4, %6 : vector<512x128xf32>
    %cst = arith.constant 0.000000e+00 : f32
    %8 = vector.broadcast %cst : f32 to vector<512x128xf32>
    %9 = arith.maximumf %7, %8 : vector<512x128xf32>
    %10 = arith.truncf %9 : vector<512x128xf32> to vector<512x128xbf16>
    %c0_5 = arith.constant 0 : index
    %c0_6 = arith.constant 0 : index
    %11 = vector.load %arg4[%c0_5, %c0_6] : memref<512x128xbf16, #tpu.memory_space<vmem>>, vector<512x128xbf16>
    tpu.vector_store %arg4[%c0_5, %c0_6], %10 {strides = array<i32>} : memref<512x128xbf16, #tpu.memory_space<vmem>>, vector<512x128xbf16>,
    return
  }
  func.func @transform_0(%arg0: i32) -> (i32, i32) {
    %c0_i32 = arith.constant 0 : i32
    %c0_i32_0 = arith.constant 0 : i32
    return %arg0, %c0_i32 : i32, i32
  }
  func.func @transform_1(%arg0: i32) -> (i32, i32) {
    %c0_i32 = arith.constant 0 : i32
    %c0_i32_0 = arith.constant 0 : i32
    %c0_i32_1 = arith.constant 0 : i32
    return %c0_i32, %c0_i32_0 : i32, i32
  }
  func.func @transform_2(%arg0: i32) -> (i32, i32) {
    %c0_i32 = arith.constant 0 : i32
    %c0_i32_0 = arith.constant 0 : i32
    %c0_i32_1 = arith.constant 0 : i32
    return %c0_i32, %c0_i32_0 : i32, i32
  }
  func.func @transform_3(%arg0: i32) -> (i32, i32) {
    %c0_i32 = arith.constant 0 : i32
    %c0_i32_0 = arith.constant 0 : i32
    return %arg0, %c0_i32 : i32, i32
  }
}

module attributes {stable_mosaic.version = 11 : i64} {
  func.func @_conv3x3_stats_kernel(%arg0: i32, %arg1: memref<1x6x72x128xbf16, #tpu.memory_space<vmem>>, %arg2: memref<9x128x128xbf16, #tpu.memory_space<vmem>>, %arg3: memref<1x64x128xbf16, #tpu.memory_space<vmem>>, %arg4: memref<1x2x128xf32, #tpu.memory_space<vmem>>) attributes {dimension_semantics = [#tpu.dimension_semantics<parallel>], iteration_bounds = array<i64: 2>, scalar_prefetch = 0 : i64, scratch_operands = 0 : i64, tpu.core_type = #tpu.core_type<tc>, window_params = [{transform_indices = @transform_0, window_bounds = array<i64: 1, 6, 72, 128>}, {pipeline_mode = #tpu.pipeline_mode<synchronous>, transform_indices = @transform_1, window_bounds = array<i64: 9, 128, 128>}, {transform_indices = @transform_2, window_bounds = array<i64: 1, 64, 128>}, {transform_indices = @transform_3, window_bounds = array<i64: 1, 2, 128>}]} {
    %c0 = arith.constant 0 : index
    %c0_0 = arith.constant 0 : index
    %c0_1 = arith.constant 0 : index
    %c0_2 = arith.constant 0 : index
    %0 = vector.load %arg1[%c0, %c0_0, %c0_1, %c0_2] : memref<1x6x72x128xbf16, #tpu.memory_space<vmem>>, vector<1x1x64x128xbf16>
    %1 = vector.shape_cast %0 : vector<1x1x64x128xbf16> to vector<64x128xbf16>
    %c0_3 = arith.constant 0 : index
    %c0_4 = arith.constant 0 : index
    %c0_5 = arith.constant 0 : index
    %2 = vector.load %arg2[%c0_3, %c0_4, %c0_5] : memref<9x128x128xbf16, #tpu.memory_space<vmem>>, vector<1x128x128xbf16>
    %3 = vector.shape_cast %2 : vector<1x128x128xbf16> to vector<128x128xbf16>
    %cst = arith.constant dense<0.000000e+00> : vector<64x128xf32>
    %4 = tpu.matmul %1, %3, %cst {dimension_numbers = #tpu.dot_dimension_numbers<[1], [0], [0], [1], [0, 0, 1, 1], [], []>} : vector<64x128xbf16>, vector<128x128xbf16>, vector<64x128xf32> -> vector<64x128xf32>
    %c0_6 = arith.constant 0 : index
    %c2 = arith.constant 2 : index
    %c0_7 = arith.constant 0 : index
    %c0_8 = arith.constant 0 : index
    %5 = vector.load %arg1[%c0_6, %c2, %c0_7, %c0_8] : memref<1x6x72x128xbf16, #tpu.memory_space<vmem>>, vector<1x1x64x128xbf16>
    %6 = vector.shape_cast %5 : vector<1x1x64x128xbf16> to vector<64x128xbf16>
    %c1 = arith.constant 1 : index
    %c0_9 = arith.constant 0 : index
    %c0_10 = arith.constant 0 : index
    %7 = vector.load %arg2[%c1, %c0_9, %c0_10] : memref<9x128x128xbf16, #tpu.memory_space<vmem>>, vector<1x128x128xbf16>
    %8 = vector.shape_cast %7 : vector<1x128x128xbf16> to vector<128x128xbf16>
    %cst_11 = arith.constant dense<0.000000e+00> : vector<64x128xf32>
    %9 = tpu.matmul %6, %8, %cst_11 {dimension_numbers = #tpu.dot_dimension_numbers<[1], [0], [0], [1], [0, 0, 1, 1], [], []>} : vector<64x128xbf16>, vector<128x128xbf16>, vector<64x128xf32> -> vector<64x128xf32>
    %10 = arith.addf %4, %9 : vector<64x128xf32>
    %c0_12 = arith.constant 0 : index
    %c4 = arith.constant 4 : index
    %c0_13 = arith.constant 0 : index
    %c0_14 = arith.constant 0 : index
    %11 = vector.load %arg1[%c0_12, %c4, %c0_13, %c0_14] : memref<1x6x72x128xbf16, #tpu.memory_space<vmem>>, vector<1x1x64x128xbf16>
    %12 = vector.shape_cast %11 : vector<1x1x64x128xbf16> to vector<64x128xbf16>
    %c2_15 = arith.constant 2 : index
    %c0_16 = arith.constant 0 : index
    %c0_17 = arith.constant 0 : index
    %13 = vector.load %arg2[%c2_15, %c0_16, %c0_17] : memref<9x128x128xbf16, #tpu.memory_space<vmem>>, vector<1x128x128xbf16>
    %14 = vector.shape_cast %13 : vector<1x128x128xbf16> to vector<128x128xbf16>
    %cst_18 = arith.constant dense<0.000000e+00> : vector<64x128xf32>
    %15 = tpu.matmul %12, %14, %cst_18 {dimension_numbers = #tpu.dot_dimension_numbers<[1], [0], [0], [1], [0, 0, 1, 1], [], []>} : vector<64x128xbf16>, vector<128x128xbf16>, vector<64x128xf32> -> vector<64x128xf32>
    %16 = arith.addf %10, %15 : vector<64x128xf32>
    %c0_19 = arith.constant 0 : index
    %c1_20 = arith.constant 1 : index
    %c0_21 = arith.constant 0 : index
    %c0_22 = arith.constant 0 : index
    %17 = vector.load %arg1[%c0_19, %c1_20, %c0_21, %c0_22] : memref<1x6x72x128xbf16, #tpu.memory_space<vmem>>, vector<1x1x64x128xbf16>
    %18 = vector.shape_cast %17 : vector<1x1x64x128xbf16> to vector<64x128xbf16>
    %c3 = arith.constant 3 : index
    %c0_23 = arith.constant 0 : index
    %c0_24 = arith.constant 0 : index
    %19 = vector.load %arg2[%c3, %c0_23, %c0_24] : memref<9x128x128xbf16, #tpu.memory_space<vmem>>, vector<1x128x128xbf16>
    %20 = vector.shape_cast %19 : vector<1x128x128xbf16> to vector<128x128xbf16>
    %cst_25 = arith.constant dense<0.000000e+00> : vector<64x128xf32>
    %21 = tpu.matmul %18, %20, %cst_25 {dimension_numbers = #tpu.dot_dimension_numbers<[1], [0], [0], [1], [0, 0, 1, 1], [], []>} : vector<64x128xbf16>, vector<128x128xbf16>, vector<64x128xf32> -> vector<64x128xf32>
    %22 = arith.addf %16, %21 : vector<64x128xf32>
    %c0_26 = arith.constant 0 : index
    %c3_27 = arith.constant 3 : index
    %c0_28 = arith.constant 0 : index
    %c0_29 = arith.constant 0 : index
    %23 = vector.load %arg1[%c0_26, %c3_27, %c0_28, %c0_29] : memref<1x6x72x128xbf16, #tpu.memory_space<vmem>>, vector<1x1x64x128xbf16>
    %24 = vector.shape_cast %23 : vector<1x1x64x128xbf16> to vector<64x128xbf16>
    %c4_30 = arith.constant 4 : index
    %c0_31 = arith.constant 0 : index
    %c0_32 = arith.constant 0 : index
    %25 = vector.load %arg2[%c4_30, %c0_31, %c0_32] : memref<9x128x128xbf16, #tpu.memory_space<vmem>>, vector<1x128x128xbf16>
    %26 = vector.shape_cast %25 : vector<1x128x128xbf16> to vector<128x128xbf16>
    %cst_33 = arith.constant dense<0.000000e+00> : vector<64x128xf32>
    %27 = tpu.matmul %24, %26, %cst_33 {dimension_numbers = #tpu.dot_dimension_numbers<[1], [0], [0], [1], [0, 0, 1, 1], [], []>} : vector<64x128xbf16>, vector<128x128xbf16>, vector<64x128xf32> -> vector<64x128xf32>
    %28 = arith.addf %22, %27 : vector<64x128xf32>
    %c0_34 = arith.constant 0 : index
    %c5 = arith.constant 5 : index
    %c0_35 = arith.constant 0 : index
    %c0_36 = arith.constant 0 : index
    %29 = vector.load %arg1[%c0_34, %c5, %c0_35, %c0_36] : memref<1x6x72x128xbf16, #tpu.memory_space<vmem>>, vector<1x1x64x128xbf16>
    %30 = vector.shape_cast %29 : vector<1x1x64x128xbf16> to vector<64x128xbf16>
    %c5_37 = arith.constant 5 : index
    %c0_38 = arith.constant 0 : index
    %c0_39 = arith.constant 0 : index
    %31 = vector.load %arg2[%c5_37, %c0_38, %c0_39] : memref<9x128x128xbf16, #tpu.memory_space<vmem>>, vector<1x128x128xbf16>
    %32 = vector.shape_cast %31 : vector<1x128x128xbf16> to vector<128x128xbf16>
    %cst_40 = arith.constant dense<0.000000e+00> : vector<64x128xf32>
    %33 = tpu.matmul %30, %32, %cst_40 {dimension_numbers = #tpu.dot_dimension_numbers<[1], [0], [0], [1], [0, 0, 1, 1], [], []>} : vector<64x128xbf16>, vector<128x128xbf16>, vector<64x128xf32> -> vector<64x128xf32>
    %34 = arith.addf %28, %33 : vector<64x128xf32>
    %c0_41 = arith.constant 0 : index
    %c0_42 = arith.constant 0 : index
    %c8 = arith.constant 8 : index
    %c0_43 = arith.constant 0 : index
    %35 = vector.load %arg1[%c0_41, %c0_42, %c8, %c0_43] : memref<1x6x72x128xbf16, #tpu.memory_space<vmem>>, vector<1x1x64x128xbf16>
    %36 = vector.shape_cast %35 : vector<1x1x64x128xbf16> to vector<64x128xbf16>
    %c6 = arith.constant 6 : index
    %c0_44 = arith.constant 0 : index
    %c0_45 = arith.constant 0 : index
    %37 = vector.load %arg2[%c6, %c0_44, %c0_45] : memref<9x128x128xbf16, #tpu.memory_space<vmem>>, vector<1x128x128xbf16>
    %38 = vector.shape_cast %37 : vector<1x128x128xbf16> to vector<128x128xbf16>
    %cst_46 = arith.constant dense<0.000000e+00> : vector<64x128xf32>
    %39 = tpu.matmul %36, %38, %cst_46 {dimension_numbers = #tpu.dot_dimension_numbers<[1], [0], [0], [1], [0, 0, 1, 1], [], []>} : vector<64x128xbf16>, vector<128x128xbf16>, vector<64x128xf32> -> vector<64x128xf32>
    %40 = arith.addf %34, %39 : vector<64x128xf32>
    %c0_47 = arith.constant 0 : index
    %c2_48 = arith.constant 2 : index
    %c8_49 = arith.constant 8 : index
    %c0_50 = arith.constant 0 : index
    %41 = vector.load %arg1[%c0_47, %c2_48, %c8_49, %c0_50] : memref<1x6x72x128xbf16, #tpu.memory_space<vmem>>, vector<1x1x64x128xbf16>
    %42 = vector.shape_cast %41 : vector<1x1x64x128xbf16> to vector<64x128xbf16>
    %c7 = arith.constant 7 : index
    %c0_51 = arith.constant 0 : index
    %c0_52 = arith.constant 0 : index
    %43 = vector.load %arg2[%c7, %c0_51, %c0_52] : memref<9x128x128xbf16, #tpu.memory_space<vmem>>, vector<1x128x128xbf16>
    %44 = vector.shape_cast %43 : vector<1x128x128xbf16> to vector<128x128xbf16>
    %cst_53 = arith.constant dense<0.000000e+00> : vector<64x128xf32>
    %45 = tpu.matmul %42, %44, %cst_53 {dimension_numbers = #tpu.dot_dimension_numbers<[1], [0], [0], [1], [0, 0, 1, 1], [], []>} : vector<64x128xbf16>, vector<128x128xbf16>, vector<64x128xf32> -> vector<64x128xf32>
    %46 = arith.addf %40, %45 : vector<64x128xf32>
    %c0_54 = arith.constant 0 : index
    %c4_55 = arith.constant 4 : index
    %c8_56 = arith.constant 8 : index
    %c0_57 = arith.constant 0 : index
    %47 = vector.load %arg1[%c0_54, %c4_55, %c8_56, %c0_57] : memref<1x6x72x128xbf16, #tpu.memory_space<vmem>>, vector<1x1x64x128xbf16>
    %48 = vector.shape_cast %47 : vector<1x1x64x128xbf16> to vector<64x128xbf16>
    %c8_58 = arith.constant 8 : index
    %c0_59 = arith.constant 0 : index
    %c0_60 = arith.constant 0 : index
    %49 = vector.load %arg2[%c8_58, %c0_59, %c0_60] : memref<9x128x128xbf16, #tpu.memory_space<vmem>>, vector<1x128x128xbf16>
    %50 = vector.shape_cast %49 : vector<1x128x128xbf16> to vector<128x128xbf16>
    %cst_61 = arith.constant dense<0.000000e+00> : vector<64x128xf32>
    %51 = tpu.matmul %48, %50, %cst_61 {dimension_numbers = #tpu.dot_dimension_numbers<[1], [0], [0], [1], [0, 0, 1, 1], [], []>} : vector<64x128xbf16>, vector<128x128xbf16>, vector<64x128xf32> -> vector<64x128xf32>
    %52 = arith.addf %46, %51 : vector<64x128xf32>
    %53 = arith.truncf %52 : vector<64x128xf32> to vector<64x128xbf16>
    %c0_62 = arith.constant 0 : index
    %c0_63 = arith.constant 0 : index
    %c0_64 = arith.constant 0 : index
    %54 = vector.load %arg3[%c0_62, %c0_63, %c0_64] : memref<1x64x128xbf16, #tpu.memory_space<vmem>>, vector<1x64x128xbf16>
    %55 = vector.shape_cast %54 : vector<1x64x128xbf16> to vector<64x128xbf16>
    %56 = vector.shape_cast %53 : vector<64x128xbf16> to vector<1x64x128xbf16>
    tpu.vector_store %arg3[%c0_62, %c0_63, %c0_64], %56 {strides = array<i32>} : memref<1x64x128xbf16, #tpu.memory_space<vmem>>, vector<1x64x128xbf16>,
    %cst_65 = arith.constant dense<0.000000e+00> : vector<128xf32>
    %57 = vector.multi_reduction <add>, %52, %cst_65 [0] : vector<64x128xf32> to vector<128xf32>
    %58 = vector.shape_cast %57 : vector<128xf32> to vector<1x128xf32>
    %59 = arith.mulf %52, %52 : vector<64x128xf32>
    %cst_66 = arith.constant dense<0.000000e+00> : vector<128xf32>
    %60 = vector.multi_reduction <add>, %59, %cst_66 [0] : vector<64x128xf32> to vector<128xf32>
    %61 = vector.shape_cast %60 : vector<128xf32> to vector<1x128xf32>
    %62 = tpu.concatenate %58, %61 in 0 : vector<1x128xf32>, vector<1x128xf32> -> vector<2x128xf32>
    %c0_67 = arith.constant 0 : index
    %c0_68 = arith.constant 0 : index
    %c0_69 = arith.constant 0 : index
    %63 = vector.load %arg4[%c0_67, %c0_68, %c0_69] : memref<1x2x128xf32, #tpu.memory_space<vmem>>, vector<1x2x128xf32>
    %64 = vector.shape_cast %63 : vector<1x2x128xf32> to vector<2x128xf32>
    %65 = vector.shape_cast %62 : vector<2x128xf32> to vector<1x2x128xf32>
    tpu.vector_store %arg4[%c0_67, %c0_68, %c0_69], %65 {strides = array<i32>} : memref<1x2x128xf32, #tpu.memory_space<vmem>>, vector<1x2x128xf32>,
    return
  }
  func.func @transform_0(%arg0: i32) -> (i32, i32, i32, i32) {
    %c0_i32 = arith.constant 0 : i32
    %c0_i32_0 = arith.constant 0 : i32
    %c0_i32_1 = arith.constant 0 : i32
    %c0_i32_2 = arith.constant 0 : i32
    return %arg0, %c0_i32, %c0_i32_0, %c0_i32_1 : i32, i32, i32, i32
  }
  func.func @transform_1(%arg0: i32) -> (i32, i32, i32) {
    %c0_i32 = arith.constant 0 : i32
    %c0_i32_0 = arith.constant 0 : i32
    %c0_i32_1 = arith.constant 0 : i32
    %c0_i32_2 = arith.constant 0 : i32
    return %c0_i32, %c0_i32_0, %c0_i32_1 : i32, i32, i32
  }
  func.func @transform_2(%arg0: i32) -> (i32, i32, i32) {
    %c0_i32 = arith.constant 0 : i32
    %c0_i32_0 = arith.constant 0 : i32
    %c0_i32_1 = arith.constant 0 : i32
    return %arg0, %c0_i32, %c0_i32_0 : i32, i32, i32
  }
  func.func @transform_3(%arg0: i32) -> (i32, i32, i32) {
    %c0_i32 = arith.constant 0 : i32
    %c0_i32_0 = arith.constant 0 : i32
    %c0_i32_1 = arith.constant 0 : i32
    return %arg0, %c0_i32, %c0_i32_0 : i32, i32, i32
  }
}

module attributes {stable_mosaic.version = 11 : i64} {
  func.func @_mm_norm_stats_kernel(%arg0: i32, %arg1: memref<128x128xbf16, #tpu.memory_space<vmem>>, %arg2: memref<1x128xf32, #tpu.memory_space<vmem>>, %arg3: memref<1x128xf32, #tpu.memory_space<vmem>>, %arg4: memref<128x128xbf16, #tpu.memory_space<vmem>>, %arg5: memref<128x128xf32, #tpu.memory_space<vmem>>, %arg6: memref<1x2x128xf32, #tpu.memory_space<vmem>>) attributes {dimension_semantics = [#tpu.dimension_semantics<parallel>], iteration_bounds = array<i64: 1>, scalar_prefetch = 0 : i64, scratch_operands = 0 : i64, tpu.core_type = #tpu.core_type<tc>, window_params = [{transform_indices = @transform_0, window_bounds = array<i64: 128, 128>}, {pipeline_mode = #tpu.pipeline_mode<synchronous>, transform_indices = @transform_1, window_bounds = array<i64: 1, 128>}, {pipeline_mode = #tpu.pipeline_mode<synchronous>, transform_indices = @transform_2, window_bounds = array<i64: 1, 128>}, {pipeline_mode = #tpu.pipeline_mode<synchronous>, transform_indices = @transform_3, window_bounds = array<i64: 128, 128>}, {transform_indices = @transform_4, window_bounds = array<i64: 128, 128>}, {transform_indices = @transform_5, window_bounds = array<i64: 1, 2, 128>}]} {
    %c0 = arith.constant 0 : index
    %c0_0 = arith.constant 0 : index
    %0 = vector.load %arg1[%c0, %c0_0] : memref<128x128xbf16, #tpu.memory_space<vmem>>, vector<128x128xbf16>
    %1 = arith.extf %0 : vector<128x128xbf16> to vector<128x128xf32>
    %c0_1 = arith.constant 0 : index
    %c0_2 = arith.constant 0 : index
    %2 = vector.load %arg2[%c0_1, %c0_2] : memref<1x128xf32, #tpu.memory_space<vmem>>, vector<1x128xf32>
    %3 = vector.broadcast %2 : vector<1x128xf32> to vector<128x128xf32>
    %4 = arith.mulf %1, %3 : vector<128x128xf32>
    %c0_3 = arith.constant 0 : index
    %c0_4 = arith.constant 0 : index
    %5 = vector.load %arg3[%c0_3, %c0_4] : memref<1x128xf32, #tpu.memory_space<vmem>>, vector<1x128xf32>
    %6 = vector.broadcast %5 : vector<1x128xf32> to vector<128x128xf32>
    %7 = arith.addf %4, %6 : vector<128x128xf32>
    %cst = arith.constant 0.000000e+00 : f32
    %8 = vector.broadcast %cst : f32 to vector<128x128xf32>
    %9 = arith.maximumf %7, %8 : vector<128x128xf32>
    %10 = arith.truncf %9 : vector<128x128xf32> to vector<128x128xbf16>
    %c0_5 = arith.constant 0 : index
    %c0_6 = arith.constant 0 : index
    %11 = vector.load %arg4[%c0_5, %c0_6] : memref<128x128xbf16, #tpu.memory_space<vmem>>, vector<128x128xbf16>
    %cst_7 = arith.constant dense<0.000000e+00> : vector<128x128xf32>
    %12 = tpu.matmul %10, %11, %cst_7 {dimension_numbers = #tpu.dot_dimension_numbers<[1], [0], [0], [1], [0, 0, 1, 1], [], []>} : vector<128x128xbf16>, vector<128x128xbf16>, vector<128x128xf32> -> vector<128x128xf32>
    %c0_8 = arith.constant 0 : index
    %c0_9 = arith.constant 0 : index
    %13 = vector.load %arg5[%c0_8, %c0_9] : memref<128x128xf32, #tpu.memory_space<vmem>>, vector<128x128xf32>
    tpu.vector_store %arg5[%c0_8, %c0_9], %12 {strides = array<i32>} : memref<128x128xf32, #tpu.memory_space<vmem>>, vector<128x128xf32>,
    %cst_10 = arith.constant dense<0.000000e+00> : vector<128xf32>
    %14 = vector.multi_reduction <add>, %12, %cst_10 [0] : vector<128x128xf32> to vector<128xf32>
    %15 = vector.shape_cast %14 : vector<128xf32> to vector<1x128xf32>
    %16 = arith.mulf %12, %12 : vector<128x128xf32>
    %cst_11 = arith.constant dense<0.000000e+00> : vector<128xf32>
    %17 = vector.multi_reduction <add>, %16, %cst_11 [0] : vector<128x128xf32> to vector<128xf32>
    %18 = vector.shape_cast %17 : vector<128xf32> to vector<1x128xf32>
    %19 = tpu.concatenate %15, %18 in 0 : vector<1x128xf32>, vector<1x128xf32> -> vector<2x128xf32>
    %c0_12 = arith.constant 0 : index
    %c0_13 = arith.constant 0 : index
    %c0_14 = arith.constant 0 : index
    %20 = vector.load %arg6[%c0_12, %c0_13, %c0_14] : memref<1x2x128xf32, #tpu.memory_space<vmem>>, vector<1x2x128xf32>
    %21 = vector.shape_cast %20 : vector<1x2x128xf32> to vector<2x128xf32>
    %22 = vector.shape_cast %19 : vector<2x128xf32> to vector<1x2x128xf32>
    tpu.vector_store %arg6[%c0_12, %c0_13, %c0_14], %22 {strides = array<i32>} : memref<1x2x128xf32, #tpu.memory_space<vmem>>, vector<1x2x128xf32>,
    return
  }
  func.func @transform_0(%arg0: i32) -> (i32, i32) {
    %c0_i32 = arith.constant 0 : i32
    %c0_i32_0 = arith.constant 0 : i32
    return %arg0, %c0_i32 : i32, i32
  }
  func.func @transform_1(%arg0: i32) -> (i32, i32) {
    %c0_i32 = arith.constant 0 : i32
    %c0_i32_0 = arith.constant 0 : i32
    %c0_i32_1 = arith.constant 0 : i32
    return %c0_i32, %c0_i32_0 : i32, i32
  }
  func.func @transform_2(%arg0: i32) -> (i32, i32) {
    %c0_i32 = arith.constant 0 : i32
    %c0_i32_0 = arith.constant 0 : i32
    %c0_i32_1 = arith.constant 0 : i32
    return %c0_i32, %c0_i32_0 : i32, i32
  }
  func.func @transform_3(%arg0: i32) -> (i32, i32) {
    %c0_i32 = arith.constant 0 : i32
    %c0_i32_0 = arith.constant 0 : i32
    %c0_i32_1 = arith.constant 0 : i32
    return %c0_i32, %c0_i32_0 : i32, i32
  }
  func.func @transform_4(%arg0: i32) -> (i32, i32) {
    %c0_i32 = arith.constant 0 : i32
    %c0_i32_0 = arith.constant 0 : i32
    return %arg0, %c0_i32 : i32, i32
  }
  func.func @transform_5(%arg0: i32) -> (i32, i32, i32) {
    %c0_i32 = arith.constant 0 : i32
    %c0_i32_0 = arith.constant 0 : i32
    %c0_i32_1 = arith.constant 0 : i32
    return %arg0, %c0_i32, %c0_i32_0 : i32, i32, i32
  }
}

module attributes {stable_mosaic.version = 11 : i64} {
  func.func @_mm_stats_kernel(%arg0: i32, %arg1: memref<128x128xbf16, #tpu.memory_space<vmem>>, %arg2: memref<128x128xbf16, #tpu.memory_space<vmem>>, %arg3: memref<128x128xf32, #tpu.memory_space<vmem>>, %arg4: memref<1x2x128xf32, #tpu.memory_space<vmem>>) attributes {dimension_semantics = [#tpu.dimension_semantics<parallel>], iteration_bounds = array<i64: 1>, scalar_prefetch = 0 : i64, scratch_operands = 0 : i64, tpu.core_type = #tpu.core_type<tc>, window_params = [{transform_indices = @transform_0, window_bounds = array<i64: 128, 128>}, {pipeline_mode = #tpu.pipeline_mode<synchronous>, transform_indices = @transform_1, window_bounds = array<i64: 128, 128>}, {transform_indices = @transform_2, window_bounds = array<i64: 128, 128>}, {transform_indices = @transform_3, window_bounds = array<i64: 1, 2, 128>}]} {
    %c0 = arith.constant 0 : index
    %c0_0 = arith.constant 0 : index
    %0 = vector.load %arg1[%c0, %c0_0] : memref<128x128xbf16, #tpu.memory_space<vmem>>, vector<128x128xbf16>
    %c0_1 = arith.constant 0 : index
    %c0_2 = arith.constant 0 : index
    %1 = vector.load %arg2[%c0_1, %c0_2] : memref<128x128xbf16, #tpu.memory_space<vmem>>, vector<128x128xbf16>
    %cst = arith.constant dense<0.000000e+00> : vector<128x128xf32>
    %2 = tpu.matmul %0, %1, %cst {dimension_numbers = #tpu.dot_dimension_numbers<[1], [0], [0], [1], [0, 0, 1, 1], [], []>} : vector<128x128xbf16>, vector<128x128xbf16>, vector<128x128xf32> -> vector<128x128xf32>
    %c0_3 = arith.constant 0 : index
    %c0_4 = arith.constant 0 : index
    %3 = vector.load %arg3[%c0_3, %c0_4] : memref<128x128xf32, #tpu.memory_space<vmem>>, vector<128x128xf32>
    tpu.vector_store %arg3[%c0_3, %c0_4], %2 {strides = array<i32>} : memref<128x128xf32, #tpu.memory_space<vmem>>, vector<128x128xf32>,
    %cst_5 = arith.constant dense<0.000000e+00> : vector<128xf32>
    %4 = vector.multi_reduction <add>, %2, %cst_5 [0] : vector<128x128xf32> to vector<128xf32>
    %5 = vector.shape_cast %4 : vector<128xf32> to vector<1x128xf32>
    %6 = arith.mulf %2, %2 : vector<128x128xf32>
    %cst_6 = arith.constant dense<0.000000e+00> : vector<128xf32>
    %7 = vector.multi_reduction <add>, %6, %cst_6 [0] : vector<128x128xf32> to vector<128xf32>
    %8 = vector.shape_cast %7 : vector<128xf32> to vector<1x128xf32>
    %9 = tpu.concatenate %5, %8 in 0 : vector<1x128xf32>, vector<1x128xf32> -> vector<2x128xf32>
    %c0_7 = arith.constant 0 : index
    %c0_8 = arith.constant 0 : index
    %c0_9 = arith.constant 0 : index
    %10 = vector.load %arg4[%c0_7, %c0_8, %c0_9] : memref<1x2x128xf32, #tpu.memory_space<vmem>>, vector<1x2x128xf32>
    %11 = vector.shape_cast %10 : vector<1x2x128xf32> to vector<2x128xf32>
    %12 = vector.shape_cast %9 : vector<2x128xf32> to vector<1x2x128xf32>
    tpu.vector_store %arg4[%c0_7, %c0_8, %c0_9], %12 {strides = array<i32>} : memref<1x2x128xf32, #tpu.memory_space<vmem>>, vector<1x2x128xf32>,
    return
  }
  func.func @transform_0(%arg0: i32) -> (i32, i32) {
    %c0_i32 = arith.constant 0 : i32
    %c0_i32_0 = arith.constant 0 : i32
    return %arg0, %c0_i32 : i32, i32
  }
  func.func @transform_1(%arg0: i32) -> (i32, i32) {
    %c0_i32 = arith.constant 0 : i32
    %c0_i32_0 = arith.constant 0 : i32
    %c0_i32_1 = arith.constant 0 : i32
    return %c0_i32, %c0_i32_0 : i32, i32
  }
  func.func @transform_2(%arg0: i32) -> (i32, i32) {
    %c0_i32 = arith.constant 0 : i32
    %c0_i32_0 = arith.constant 0 : i32
    return %arg0, %c0_i32 : i32, i32
  }
  func.func @transform_3(%arg0: i32) -> (i32, i32, i32) {
    %c0_i32 = arith.constant 0 : i32
    %c0_i32_0 = arith.constant 0 : i32
    %c0_i32_1 = arith.constant 0 : i32
    return %arg0, %c0_i32, %c0_i32_0 : i32, i32, i32
  }
}

module attributes {stable_mosaic.version = 11 : i64} {
  func.func @_norm_add_kernel(%arg0: i32, %arg1: memref<128x128xf32, #tpu.memory_space<vmem>>, %arg2: memref<1x128xf32, #tpu.memory_space<vmem>>, %arg3: memref<1x128xf32, #tpu.memory_space<vmem>>, %arg4: memref<128x128xf32, #tpu.memory_space<vmem>>, %arg5: memref<1x128xf32, #tpu.memory_space<vmem>>, %arg6: memref<1x128xf32, #tpu.memory_space<vmem>>, %arg7: memref<128x128xf32, #tpu.memory_space<vmem>>) attributes {dimension_semantics = [#tpu.dimension_semantics<parallel>], iteration_bounds = array<i64: 1>, scalar_prefetch = 0 : i64, scratch_operands = 0 : i64, tpu.core_type = #tpu.core_type<tc>, window_params = [{transform_indices = @transform_0, window_bounds = array<i64: 128, 128>}, {pipeline_mode = #tpu.pipeline_mode<synchronous>, transform_indices = @transform_1, window_bounds = array<i64: 1, 128>}, {pipeline_mode = #tpu.pipeline_mode<synchronous>, transform_indices = @transform_2, window_bounds = array<i64: 1, 128>}, {transform_indices = @transform_3, window_bounds = array<i64: 128, 128>}, {pipeline_mode = #tpu.pipeline_mode<synchronous>, transform_indices = @transform_4, window_bounds = array<i64: 1, 128>}, {pipeline_mode = #tpu.pipeline_mode<synchronous>, transform_indices = @transform_5, window_bounds = array<i64: 1, 128>}, {transform_indices = @transform_6, window_bounds = array<i64: 128, 128>}]} {
    %c0 = arith.constant 0 : index
    %c0_0 = arith.constant 0 : index
    %0 = vector.load %arg1[%c0, %c0_0] : memref<128x128xf32, #tpu.memory_space<vmem>>, vector<128x128xf32>
    %c0_1 = arith.constant 0 : index
    %c0_2 = arith.constant 0 : index
    %1 = vector.load %arg2[%c0_1, %c0_2] : memref<1x128xf32, #tpu.memory_space<vmem>>, vector<1x128xf32>
    %2 = vector.broadcast %1 : vector<1x128xf32> to vector<128x128xf32>
    %3 = arith.mulf %0, %2 : vector<128x128xf32>
    %c0_3 = arith.constant 0 : index
    %c0_4 = arith.constant 0 : index
    %4 = vector.load %arg3[%c0_3, %c0_4] : memref<1x128xf32, #tpu.memory_space<vmem>>, vector<1x128xf32>
    %5 = vector.broadcast %4 : vector<1x128xf32> to vector<128x128xf32>
    %6 = arith.addf %3, %5 : vector<128x128xf32>
    %c0_5 = arith.constant 0 : index
    %c0_6 = arith.constant 0 : index
    %7 = vector.load %arg4[%c0_5, %c0_6] : memref<128x128xf32, #tpu.memory_space<vmem>>, vector<128x128xf32>
    %c0_7 = arith.constant 0 : index
    %c0_8 = arith.constant 0 : index
    %8 = vector.load %arg5[%c0_7, %c0_8] : memref<1x128xf32, #tpu.memory_space<vmem>>, vector<1x128xf32>
    %9 = vector.broadcast %8 : vector<1x128xf32> to vector<128x128xf32>
    %10 = arith.mulf %7, %9 : vector<128x128xf32>
    %11 = arith.addf %6, %10 : vector<128x128xf32>
    %c0_9 = arith.constant 0 : index
    %c0_10 = arith.constant 0 : index
    %12 = vector.load %arg6[%c0_9, %c0_10] : memref<1x128xf32, #tpu.memory_space<vmem>>, vector<1x128xf32>
    %13 = vector.broadcast %12 : vector<1x128xf32> to vector<128x128xf32>
    %14 = arith.addf %11, %13 : vector<128x128xf32>
    %cst = arith.constant 0.000000e+00 : f32
    %15 = vector.broadcast %cst : f32 to vector<128x128xf32>
    %16 = arith.maximumf %14, %15 : vector<128x128xf32>
    %c0_11 = arith.constant 0 : index
    %c0_12 = arith.constant 0 : index
    %17 = vector.load %arg7[%c0_11, %c0_12] : memref<128x128xf32, #tpu.memory_space<vmem>>, vector<128x128xf32>
    tpu.vector_store %arg7[%c0_11, %c0_12], %16 {strides = array<i32>} : memref<128x128xf32, #tpu.memory_space<vmem>>, vector<128x128xf32>,
    return
  }
  func.func @transform_0(%arg0: i32) -> (i32, i32) {
    %c0_i32 = arith.constant 0 : i32
    %c0_i32_0 = arith.constant 0 : i32
    return %arg0, %c0_i32 : i32, i32
  }
  func.func @transform_1(%arg0: i32) -> (i32, i32) {
    %c0_i32 = arith.constant 0 : i32
    %c0_i32_0 = arith.constant 0 : i32
    %c0_i32_1 = arith.constant 0 : i32
    return %c0_i32, %c0_i32_0 : i32, i32
  }
  func.func @transform_2(%arg0: i32) -> (i32, i32) {
    %c0_i32 = arith.constant 0 : i32
    %c0_i32_0 = arith.constant 0 : i32
    %c0_i32_1 = arith.constant 0 : i32
    return %c0_i32, %c0_i32_0 : i32, i32
  }
  func.func @transform_3(%arg0: i32) -> (i32, i32) {
    %c0_i32 = arith.constant 0 : i32
    %c0_i32_0 = arith.constant 0 : i32
    return %arg0, %c0_i32 : i32, i32
  }
  func.func @transform_4(%arg0: i32) -> (i32, i32) {
    %c0_i32 = arith.constant 0 : i32
    %c0_i32_0 = arith.constant 0 : i32
    %c0_i32_1 = arith.constant 0 : i32
    return %c0_i32, %c0_i32_0 : i32, i32
  }
  func.func @transform_5(%arg0: i32) -> (i32, i32) {
    %c0_i32 = arith.constant 0 : i32
    %c0_i32_0 = arith.constant 0 : i32
    %c0_i32_1 = arith.constant 0 : i32
    return %c0_i32, %c0_i32_0 : i32, i32
  }
  func.func @transform_6(%arg0: i32) -> (i32, i32) {
    %c0_i32 = arith.constant 0 : i32
    %c0_i32_0 = arith.constant 0 : i32
    return %arg0, %c0_i32 : i32, i32
  }
}

</mosaic_0001>

<llo_original>
// kernel: bottleneck_forward.7
$region0: #{bottleneck_forward.7}
  #allocation0 [shape = 'u32[]', space=smem, size = 0x4, offset = 0x4, fixed_abs, tag = 'smem constant byte address 0x4 - core index']
  #allocation1 [shape = 'u32[72,128]{1,0:T(1,128)}', space=vmem, size = 0x9000, scoped, tag = 'internal scratch']
  %s0 = inlined_call_operand.vmem [shape: bf16[512,128], index: 0, kind: input, shape index: {}]
  %s1 = inlined_call_operand.vmem [shape: f32[1,128], index: 1, kind: input, shape index: {}]
  %s2 = inlined_call_operand.vmem [shape: f32[1,128], index: 2, kind: input, shape index: {}]
  %s3 = inlined_call_operand.vmem [shape: bf16[512,128], index: 3, kind: output, shape index: {}]
  %s4 = sld [smem:[#allocation0]]
  $region22: #{bottleneck_forward.7} parent=0
    _
  %s6 = ssub.s32 1, %s4
  %s7 = scalar_select 0, %s6, %s4
  // Predicated region
  $region2: #{bottleneck_forward.7} parent=0 // pred_check
    _
  $region3: #{bottleneck_forward.7} parent=0 // pred_check_branch
    %9 = sbr.rel (0) target = $region5
  $region4: #{bottleneck_forward.7} parent=0 // pred_region
    _
  $region5: #{bottleneck_forward.7} parent=0 // pred_fallthru
    _
  // Predicated region
  $region6: #{bottleneck_forward.7} parent=0 // pred_check
    _
  $region7: #{bottleneck_forward.7} parent=0 // pred_check_branch
    %11 = sbr.rel (0) target = $region9
  $region8: #{bottleneck_forward.7} parent=0 // pred_region
    _
  $region9: #{bottleneck_forward.7} parent=0 // pred_fallthru
    _
  // Predicated region
  $region10: #{bottleneck_forward.7} parent=0 // pred_check
    _
  $region11: #{bottleneck_forward.7} parent=0 // pred_check_branch
    %13 = sbr.rel (0) target = $region13
  $region12: #{bottleneck_forward.7} parent=0 // pred_region
    _
  $region13: #{bottleneck_forward.7} parent=0 // pred_fallthru
    _
  %v14 = vld [vmem:[%s0] sm:$0xf]
  %v15 = vld [vmem:[%s0 + $0x4] sm:$0xf]
  %v16 = vld [vmem:[%s0 + $0x8] sm:$0xf]
  %v17 = vld [vmem:[%s0 + $0xc] sm:$0xf]
  %v18 = vld [vmem:[%s0 + $0x10] sm:$0xf]
  %v19 = vld [vmem:[%s0 + $0x14] sm:$0xf]
  %v20 = vld [vmem:[%s0 + $0x18] sm:$0xf]
  %v21 = vld [vmem:[%s0 + $0x1c] sm:$0xf]
  %v22 = vld [vmem:[%s0 + $0x20] sm:$0xf]
  %v23 = vld [vmem:[%s0 + $0x24] sm:$0xf]
  %v24 = vld [vmem:[%s0 + $0x28] sm:$0xf]
  %v25 = vld [vmem:[%s0 + $0x2c] sm:$0xf]
  %v26 = vld [vmem:[%s0 + $0x30] sm:$0xf]
  %v27 = vld [vmem:[%s0 + $0x34] sm:$0xf]
  %v28 = vld [vmem:[%s0 + $0x38] sm:$0xf]
  %v29 = vld [vmem:[%s0 + $0x3c] sm:$0xf]
  %v30 = vld [vmem:[%s0 + $0x40] sm:$0xf]
  %v31 = vld [vmem:[%s0 + $0x44] sm:$0xf]
  %v32 = vld [vmem:[%s0 + $0x48] sm:$0xf]
  %v33 = vld [vmem:[%s0 + $0x4c] sm:$0xf]
  %v34 = vld [vmem:[%s0 + $0x50] sm:$0xf]
  %v35 = vld [vmem:[%s0 + $0x54] sm:$0xf]
  %v36 = vld [vmem:[%s0 + $0x58] sm:$0xf]
  %v37 = vld [vmem:[%s0 + $0x5c] sm:$0xf]
  %v38 = vld [vmem:[%s0 + $0x60] sm:$0xf]
  %v39 = vld [vmem:[%s0 + $0x64] sm:$0xf]
  %v40 = vld [vmem:[%s0 + $0x68] sm:$0xf]
  %v41 = vld [vmem:[%s0 + $0x6c] sm:$0xf]
  %v42 = vld [vmem:[%s0 + $0x70] sm:$0xf]
  %v43 = vld [vmem:[%s0 + $0x74] sm:$0xf]
  %v44 = vld [vmem:[%s0 + $0x78] sm:$0xf]
  %v45 = vld [vmem:[%s0 + $0x7c] sm:$0xf]
  %v46 = vld [vmem:[%s0 + $0x80] sm:$0xf]
  %v47 = vld [vmem:[%s0 + $0x84] sm:$0xf]
  %v48 = vld [vmem:[%s0 + $0x88] sm:$0xf]
  %v49 = vld [vmem:[%s0 + $0x8c] sm:$0xf]
  %v50 = vld [vmem:[%s0 + $0x90] sm:$0xf]
  %v51 = vld [vmem:[%s0 + $0x94] sm:$0xf]
  %v52 = vld [vmem:[%s0 + $0x98] sm:$0xf]
  %v53 = vld [vmem:[%s0 + $0x9c] sm:$0xf]
  %v54 = vld [vmem:[%s0 + $0xa0] sm:$0xf]
  %v55 = vld [vmem:[%s0 + $0xa4] sm:$0xf]
  %v56 = vld [vmem:[%s0 + $0xa8] sm:$0xf]
  %v57 = vld [vmem:[%s0 + $0xac] sm:$0xf]
  %v58 = vld [vmem:[%s0 + $0xb0] sm:$0xf]
  %v59 = vld [vmem:[%s0 + $0xb4] sm:$0xf]
  %v60 = vld [vmem:[%s0 + $0xb8] sm:$0xf]
  %v61 = vld [vmem:[%s0 + $0xbc] sm:$0xf]
  %v62 = vld [vmem:[%s0 + $0xc0] sm:$0xf]
  %v63 = vld [vmem:[%s0 + $0xc4] sm:$0xf]
  %v64 = vld [vmem:[%s0 + $0xc8] sm:$0xf]
  %v65 = vld [vmem:[%s0 + $0xcc] sm:$0xf]
  %v66 = vld [vmem:[%s0 + $0xd0] sm:$0xf]
  %v67 = vld [vmem:[%s0 + $0xd4] sm:$0xf]
  %v68 = vld [vmem:[%s0 + $0xd8] sm:$0xf]
  %v69 = vld [vmem:[%s0 + $0xdc] sm:$0xf]
  %v70 = vld [vmem:[%s0 + $0xe0] sm:$0xf]
  %v71 = vld [vmem:[%s0 + $0xe4] sm:$0xf]
  %v72 = vld [vmem:[%s0 + $0xe8] sm:$0xf]
  %v73 = vld [vmem:[%s0 + $0xec] sm:$0xf]
  %v74 = vld [vmem:[%s0 + $0xf0] sm:$0xf]
  %v75 = vld [vmem:[%s0 + $0xf4] sm:$0xf]
  %v76 = vld [vmem:[%s0 + $0xf8] sm:$0xf]
  %v77 = vld [vmem:[%s0 + $0xfc] sm:$0xf]
  %v78 = vunpack.c.l.bf16 %v14
  %v79 = vunpack.c.l.bf16 %v15
  %v80 = vunpack.c.l.bf16 %v16
  %v81 = vunpack.c.l.bf16 %v17
  %v82 = vunpack.c.l.bf16 %v18
  %v83 = vunpack.c.l.bf16 %v19
  %v84 = vunpack.c.l.bf16 %v20
  %v85 = vunpack.c.l.bf16 %v21
  %v86 = vunpack.c.l.bf16 %v22
  %v87 = vunpack.c.l.bf16 %v23
  %v88 = vunpack.c.l.bf16 %v24
  %v89 = vunpack.c.l.bf16 %v25
  %v90 = vunpack.c.l.bf16 %v26
  %v91 = vunpack.c.l.bf16 %v27
  %v92 = vunpack.c.l.bf16 %v28
  %v93 = vunpack.c.l.bf16 %v29
  %v94 = vunpack.c.l.bf16 %v30
  %v95 = vunpack.c.l.bf16 %v31
  %v96 = vunpack.c.l.bf16 %v32
  %v97 = vunpack.c.l.bf16 %v33
  %v98 = vunpack.c.l.bf16 %v34
  %v99 = vunpack.c.l.bf16 %v35
  %v100 = vunpack.c.l.bf16 %v36
  %v101 = vunpack.c.l.bf16 %v37
  %v102 = vunpack.c.l.bf16 %v38
  %v103 = vunpack.c.l.bf16 %v39
  %v104 = vunpack.c.l.bf16 %v40
  %v105 = vunpack.c.l.bf16 %v41
  %v106 = vunpack.c.l.bf16 %v42
  %v107 = vunpack.c.l.bf16 %v43
  %v108 = vunpack.c.l.bf16 %v44
  %v109 = vunpack.c.l.bf16 %v45
  %v110 = vunpack.c.l.bf16 %v46
  %v111 = vunpack.c.l.bf16 %v47
  %v112 = vunpack.c.l.bf16 %v48
  %v113 = vunpack.c.l.bf16 %v49
  %v114 = vunpack.c.l.bf16 %v50
  %v115 = vunpack.c.l.bf16 %v51
  %v116 = vunpack.c.l.bf16 %v52
  %v117 = vunpack.c.l.bf16 %v53
  %v118 = vunpack.c.l.bf16 %v54
  %v119 = vunpack.c.l.bf16 %v55
  %v120 = vunpack.c.l.bf16 %v56
  %v121 = vunpack.c.l.bf16 %v57
  %v122 = vunpack.c.l.bf16 %v58
  %v123 = vunpack.c.l.bf16 %v59
  %v124 = vunpack.c.l.bf16 %v60
  %v125 = vunpack.c.l.bf16 %v61
  %v126 = vunpack.c.l.bf16 %v62
  %v127 = vunpack.c.l.bf16 %v63
  %v128 = vunpack.c.l.bf16 %v64
  %v129 = vunpack.c.l.bf16 %v65
  %v130 = vunpack.c.l.bf16 %v66
  %v131 = vunpack.c.l.bf16 %v67
  %v132 = vunpack.c.l.bf16 %v68
  %v133 = vunpack.c.l.bf16 %v69
  %v134 = vunpack.c.l.bf16 %v70
  %v135 = vunpack.c.l.bf16 %v71
  %v136 = vunpack.c.l.bf16 %v72
  %v137 = vunpack.c.l.bf16 %v73
  %v138 = vunpack.c.l.bf16 %v74
  %v139 = vunpack.c.l.bf16 %v75
  %v140 = vunpack.c.l.bf16 %v76
  %v141 = vunpack.c.l.bf16 %v77
  %v142 = vld [vmem:[%s1] sm:$0x1]
  %v144 = vperm.slane %v142, 0
  %v146 = vmul.f32 %v78, %v144
  %v147 = vmul.f32 %v79, %v144
  %v148 = vmul.f32 %v80, %v144
  %v149 = vmul.f32 %v81, %v144
  %v150 = vmul.f32 %v82, %v144
  %v151 = vmul.f32 %v83, %v144
  %v152 = vmul.f32 %v84, %v144
  %v153 = vmul.f32 %v85, %v144
  %v154 = vmul.f32 %v86, %v144
  %v155 = vmul.f32 %v87, %v144
  %v156 = vmul.f32 %v88, %v144
  %v157 = vmul.f32 %v89, %v144
  %v158 = vmul.f32 %v90, %v144
  %v159 = vmul.f32 %v91, %v144
  %v160 = vmul.f32 %v92, %v144
  %v161 = vmul.f32 %v93, %v144
  %v162 = vmul.f32 %v94, %v144
  %v163 = vmul.f32 %v95, %v144
  %v164 = vmul.f32 %v96, %v144
  %v165 = vmul.f32 %v97, %v144
  %v166 = vmul.f32 %v98, %v144
  %v167 = vmul.f32 %v99, %v144
  %v168 = vmul.f32 %v100, %v144
  %v169 = vmul.f32 %v101, %v144
  %v170 = vmul.f32 %v102, %v144
  %v171 = vmul.f32 %v103, %v144
  %v172 = vmul.f32 %v104, %v144
  %v173 = vmul.f32 %v105, %v144
  %v174 = vmul.f32 %v106, %v144
  %v175 = vmul.f32 %v107, %v144
  %v176 = vmul.f32 %v108, %v144
  %v177 = vmul.f32 %v109, %v144
  %v178 = vmul.f32 %v110, %v144
  %v179 = vmul.f32 %v111, %v144
  %v180 = vmul.f32 %v112, %v144
  %v181 = vmul.f32 %v113, %v144
  %v182 = vmul.f32 %v114, %v144
  %v183 = vmul.f32 %v115, %v144
  %v184 = vmul.f32 %v116, %v144
  %v185 = vmul.f32 %v117, %v144
  %v186 = vmul.f32 %v118, %v144
  %v187 = vmul.f32 %v119, %v144
  %v188 = vmul.f32 %v120, %v144
  %v189 = vmul.f32 %v121, %v144
  %v190 = vmul.f32 %v122, %v144
  %v191 = vmul.f32 %v123, %v144
  %v192 = vmul.f32 %v124, %v144
  %v193 = vmul.f32 %v125, %v144
  %v194 = vmul.f32 %v126, %v144
  %v195 = vmul.f32 %v127, %v144
  %v196 = vmul.f32 %v128, %v144
  %v197 = vmul.f32 %v129, %v144
  %v198 = vmul.f32 %v130, %v144
  %v199 = vmul.f32 %v131, %v144
  %v200 = vmul.f32 %v132, %v144
  %v201 = vmul.f32 %v133, %v144
  %v202 = vmul.f32 %v134, %v144
  %v203 = vmul.f32 %v135, %v144
  %v204 = vmul.f32 %v136, %v144
  %v205 = vmul.f32 %v137, %v144
  %v206 = vmul.f32 %v138, %v144
  %v207 = vmul.f32 %v139, %v144
  %v208 = vmul.f32 %v140, %v144
  %v209 = vmul.f32 %v141, %v144
  %v210 = vld [vmem:[%s2] sm:$0x1]
  %v212 = vperm.slane %v210, 0
  %v214 = vadd.f32 %v146, %v212
  %v215 = vadd.f32 %v147, %v212
  %v216 = vadd.f32 %v148, %v212
  %v217 = vadd.f32 %v149, %v212
  %v218 = vadd.f32 %v150, %v212
  %v219 = vadd.f32 %v151, %v212
  %v220 = vadd.f32 %v152, %v212
  %v221 = vadd.f32 %v153, %v212
  %v222 = vadd.f32 %v154, %v212
  %v223 = vadd.f32 %v155, %v212
  %v224 = vadd.f32 %v156, %v212
  %v225 = vadd.f32 %v157, %v212
  %v226 = vadd.f32 %v158, %v212
  %v227 = vadd.f32 %v159, %v212
  %v228 = vadd.f32 %v160, %v212
  %v229 = vadd.f32 %v161, %v212
  %v230 = vadd.f32 %v162, %v212
  %v231 = vadd.f32 %v163, %v212
  %v232 = vadd.f32 %v164, %v212
  %v233 = vadd.f32 %v165, %v212
  %v234 = vadd.f32 %v166, %v212
  %v235 = vadd.f32 %v167, %v212
  %v236 = vadd.f32 %v168, %v212
  %v237 = vadd.f32 %v169, %v212
  %v238 = vadd.f32 %v170, %v212
  %v239 = vadd.f32 %v171, %v212
  %v240 = vadd.f32 %v172, %v212
  %v241 = vadd.f32 %v173, %v212
  %v242 = vadd.f32 %v174, %v212
  %v243 = vadd.f32 %v175, %v212
  %v244 = vadd.f32 %v176, %v212
  %v245 = vadd.f32 %v177, %v212
  %v246 = vadd.f32 %v178, %v212
  %v247 = vadd.f32 %v179, %v212
  %v248 = vadd.f32 %v180, %v212
  %v249 = vadd.f32 %v181, %v212
  %v250 = vadd.f32 %v182, %v212
  %v251 = vadd.f32 %v183, %v212
  %v252 = vadd.f32 %v184, %v212
  %v253 = vadd.f32 %v185, %v212
  %v254 = vadd.f32 %v186, %v212
  %v255 = vadd.f32 %v187, %v212
  %v256 = vadd.f32 %v188, %v212
  %v257 = vadd.f32 %v189, %v212
  %v258 = vadd.f32 %v190, %v212
  %v259 = vadd.f32 %v191, %v212
  %v260 = vadd.f32 %v192, %v212
  %v261 = vadd.f32 %v193, %v212
  %v262 = vadd.f32 %v194, %v212
  %v263 = vadd.f32 %v195, %v212
  %v264 = vadd.f32 %v196, %v212
  %v265 = vadd.f32 %v197, %v212
  %v266 = vadd.f32 %v198, %v212
  %v267 = vadd.f32 %v199, %v212
  %v268 = vadd.f32 %v200, %v212
  %v269 = vadd.f32 %v201, %v212
  %v270 = vadd.f32 %v202, %v212
  %v271 = vadd.f32 %v203, %v212
  %v272 = vadd.f32 %v204, %v212
  %v273 = vadd.f32 %v205, %v212
  %v274 = vadd.f32 %v206, %v212
  %v275 = vadd.f32 %v207, %v212
  %v276 = vadd.f32 %v208, %v212
  %v277 = vadd.f32 %v209, %v212
  %v278 = vmax.f32 %v214, 0.0
  %v279 = vmax.f32 %v215, 0.0
  %v280 = vmax.f32 %v216, 0.0
  %v281 = vmax.f32 %v217, 0.0
  %v282 = vmax.f32 %v218, 0.0
  %v283 = vmax.f32 %v219, 0.0
  %v284 = vmax.f32 %v220, 0.0
  %v285 = vmax.f32 %v221, 0.0
  %v286 = vmax.f32 %v222, 0.0
  %v287 = vmax.f32 %v223, 0.0
  %v288 = vmax.f32 %v224, 0.0
  %v289 = vmax.f32 %v225, 0.0
  %v290 = vmax.f32 %v226, 0.0
  %v291 = vmax.f32 %v227, 0.0
  %v292 = vmax.f32 %v228, 0.0
  %v293 = vmax.f32 %v229, 0.0
  %v294 = vmax.f32 %v230, 0.0
  %v295 = vmax.f32 %v231, 0.0
  %v296 = vmax.f32 %v232, 0.0
  %v297 = vmax.f32 %v233, 0.0
  %v298 = vmax.f32 %v234, 0.0
  %v299 = vmax.f32 %v235, 0.0
  %v300 = vmax.f32 %v236, 0.0
  %v301 = vmax.f32 %v237, 0.0
  %v302 = vmax.f32 %v238, 0.0
  %v303 = vmax.f32 %v239, 0.0
  %v304 = vmax.f32 %v240, 0.0
  %v305 = vmax.f32 %v241, 0.0
  %v306 = vmax.f32 %v242, 0.0
  %v307 = vmax.f32 %v243, 0.0
  %v308 = vmax.f32 %v244, 0.0
  %v309 = vmax.f32 %v245, 0.0
  %v310 = vmax.f32 %v246, 0.0
  %v311 = vmax.f32 %v247, 0.0
  %v312 = vmax.f32 %v248, 0.0
  %v313 = vmax.f32 %v249, 0.0
  %v314 = vmax.f32 %v250, 0.0
  %v315 = vmax.f32 %v251, 0.0
  %v316 = vmax.f32 %v252, 0.0
  %v317 = vmax.f32 %v253, 0.0
  %v318 = vmax.f32 %v254, 0.0
  %v319 = vmax.f32 %v255, 0.0
  %v320 = vmax.f32 %v256, 0.0
  %v321 = vmax.f32 %v257, 0.0
  %v322 = vmax.f32 %v258, 0.0
  %v323 = vmax.f32 %v259, 0.0
  %v324 = vmax.f32 %v260, 0.0
  %v325 = vmax.f32 %v261, 0.0
  %v326 = vmax.f32 %v262, 0.0
  %v327 = vmax.f32 %v263, 0.0
  %v328 = vmax.f32 %v264, 0.0
  %v329 = vmax.f32 %v265, 0.0
  %v330 = vmax.f32 %v266, 0.0
  %v331 = vmax.f32 %v267, 0.0
  %v332 = vmax.f32 %v268, 0.0
  %v333 = vmax.f32 %v269, 0.0
  %v334 = vmax.f32 %v270, 0.0
  %v335 = vmax.f32 %v271, 0.0
  %v336 = vmax.f32 %v272, 0.0
  %v337 = vmax.f32 %v273, 0.0
  %v338 = vmax.f32 %v274, 0.0
  %v339 = vmax.f32 %v275, 0.0
  %v340 = vmax.f32 %v276, 0.0
  %v341 = vmax.f32 %v277, 0.0
  %v342 = vpack.c.bf16 %v278, %v278
  %v343 = vpack.c.bf16 %v279, %v279
  %v344 = vpack.c.bf16 %v280, %v280
  %v345 = vpack.c.bf16 %v281, %v281
  %v346 = vpack.c.bf16 %v282, %v282
  %v347 = vpack.c.bf16 %v283, %v283
  %v348 = vpack.c.bf16 %v284, %v284
  %v349 = vpack.c.bf16 %v285, %v285
  %v350 = vpack.c.bf16 %v286, %v286
  %v351 = vpack.c.bf16 %v287, %v287
  %v352 = vpack.c.bf16 %v288, %v288
  %v353 = vpack.c.bf16 %v289, %v289
  %v354 = vpack.c.bf16 %v290, %v290
  %v355 = vpack.c.bf16 %v291, %v291
  %v356 = vpack.c.bf16 %v292, %v292
  %v357 = vpack.c.bf16 %v293, %v293
  %v358 = vpack.c.bf16 %v294, %v294
  %v359 = vpack.c.bf16 %v295, %v295
  %v360 = vpack.c.bf16 %v296, %v296
  %v361 = vpack.c.bf16 %v297, %v297
  %v362 = vpack.c.bf16 %v298, %v298
  %v363 = vpack.c.bf16 %v299, %v299
  %v364 = vpack.c.bf16 %v300, %v300
  %v365 = vpack.c.bf16 %v301, %v301
  %v366 = vpack.c.bf16 %v302, %v302
  %v367 = vpack.c.bf16 %v303, %v303
  %v368 = vpack.c.bf16 %v304, %v304
  %v369 = vpack.c.bf16 %v305, %v305
  %v370 = vpack.c.bf16 %v306, %v306
  %v371 = vpack.c.bf16 %v307, %v307
  %v372 = vpack.c.bf16 %v308, %v308
  %v373 = vpack.c.bf16 %v309, %v309
  %v374 = vpack.c.bf16 %v310, %v310
  %v375 = vpack.c.bf16 %v311, %v311
  %v376 = vpack.c.bf16 %v312, %v312
  %v377 = vpack.c.bf16 %v313, %v313
  %v378 = vpack.c.bf16 %v314, %v314
  %v379 = vpack.c.bf16 %v315, %v315
  %v380 = vpack.c.bf16 %v316, %v316
  %v381 = vpack.c.bf16 %v317, %v317
  %v382 = vpack.c.bf16 %v318, %v318
  %v383 = vpack.c.bf16 %v319, %v319
  %v384 = vpack.c.bf16 %v320, %v320
  %v385 = vpack.c.bf16 %v321, %v321
  %v386 = vpack.c.bf16 %v322, %v322
  %v387 = vpack.c.bf16 %v323, %v323
  %v388 = vpack.c.bf16 %v324, %v324
  %v389 = vpack.c.bf16 %v325, %v325
  %v390 = vpack.c.bf16 %v326, %v326
  %v391 = vpack.c.bf16 %v327, %v327
  %v392 = vpack.c.bf16 %v328, %v328
  %v393 = vpack.c.bf16 %v329, %v329
  %v394 = vpack.c.bf16 %v330, %v330
  %v395 = vpack.c.bf16 %v331, %v331
  %v396 = vpack.c.bf16 %v332, %v332
  %v397 = vpack.c.bf16 %v333, %v333
  %v398 = vpack.c.bf16 %v334, %v334
  %v399 = vpack.c.bf16 %v335, %v335
  %v400 = vpack.c.bf16 %v336, %v336
  %v401 = vpack.c.bf16 %v337, %v337
  %v402 = vpack.c.bf16 %v338, %v338
  %v403 = vpack.c.bf16 %v339, %v339
  %v404 = vpack.c.bf16 %v340, %v340
  %v405 = vpack.c.bf16 %v341, %v341
  %406 = vst [vmem:[%s3] sm:$0xf] %v342
  %407 = vst [vmem:[%s3 + $0x4] sm:$0xf] %v343
  %408 = vst [vmem:[%s3 + $0x8] sm:$0xf] %v344
  %409 = vst [vmem:[%s3 + $0xc] sm:$0xf] %v345
  %410 = vst [vmem:[%s3 + $0x10] sm:$0xf] %v346
  %411 = vst [vmem:[%s3 + $0x14] sm:$0xf] %v347
  %412 = vst [vmem:[%s3 + $0x18] sm:$0xf] %v348
  %413 = vst [vmem:[%s3 + $0x1c] sm:$0xf] %v349
  %414 = vst [vmem:[%s3 + $0x20] sm:$0xf] %v350
  %415 = vst [vmem:[%s3 + $0x24] sm:$0xf] %v351
  %416 = vst [vmem:[%s3 + $0x28] sm:$0xf] %v352
  %417 = vst [vmem:[%s3 + $0x2c] sm:$0xf] %v353
  %418 = vst [vmem:[%s3 + $0x30] sm:$0xf] %v354
  %419 = vst [vmem:[%s3 + $0x34] sm:$0xf] %v355
  %420 = vst [vmem:[%s3 + $0x38] sm:$0xf] %v356
  %421 = vst [vmem:[%s3 + $0x3c] sm:$0xf] %v357
  %422 = vst [vmem:[%s3 + $0x40] sm:$0xf] %v358
  %423 = vst [vmem:[%s3 + $0x44] sm:$0xf] %v359
  %424 = vst [vmem:[%s3 + $0x48] sm:$0xf] %v360
  %425 = vst [vmem:[%s3 + $0x4c] sm:$0xf] %v361
  %426 = vst [vmem:[%s3 + $0x50] sm:$0xf] %v362
  %427 = vst [vmem:[%s3 + $0x54] sm:$0xf] %v363
  %428 = vst [vmem:[%s3 + $0x58] sm:$0xf] %v364
  %429 = vst [vmem:[%s3 + $0x5c] sm:$0xf] %v365
  %430 = vst [vmem:[%s3 + $0x60] sm:$0xf] %v366
  %431 = vst [vmem:[%s3 + $0x64] sm:$0xf] %v367
  %432 = vst [vmem:[%s3 + $0x68] sm:$0xf] %v368
  %433 = vst [vmem:[%s3 + $0x6c] sm:$0xf] %v369
  %434 = vst [vmem:[%s3 + $0x70] sm:$0xf] %v370
  %435 = vst [vmem:[%s3 + $0x74] sm:$0xf] %v371
  %436 = vst [vmem:[%s3 + $0x78] sm:$0xf] %v372
  %437 = vst [vmem:[%s3 + $0x7c] sm:$0xf] %v373
  %438 = vst [vmem:[%s3 + $0x80] sm:$0xf] %v374
  %439 = vst [vmem:[%s3 + $0x84] sm:$0xf] %v375
  %440 = vst [vmem:[%s3 + $0x88] sm:$0xf] %v376
  %441 = vst [vmem:[%s3 + $0x8c] sm:$0xf] %v377
  %442 = vst [vmem:[%s3 + $0x90] sm:$0xf] %v378
  %443 = vst [vmem:[%s3 + $0x94] sm:$0xf] %v379
  %444 = vst [vmem:[%s3 + $0x98] sm:$0xf] %v380
  %445 = vst [vmem:[%s3 + $0x9c] sm:$0xf] %v381
  %446 = vst [vmem:[%s3 + $0xa0] sm:$0xf] %v382
  %447 = vst [vmem:[%s3 + $0xa4] sm:$0xf] %v383
  %448 = vst [vmem:[%s3 + $0xa8] sm:$0xf] %v384
  %449 = vst [vmem:[%s3 + $0xac] sm:$0xf] %v385
  %450 = vst [vmem:[%s3 + $0xb0] sm:$0xf] %v386
  %451 = vst [vmem:[%s3 + $0xb4] sm:$0xf] %v387
  %452 = vst [vmem:[%s3 + $0xb8] sm:$0xf] %v388
  %453 = vst [vmem:[%s3 + $0xbc] sm:$0xf] %v389
  %454 = vst [vmem:[%s3 + $0xc0] sm:$0xf] %v390
  %455 = vst [vmem:[%s3 + $0xc4] sm:$0xf] %v391
  %456 = vst [vmem:[%s3 + $0xc8] sm:$0xf] %v392
  %457 = vst [vmem:[%s3 + $0xcc] sm:$0xf] %v393
  %458 = vst [vmem:[%s3 + $0xd0] sm:$0xf] %v394
  %459 = vst [vmem:[%s3 + $0xd4] sm:$0xf] %v395
  %460 = vst [vmem:[%s3 + $0xd8] sm:$0xf] %v396
  %461 = vst [vmem:[%s3 + $0xdc] sm:$0xf] %v397
  %462 = vst [vmem:[%s3 + $0xe0] sm:$0xf] %v398
  %463 = vst [vmem:[%s3 + $0xe4] sm:$0xf] %v399
  %464 = vst [vmem:[%s3 + $0xe8] sm:$0xf] %v400
  %465 = vst [vmem:[%s3 + $0xec] sm:$0xf] %v401
  %466 = vst [vmem:[%s3 + $0xf0] sm:$0xf] %v402
  %467 = vst [vmem:[%s3 + $0xf4] sm:$0xf] %v403
  %468 = vst [vmem:[%s3 + $0xf8] sm:$0xf] %v404
  %469 = vst [vmem:[%s3 + $0xfc] sm:$0xf] %v405
  // Predicated region
  $region14: #{bottleneck_forward.7} parent=0 // pred_check
    _
  $region15: #{bottleneck_forward.7} parent=0 // pred_check_branch
    %471 = sbr.rel (0) target = $region17
  $region16: #{bottleneck_forward.7} parent=0 // pred_region
    _
  $region17: #{bottleneck_forward.7} parent=0 // pred_fallthru
    _
  // Predicated region
  $region18: #{bottleneck_forward.7} parent=0 // pred_check
    _
  $region19: #{bottleneck_forward.7} parent=0 // pred_check_branch
    %473 = sbr.rel (0) target = $region21
  $region20: #{bottleneck_forward.7} parent=0 // pred_region
    _
  $region21: #{bottleneck_forward.7} parent=0 // pred_fallthru
    _

// kernel: bottleneck_forward.6
$region0: #{bottleneck_forward.6}
  #allocation0 [shape = 'u32[]', space=smem, size = 0x4, offset = 0x4, fixed_abs, tag = 'smem constant byte address 0x4 - core index']
  #allocation1 [shape = 'u32[72,128]{1,0:T(1,128)}', space=vmem, size = 0x9000, scoped, tag = 'internal scratch']
  %s0 = inlined_call_operand.vmem [shape: bf16[512,128], index: 0, kind: input, shape index: {}]
  %s1 = inlined_call_operand.vmem [shape: bf16[128,128], index: 1, kind: input, shape index: {}]
  %s2 = inlined_call_operand.vmem [shape: bf16[512,128], index: 2, kind: output, shape index: {0}]
  %s3 = inlined_call_operand.vmem [shape: f32[1,2,128], index: 3, kind: output, shape index: {1}]
  %4 = xla_tuple %s2, %s3
  %s5 = sld [smem:[#allocation0]]
  $region26: #{bottleneck_forward.6} parent=0
    _
  %s7 = ssub.s32 1, %s5
  %s8 = scalar_select 0, %s7, %s5
  // Predicated region
  $region2: #{bottleneck_forward.6} parent=0 // pred_check
    _
  $region3: #{bottleneck_forward.6} parent=0 // pred_check_branch
    %10 = sbr.rel (0) target = $region5
  $region4: #{bottleneck_forward.6} parent=0 // pred_region
    _
  $region5: #{bottleneck_forward.6} parent=0 // pred_fallthru
    _
  // Predicated region
  $region6: #{bottleneck_forward.6} parent=0 // pred_check
    _
  $region7: #{bottleneck_forward.6} parent=0 // pred_check_branch
    %12 = sbr.rel (0) target = $region9
  $region8: #{bottleneck_forward.6} parent=0 // pred_region
    _
  $region9: #{bottleneck_forward.6} parent=0 // pred_fallthru
    _
  %v13 = vld [vmem:[%s0] sm:$0xf]
  %v14 = vld [vmem:[%s0 + $0x4] sm:$0xf]
  %v15 = vld [vmem:[%s0 + $0x8] sm:$0xf]
  %v16 = vld [vmem:[%s0 + $0xc] sm:$0xf]
  %v17 = vld [vmem:[%s0 + $0x10] sm:$0xf]
  %v18 = vld [vmem:[%s0 + $0x14] sm:$0xf]
  %v19 = vld [vmem:[%s0 + $0x18] sm:$0xf]
  %v20 = vld [vmem:[%s0 + $0x1c] sm:$0xf]
  %v21 = vld [vmem:[%s0 + $0x20] sm:$0xf]
  %v22 = vld [vmem:[%s0 + $0x24] sm:$0xf]
  %v23 = vld [vmem:[%s0 + $0x28] sm:$0xf]
  %v24 = vld [vmem:[%s0 + $0x2c] sm:$0xf]
  %v25 = vld [vmem:[%s0 + $0x30] sm:$0xf]
  %v26 = vld [vmem:[%s0 + $0x34] sm:$0xf]
  %v27 = vld [vmem:[%s0 + $0x38] sm:$0xf]
  %v28 = vld [vmem:[%s0 + $0x3c] sm:$0xf]
  %v29 = vld [vmem:[%s0 + $0x40] sm:$0xf]
  %v30 = vld [vmem:[%s0 + $0x44] sm:$0xf]
  %v31 = vld [vmem:[%s0 + $0x48] sm:$0xf]
  %v32 = vld [vmem:[%s0 + $0x4c] sm:$0xf]
  %v33 = vld [vmem:[%s0 + $0x50] sm:$0xf]
  %v34 = vld [vmem:[%s0 + $0x54] sm:$0xf]
  %v35 = vld [vmem:[%s0 + $0x58] sm:$0xf]
  %v36 = vld [vmem:[%s0 + $0x5c] sm:$0xf]
  %v37 = vld [vmem:[%s0 + $0x60] sm:$0xf]
  %v38 = vld [vmem:[%s0 + $0x64] sm:$0xf]
  %v39 = vld [vmem:[%s0 + $0x68] sm:$0xf]
  %v40 = vld [vmem:[%s0 + $0x6c] sm:$0xf]
  %v41 = vld [vmem:[%s0 + $0x70] sm:$0xf]
  %v42 = vld [vmem:[%s0 + $0x74] sm:$0xf]
  %v43 = vld [vmem:[%s0 + $0x78] sm:$0xf]
  %v44 = vld [vmem:[%s0 + $0x7c] sm:$0xf]
  %v45 = vld [vmem:[%s0 + $0x80] sm:$0xf]
  %v46 = vld [vmem:[%s0 + $0x84] sm:$0xf]
  %v47 = vld [vmem:[%s0 + $0x88] sm:$0xf]
  %v48 = vld [vmem:[%s0 + $0x8c] sm:$0xf]
  %v49 = vld [vmem:[%s0 + $0x90] sm:$0xf]
  %v50 = vld [vmem:[%s0 + $0x94] sm:$0xf]
  %v51 = vld [vmem:[%s0 + $0x98] sm:$0xf]
  %v52 = vld [vmem:[%s0 + $0x9c] sm:$0xf]
  %v53 = vld [vmem:[%s0 + $0xa0] sm:$0xf]
  %v54 = vld [vmem:[%s0 + $0xa4] sm:$0xf]
  %v55 = vld [vmem:[%s0 + $0xa8] sm:$0xf]
  %v56 = vld [vmem:[%s0 + $0xac] sm:$0xf]
  %v57 = vld [vmem:[%s0 + $0xb0] sm:$0xf]
  %v58 = vld [vmem:[%s0 + $0xb4] sm:$0xf]
  %v59 = vld [vmem:[%s0 + $0xb8] sm:$0xf]
  %v60 = vld [vmem:[%s0 + $0xbc] sm:$0xf]
  %v61 = vld [vmem:[%s0 + $0xc0] sm:$0xf]
  %v62 = vld [vmem:[%s0 + $0xc4] sm:$0xf]
  %v63 = vld [vmem:[%s0 + $0xc8] sm:$0xf]
  %v64 = vld [vmem:[%s0 + $0xcc] sm:$0xf]
  %v65 = vld [vmem:[%s0 + $0xd0] sm:$0xf]
  %v66 = vld [vmem:[%s0 + $0xd4] sm:$0xf]
  %v67 = vld [vmem:[%s0 + $0xd8] sm:$0xf]
  %v68 = vld [vmem:[%s0 + $0xdc] sm:$0xf]
  %v69 = vld [vmem:[%s0 + $0xe0] sm:$0xf]
  %v70 = vld [vmem:[%s0 + $0xe4] sm:$0xf]
  %v71 = vld [vmem:[%s0 + $0xe8] sm:$0xf]
  %v72 = vld [vmem:[%s0 + $0xec] sm:$0xf]
  %v73 = vld [vmem:[%s0 + $0xf0] sm:$0xf]
  %v74 = vld [vmem:[%s0 + $0xf4] sm:$0xf]
  %v75 = vld [vmem:[%s0 + $0xf8] sm:$0xf]
  %v76 = vld [vmem:[%s0 + $0xfc] sm:$0xf]
  %v77 = vld [vmem:[%s1] sm:$0xf]
  %v78 = vld [vmem:[%s1 + $0x4] sm:$0xf]
  %v79 = vld [vmem:[%s1 + $0x8] sm:$0xf]
  %v80 = vld [vmem:[%s1 + $0xc] sm:$0xf]
  %v81 = vld [vmem:[%s1 + $0x10] sm:$0xf]
  %v82 = vld [vmem:[%s1 + $0x14] sm:$0xf]
  %v83 = vld [vmem:[%s1 + $0x18] sm:$0xf]
  %v84 = vld [vmem:[%s1 + $0x1c] sm:$0xf]
  %v85 = vld [vmem:[%s1 + $0x20] sm:$0xf]
  %v86 = vld [vmem:[%s1 + $0x24] sm:$0xf]
  %v87 = vld [vmem:[%s1 + $0x28] sm:$0xf]
  %v88 = vld [vmem:[%s1 + $0x2c] sm:$0xf]
  %v89 = vld [vmem:[%s1 + $0x30] sm:$0xf]
  %v90 = vld [vmem:[%s1 + $0x34] sm:$0xf]
  %v91 = vld [vmem:[%s1 + $0x38] sm:$0xf]
  %v92 = vld [vmem:[%s1 + $0x3c] sm:$0xf]
  %v157 = vunpack.c.l.b16 %v13
  %v158 = vunpack.c.l.b16 %v14
  %v159 = vunpack.c.l.b16 %v15
  %v160 = vunpack.c.l.b16 %v16
  %v161 = vunpack.c.l.b16 %v17
  %v162 = vunpack.c.l.b16 %v18
  %v163 = vunpack.c.l.b16 %v19
  %v164 = vunpack.c.l.b16 %v20
  %v165 = vunpack.c.l.b16 %v21
  %v166 = vunpack.c.l.b16 %v22
  %v167 = vunpack.c.l.b16 %v23
  %v168 = vunpack.c.l.b16 %v24
  %v169 = vunpack.c.l.b16 %v25
  %v170 = vunpack.c.l.b16 %v26
  %v171 = vunpack.c.l.b16 %v27
  %v172 = vunpack.c.l.b16 %v28
  %v173 = vunpack.c.l.b16 %v29
  %v174 = vunpack.c.l.b16 %v30
  %v175 = vunpack.c.l.b16 %v31
  %v176 = vunpack.c.l.b16 %v32
  %v177 = vunpack.c.l.b16 %v33
  %v178 = vunpack.c.l.b16 %v34
  %v179 = vunpack.c.l.b16 %v35
  %v180 = vunpack.c.l.b16 %v36
  %v181 = vunpack.c.l.b16 %v37
  %v182 = vunpack.c.l.b16 %v38
  %v183 = vunpack.c.l.b16 %v39
  %v184 = vunpack.c.l.b16 %v40
  %v185 = vunpack.c.l.b16 %v41
  %v186 = vunpack.c.l.b16 %v42
  %v187 = vunpack.c.l.b16 %v43
  %v188 = vunpack.c.l.b16 %v44
  %v189 = vunpack.c.l.b16 %v45
  %v190 = vunpack.c.l.b16 %v46
  %v191 = vunpack.c.l.b16 %v47
  %v192 = vunpack.c.l.b16 %v48
  %v193 = vunpack.c.l.b16 %v49
  %v194 = vunpack.c.l.b16 %v50
  %v195 = vunpack.c.l.b16 %v51
  %v196 = vunpack.c.l.b16 %v52
  %v197 = vunpack.c.l.b16 %v53
  %v198 = vunpack.c.l.b16 %v54
  %v199 = vunpack.c.l.b16 %v55
  %v200 = vunpack.c.l.b16 %v56
  %v201 = vunpack.c.l.b16 %v57
  %v202 = vunpack.c.l.b16 %v58
  %v203 = vunpack.c.l.b16 %v59
  %v204 = vunpack.c.l.b16 %v60
  %v205 = vunpack.c.l.b16 %v61
  %v206 = vunpack.c.l.b16 %v62
  %v207 = vunpack.c.l.b16 %v63
  %v208 = vunpack.c.l.b16 %v64
  %v209 = vunpack.c.l.b16 %v65
  %v210 = vunpack.c.l.b16 %v66
  %v211 = vunpack.c.l.b16 %v67
  %v212 = vunpack.c.l.b16 %v68
  %v213 = vunpack.c.l.b16 %v69
  %v214 = vunpack.c.l.b16 %v70
  %v215 = vunpack.c.l.b16 %v71
  %v216 = vunpack.c.l.b16 %v72
  %v217 = vunpack.c.l.b16 %v73
  %v218 = vunpack.c.l.b16 %v74
  %v219 = vunpack.c.l.b16 %v75
  %v220 = vunpack.c.l.b16 %v76
  %v221 = vpack.c.b16 %v158, %v157
  %v222 = vpack.c.b16 %v160, %v159
  %v223 = vpack.c.b16 %v162, %v161
  %v224 = vpack.c.b16 %v164, %v163
  %v225 = vpack.c.b16 %v166, %v165
  %v226 = vpack.c.b16 %v168, %v167
  %v227 = vpack.c.b16 %v170, %v169
  %v228 = vpack.c.b16 %v172, %v171
  %v229 = vpack.c.b16 %v174, %v173
  %v230 = vpack.c.b16 %v176, %v175
  %v231 = vpack.c.b16 %v178, %v177
  %v232 = vpack.c.b16 %v180, %v179
  %v233 = vpack.c.b16 %v182, %v181
  %v234 = vpack.c.b16 %v184, %v183
  %v235 = vpack.c.b16 %v186, %v185
  %v236 = vpack.c.b16 %v188, %v187
  %v237 = vpack.c.b16 %v190, %v189
  %v238 = vpack.c.b16 %v192, %v191
  %v239 = vpack.c.b16 %v194, %v193
  %v240 = vpack.c.b16 %v196, %v195
  %v241 = vpack.c.b16 %v198, %v197
  %v242 = vpack.c.b16 %v200, %v199
  %v243 = vpack.c.b16 %v202, %v201
  %v244 = vpack.c.b16 %v204, %v203
  %v245 = vpack.c.b16 %v206, %v205
  %v246 = vpack.c.b16 %v208, %v207
  %v247 = vpack.c.b16 %v210, %v209
  %v248 = vpack.c.b16 %v212, %v211
  %v249 = vpack.c.b16 %v214, %v213
  %v250 = vpack.c.b16 %v216, %v215
  %v251 = vpack.c.b16 %v218, %v217
  %v252 = vpack.c.b16 %v220, %v219
  %v301 = vunpack.c.l.b16 %v77
  %v302 = vunpack.c.l.b16 %v78
  %v303 = vunpack.c.l.b16 %v79
  %v304 = vunpack.c.l.b16 %v80
  %v305 = vunpack.c.l.b16 %v81
  %v306 = vunpack.c.l.b16 %v82
  %v307 = vunpack.c.l.b16 %v83
  %v308 = vunpack.c.l.b16 %v84
  %v309 = vunpack.c.l.b16 %v85
  %v310 = vunpack.c.l.b16 %v86
  %v311 = vunpack.c.l.b16 %v87
  %v312 = vunpack.c.l.b16 %v88
  %v313 = vunpack.c.l.b16 %v89
  %v314 = vunpack.c.l.b16 %v90
  %v315 = vunpack.c.l.b16 %v91
  %v316 = vunpack.c.l.b16 %v92
  %v317 = vpack.c.b16 %v302, %v301
  %v318 = vpack.c.b16 %v304, %v303
  %v319 = vpack.c.b16 %v306, %v305
  %v320 = vpack.c.b16 %v308, %v307
  %v321 = vpack.c.b16 %v310, %v309
  %v322 = vpack.c.b16 %v312, %v311
  %v323 = vpack.c.b16 %v314, %v313
  %v324 = vpack.c.b16 %v316, %v315
  %333 = vmatpush.bf16.msra.mxu0 %v324
  %334 = vmatpush.bf16.msra.mxu0 %v323
  %335 = vmatpush.bf16.msra.mxu0 %v322
  %336 = vmatpush.bf16.msra.mxu0 %v321
  %337 = vmatpush.bf16.msra.mxu0 %v320
  %338 = vmatpush.bf16.msra.mxu0 %v319
  %339 = vmatpush.bf16.msra.mxu0 %v318
  %340 = vmatpush.bf16.msra.mxu0 %v317
  %341 = vmatmul.bf16.gmra.mxu0 %v221
  %v342 = vpop.f32.mrf.mxu0
  %v343 = vadd.f32 0.0, %v342
  %v344 = vpop.f32.mrf.mxu0
  %v345 = vadd.f32 0.0, %v344
  %346 = vmatmul.bf16.gmra.mxu0 %v222
  %v347 = vpop.f32.mrf.mxu0
  %v348 = vadd.f32 0.0, %v347
  %v349 = vpop.f32.mrf.mxu0
  %v350 = vadd.f32 0.0, %v349
  %351 = vmatmul.bf16.gmra.mxu0 %v223
  %v352 = vpop.f32.mrf.mxu0
  %v353 = vadd.f32 0.0, %v352
  %v354 = vpop.f32.mrf.mxu0
  %v355 = vadd.f32 0.0, %v354
  %356 = vmatmul.bf16.gmra.mxu0 %v224
  %v357 = vpop.f32.mrf.mxu0
  %v358 = vadd.f32 0.0, %v357
  %v359 = vpop.f32.mrf.mxu0
  %v360 = vadd.f32 0.0, %v359
  %361 = vmatmul.bf16.gmra.mxu0 %v225
  %v362 = vpop.f32.mrf.mxu0
  %v363 = vadd.f32 0.0, %v362
  %v364 = vpop.f32.mrf.mxu0
  %v365 = vadd.f32 0.0, %v364
  %366 = vmatmul.bf16.gmra.mxu0 %v226
  %v367 = vpop.f32.mrf.mxu0
  %v368 = vadd.f32 0.0, %v367
  %v369 = vpop.f32.mrf.mxu0
  %v370 = vadd.f32 0.0, %v369
  %371 = vmatmul.bf16.gmra.mxu0 %v227
  %v372 = vpop.f32.mrf.mxu0
  %v373 = vadd.f32 0.0, %v372
  %v374 = vpop.f32.mrf.mxu0
  %v375 = vadd.f32 0.0, %v374
  %376 = vmatmul.bf16.gmra.mxu0 %v228
  %v377 = vpop.f32.mrf.mxu0
  %v378 = vadd.f32 0.0, %v377
  %v379 = vpop.f32.mrf.mxu0
  %v380 = vadd.f32 0.0, %v379
  %381 = vmatmul.bf16.gmra.mxu0 %v229
  %v382 = vpop.f32.mrf.mxu0
  %v383 = vadd.f32 0.0, %v382
  %v384 = vpop.f32.mrf.mxu0
  %v385 = vadd.f32 0.0, %v384
  %386 = vmatmul.bf16.gmra.mxu0 %v230
  %v387 = vpop.f32.mrf.mxu0
  %v388 = vadd.f32 0.0, %v387
  %v389 = vpop.f32.mrf.mxu0
  %v390 = vadd.f32 0.0, %v389
  %391 = vmatmul.bf16.gmra.mxu0 %v231
  %v392 = vpop.f32.mrf.mxu0
  %v393 = vadd.f32 0.0, %v392
  %v394 = vpop.f32.mrf.mxu0
  %v395 = vadd.f32 0.0, %v394
  %396 = vmatmul.bf16.gmra.mxu0 %v232
  %v397 = vpop.f32.mrf.mxu0
  %v398 = vadd.f32 0.0, %v397
  %v399 = vpop.f32.mrf.mxu0
  %v400 = vadd.f32 0.0, %v399
  %401 = vmatmul.bf16.gmra.mxu0 %v233
  %v402 = vpop.f32.mrf.mxu0
  %v403 = vadd.f32 0.0, %v402
  %v404 = vpop.f32.mrf.mxu0
  %v405 = vadd.f32 0.0, %v404
  %406 = vmatmul.bf16.gmra.mxu0 %v234
  %v407 = vpop.f32.mrf.mxu0
  %v408 = vadd.f32 0.0, %v407
  %v409 = vpop.f32.mrf.mxu0
  %v410 = vadd.f32 0.0, %v409
  %411 = vmatmul.bf16.gmra.mxu0 %v235
  %v412 = vpop.f32.mrf.mxu0
  %v413 = vadd.f32 0.0, %v412
  %v414 = vpop.f32.mrf.mxu0
  %v415 = vadd.f32 0.0, %v414
  %416 = vmatmul.bf16.gmra.mxu0 %v236
  %v417 = vpop.f32.mrf.mxu0
  %v418 = vadd.f32 0.0, %v417
  %v419 = vpop.f32.mrf.mxu0
  %v420 = vadd.f32 0.0, %v419
  %421 = vmatmul.bf16.gmra.mxu0 %v237
  %v422 = vpop.f32.mrf.mxu0
  %v423 = vadd.f32 0.0, %v422
  %v424 = vpop.f32.mrf.mxu0
  %v425 = vadd.f32 0.0, %v424
  %426 = vmatmul.bf16.gmra.mxu0 %v238
  %v427 = vpop.f32.mrf.mxu0
  %v428 = vadd.f32 0.0, %v427
  %v429 = vpop.f32.mrf.mxu0
  %v430 = vadd.f32 0.0, %v429
  %431 = vmatmul.bf16.gmra.mxu0 %v239
  %v432 = vpop.f32.mrf.mxu0
  %v433 = vadd.f32 0.0, %v432
  %v434 = vpop.f32.mrf.mxu0
  %v435 = vadd.f32 0.0, %v434
  %436 = vmatmul.bf16.gmra.mxu0 %v240
  %v437 = vpop.f32.mrf.mxu0
  %v438 = vadd.f32 0.0, %v437
  %v439 = vpop.f32.mrf.mxu0
  %v440 = vadd.f32 0.0, %v439
  %441 = vmatmul.bf16.gmra.mxu0 %v241
  %v442 = vpop.f32.mrf.mxu0
  %v443 = vadd.f32 0.0, %v442
  %v444 = vpop.f32.mrf.mxu0
  %v445 = vadd.f32 0.0, %v444
  %446 = vmatmul.bf16.gmra.mxu0 %v242
  %v447 = vpop.f32.mrf.mxu0
  %v448 = vadd.f32 0.0, %v447
  %v449 = vpop.f32.mrf.mxu0
  %v450 = vadd.f32 0.0, %v449
  %451 = vmatmul.bf16.gmra.mxu0 %v243
  %v452 = vpop.f32.mrf.mxu0
  %v453 = vadd.f32 0.0, %v452
  %v454 = vpop.f32.mrf.mxu0
  %v455 = vadd.f32 0.0, %v454
  %456 = vmatmul.bf16.gmra.mxu0 %v244
  %v457 = vpop.f32.mrf.mxu0
  %v458 = vadd.f32 0.0, %v457
  %v459 = vpop.f32.mrf.mxu0
  %v460 = vadd.f32 0.0, %v459
  %461 = vmatmul.bf16.gmra.mxu0 %v245
  %v462 = vpop.f32.mrf.mxu0
  %v463 = vadd.f32 0.0, %v462
  %v464 = vpop.f32.mrf.mxu0
  %v465 = vadd.f32 0.0, %v464
  %466 = vmatmul.bf16.gmra.mxu0 %v246
  %v467 = vpop.f32.mrf.mxu0
  %v468 = vadd.f32 0.0, %v467
  %v469 = vpop.f32.mrf.mxu0
  %v470 = vadd.f32 0.0, %v469
  %471 = vmatmul.bf16.gmra.mxu0 %v247
  %v472 = vpop.f32.mrf.mxu0
  %v473 = vadd.f32 0.0, %v472
  %v474 = vpop.f32.mrf.mxu0
  %v475 = vadd.f32 0.0, %v474
  %476 = vmatmul.bf16.gmra.mxu0 %v248
  %v477 = vpop.f32.mrf.mxu0
  %v478 = vadd.f32 0.0, %v477
  %v479 = vpop.f32.mrf.mxu0
  %v480 = vadd.f32 0.0, %v479
  %481 = vmatmul.bf16.gmra.mxu0 %v249
  %v482 = vpop.f32.mrf.mxu0
  %v483 = vadd.f32 0.0, %v482
  %v484 = vpop.f32.mrf.mxu0
  %v485 = vadd.f32 0.0, %v484
  %486 = vmatmul.bf16.gmra.mxu0 %v250
  %v487 = vpop.f32.mrf.mxu0
  %v488 = vadd.f32 0.0, %v487
  %v489 = vpop.f32.mrf.mxu0
  %v490 = vadd.f32 0.0, %v489
  %491 = vmatmul.bf16.gmra.mxu0 %v251
  %v492 = vpop.f32.mrf.mxu0
  %v493 = vadd.f32 0.0, %v492
  %v494 = vpop.f32.mrf.mxu0
  %v495 = vadd.f32 0.0, %v494
  %496 = vmatmul.bf16.gmra.mxu0 %v252
  %v497 = vpop.f32.mrf.mxu0
  %v498 = vadd.f32 0.0, %v497
  %v499 = vpop.f32.mrf.mxu0
  %v500 = vadd.f32 0.0, %v499
  %501 = vdwg.mxu0
  %v502 = vpack.c.bf16 %v343, %v343
  %v503 = vpack.c.bf16 %v345, %v345
  %v504 = vpack.c.bf16 %v348, %v348
  %v505 = vpack.c.bf16 %v350, %v350
  %v506 = vpack.c.bf16 %v353, %v353
  %v507 = vpack.c.bf16 %v355, %v355
  %v508 = vpack.c.bf16 %v358, %v358
  %v509 = vpack.c.bf16 %v360, %v360
  %v510 = vpack.c.bf16 %v363, %v363
  %v511 = vpack.c.bf16 %v365, %v365
  %v512 = vpack.c.bf16 %v368, %v368
  %v513 = vpack.c.bf16 %v370, %v370
  %v514 = vpack.c.bf16 %v373, %v373
  %v515 = vpack.c.bf16 %v375, %v375
  %v516 = vpack.c.bf16 %v378, %v378
  %v517 = vpack.c.bf16 %v380, %v380
  %v518 = vpack.c.bf16 %v383, %v383
  %v519 = vpack.c.bf16 %v385, %v385
  %v520 = vpack.c.bf16 %v388, %v388
  %v521 = vpack.c.bf16 %v390, %v390
  %v522 = vpack.c.bf16 %v393, %v393
  %v523 = vpack.c.bf16 %v395, %v395
  %v524 = vpack.c.bf16 %v398, %v398
  %v525 = vpack.c.bf16 %v400, %v400
  %v526 = vpack.c.bf16 %v403, %v403
  %v527 = vpack.c.bf16 %v405, %v405
  %v528 = vpack.c.bf16 %v408, %v408
  %v529 = vpack.c.bf16 %v410, %v410
  %v530 = vpack.c.bf16 %v413, %v413
  %v531 = vpack.c.bf16 %v415, %v415
  %v532 = vpack.c.bf16 %v418, %v418
  %v533 = vpack.c.bf16 %v420, %v420
  %v534 = vpack.c.bf16 %v423, %v423
  %v535 = vpack.c.bf16 %v425, %v425
  %v536 = vpack.c.bf16 %v428, %v428
  %v537 = vpack.c.bf16 %v430, %v430
  %v538 = vpack.c.bf16 %v433, %v433
  %v539 = vpack.c.bf16 %v435, %v435
  %v540 = vpack.c.bf16 %v438, %v438
  %v541 = vpack.c.bf16 %v440, %v440
  %v542 = vpack.c.bf16 %v443, %v443
  %v543 = vpack.c.bf16 %v445, %v445
  %v544 = vpack.c.bf16 %v448, %v448
  %v545 = vpack.c.bf16 %v450, %v450
  %v546 = vpack.c.bf16 %v453, %v453
  %v547 = vpack.c.bf16 %v455, %v455
  %v548 = vpack.c.bf16 %v458, %v458
  %v549 = vpack.c.bf16 %v460, %v460
  %v550 = vpack.c.bf16 %v463, %v463
  %v551 = vpack.c.bf16 %v465, %v465
  %v552 = vpack.c.bf16 %v468, %v468
  %v553 = vpack.c.bf16 %v470, %v470
  %v554 = vpack.c.bf16 %v473, %v473
  %v555 = vpack.c.bf16 %v475, %v475
  %v556 = vpack.c.bf16 %v478, %v478
  %v557 = vpack.c.bf16 %v480, %v480
  %v558 = vpack.c.bf16 %v483, %v483
  %v559 = vpack.c.bf16 %v485, %v485
  %v560 = vpack.c.bf16 %v488, %v488
  %v561 = vpack.c.bf16 %v490, %v490
  %v562 = vpack.c.bf16 %v493, %v493
  %v563 = vpack.c.bf16 %v495, %v495
  %v564 = vpack.c.bf16 %v498, %v498
  %v565 = vpack.c.bf16 %v500, %v500
  %566 = vst [vmem:[%s2] sm:$0xf] %v502
  %567 = vst [vmem:[%s2 + $0x4] sm:$0xf] %v503
  %568 = vst [vmem:[%s2 + $0x8] sm:$0xf] %v504
  %569 = vst [vmem:[%s2 + $0xc] sm:$0xf] %v505
  %570 = vst [vmem:[%s2 + $0x10] sm:$0xf] %v506
  %571 = vst [vmem:[%s2 + $0x14] sm:$0xf] %v507
  %572 = vst [vmem:[%s2 + $0x18] sm:$0xf] %v508
  %573 = vst [vmem:[%s2 + $0x1c] sm:$0xf] %v509
  %574 = vst [vmem:[%s2 + $0x20] sm:$0xf] %v510
  %575 = vst [vmem:[%s2 + $0x24] sm:$0xf] %v511
  %576 = vst [vmem:[%s2 + $0x28] sm:$0xf] %v512
  %577 = vst [vmem:[%s2 + $0x2c] sm:$0xf] %v513
  %578 = vst [vmem:[%s2 + $0x30] sm:$0xf] %v514
  %579 = vst [vmem:[%s2 + $0x34] sm:$0xf] %v515
  %580 = vst [vmem:[%s2 + $0x38] sm:$0xf] %v516
  %581 = vst [vmem:[%s2 + $0x3c] sm:$0xf] %v517
  %582 = vst [vmem:[%s2 + $0x40] sm:$0xf] %v518
  %583 = vst [vmem:[%s2 + $0x44] sm:$0xf] %v519
  %584 = vst [vmem:[%s2 + $0x48] sm:$0xf] %v520
  %585 = vst [vmem:[%s2 + $0x4c] sm:$0xf] %v521
  %586 = vst [vmem:[%s2 + $0x50] sm:$0xf] %v522
  %587 = vst [vmem:[%s2 + $0x54] sm:$0xf] %v523
  %588 = vst [vmem:[%s2 + $0x58] sm:$0xf] %v524
  %589 = vst [vmem:[%s2 + $0x5c] sm:$0xf] %v525
  %590 = vst [vmem:[%s2 + $0x60] sm:$0xf] %v526
  %591 = vst [vmem:[%s2 + $0x64] sm:$0xf] %v527
  %592 = vst [vmem:[%s2 + $0x68] sm:$0xf] %v528
  %593 = vst [vmem:[%s2 + $0x6c] sm:$0xf] %v529
  %594 = vst [vmem:[%s2 + $0x70] sm:$0xf] %v530
  %595 = vst [vmem:[%s2 + $0x74] sm:$0xf] %v531
  %596 = vst [vmem:[%s2 + $0x78] sm:$0xf] %v532
  %597 = vst [vmem:[%s2 + $0x7c] sm:$0xf] %v533
  %598 = vst [vmem:[%s2 + $0x80] sm:$0xf] %v534
  %599 = vst [vmem:[%s2 + $0x84] sm:$0xf] %v535
  %600 = vst [vmem:[%s2 + $0x88] sm:$0xf] %v536
  %601 = vst [vmem:[%s2 + $0x8c] sm:$0xf] %v537
  %602 = vst [vmem:[%s2 + $0x90] sm:$0xf] %v538
  %603 = vst [vmem:[%s2 + $0x94] sm:$0xf] %v539
  %604 = vst [vmem:[%s2 + $0x98] sm:$0xf] %v540
  %605 = vst [vmem:[%s2 + $0x9c] sm:$0xf] %v541
  %606 = vst [vmem:[%s2 + $0xa0] sm:$0xf] %v542
  %607 = vst [vmem:[%s2 + $0xa4] sm:$0xf] %v543
  %608 = vst [vmem:[%s2 + $0xa8] sm:$0xf] %v544
  %609 = vst [vmem:[%s2 + $0xac] sm:$0xf] %v545
  %610 = vst [vmem:[%s2 + $0xb0] sm:$0xf] %v546
  %611 = vst [vmem:[%s2 + $0xb4] sm:$0xf] %v547
  %612 = vst [vmem:[%s2 + $0xb8] sm:$0xf] %v548
  %613 = vst [vmem:[%s2 + $0xbc] sm:$0xf] %v549
  %614 = vst [vmem:[%s2 + $0xc0] sm:$0xf] %v550
  %615 = vst [vmem:[%s2 + $0xc4] sm:$0xf] %v551
  %616 = vst [vmem:[%s2 + $0xc8] sm:$0xf] %v552
  %617 = vst [vmem:[%s2 + $0xcc] sm:$0xf] %v553
  %618 = vst [vmem:[%s2 + $0xd0] sm:$0xf] %v554
  %619 = vst [vmem:[%s2 + $0xd4] sm:$0xf] %v555
  %620 = vst [vmem:[%s2 + $0xd8] sm:$0xf] %v556
  %621 = vst [vmem:[%s2 + $0xdc] sm:$0xf] %v557
  %622 = vst [vmem:[%s2 + $0xe0] sm:$0xf] %v558
  %623 = vst [vmem:[%s2 + $0xe4] sm:$0xf] %v559
  %624 = vst [vmem:[%s2 + $0xe8] sm:$0xf] %v560
  %625 = vst [vmem:[%s2 + $0xec] sm:$0xf] %v561
  %626 = vst [vmem:[%s2 + $0xf0] sm:$0xf] %v562
  %627 = vst [vmem:[%s2 + $0xf4] sm:$0xf] %v563
  %628 = vst [vmem:[%s2 + $0xf8] sm:$0xf] %v564
  %629 = vst [vmem:[%s2 + $0xfc] sm:$0xf] %v565
  %v630 = vadd.f32 %v343, %v345
  %v631 = vadd.f32 %v630, %v348
  %v632 = vadd.f32 %v631, %v350
  %v633 = vadd.f32 %v632, %v353
  %v634 = vadd.f32 %v633, %v355
  %v635 = vadd.f32 %v634, %v358
  %v636 = vadd.f32 %v635, %v360
  %v637 = vadd.f32 %v636, %v363
  %v638 = vadd.f32 %v637, %v365
  %v639 = vadd.f32 %v638, %v368
  %v640 = vadd.f32 %v639, %v370
  %v641 = vadd.f32 %v640, %v373
  %v642 = vadd.f32 %v641, %v375
  %v643 = vadd.f32 %v642, %v378
  %v644 = vadd.f32 %v643, %v380
  %v645 = vadd.f32 %v644, %v383
  %v646 = vadd.f32 %v645, %v385
  %v647 = vadd.f32 %v646, %v388
  %v648 = vadd.f32 %v647, %v390
  %v649 = vadd.f32 %v648, %v393
  %v650 = vadd.f32 %v649, %v395
  %v651 = vadd.f32 %v650, %v398
  %v652 = vadd.f32 %v651, %v400
  %v653 = vadd.f32 %v652, %v403
  %v654 = vadd.f32 %v653, %v405
  %v655 = vadd.f32 %v654, %v408
  %v656 = vadd.f32 %v655, %v410
  %v657 = vadd.f32 %v656, %v413
  %v658 = vadd.f32 %v657, %v415
  %v659 = vadd.f32 %v658, %v418
  %v660 = vadd.f32 %v659, %v420
  %v661 = vadd.f32 %v660, %v423
  %v662 = vadd.f32 %v661, %v425
  %v663 = vadd.f32 %v662, %v428
  %v664 = vadd.f32 %v663, %v430
  %v665 = vadd.f32 %v664, %v433
  %v666 = vadd.f32 %v665, %v435
  %v667 = vadd.f32 %v666, %v438
  %v668 = vadd.f32 %v667, %v440
  %v669 = vadd.f32 %v668, %v443
  %v670 = vadd.f32 %v669, %v445
  %v671 = vadd.f32 %v670, %v448
  %v672 = vadd.f32 %v671, %v450
  %v673 = vadd.f32 %v672, %v453
  %v674 = vadd.f32 %v673, %v455
  %v675 = vadd.f32 %v674, %v458
  %v676 = vadd.f32 %v675, %v460
  %v677 = vadd.f32 %v676, %v463
  %v678 = vadd.f32 %v677, %v465
  %v679 = vadd.f32 %v678, %v468
  %v680 = vadd.f32 %v679, %v470
  %v681 = vadd.f32 %v680, %v473
  %v682 = vadd.f32 %v681, %v475
  %v683 = vadd.f32 %v682, %v478
  %v684 = vadd.f32 %v683, %v480
  %v685 = vadd.f32 %v684, %v483
  %v686 = vadd.f32 %v685, %v485
  %v687 = vadd.f32 %v686, %v488
  %v688 = vadd.f32 %v687, %v490
  %v689 = vadd.f32 %v688, %v493
  %v690 = vadd.f32 %v689, %v495
  %v691 = vadd.f32 %v690, %v498
  %v692 = vadd.f32 %v691, %v500
  %v693 = vrot.slane %v692, 4
  %v694 = vadd.f32 %v692, %v693
  %v695 = vrot.slane %v694, 2
  %v696 = vadd.f32 %v694, %v695
  %v697 = vrot.slane %v696, 1
  %v698 = vadd.f32 %v696, %v697
  %v699 = vmul.f32 %v343, %v343
  %v700 = vmul.f32 %v345, %v345
  %v701 = vmul.f32 %v348, %v348
  %v702 = vmul.f32 %v350, %v350
  %v703 = vmul.f32 %v353, %v353
  %v704 = vmul.f32 %v355, %v355
  %v705 = vmul.f32 %v358, %v358
  %v706 = vmul.f32 %v360, %v360
  %v707 = vmul.f32 %v363, %v363
  %v708 = vmul.f32 %v365, %v365
  %v709 = vmul.f32 %v368, %v368
  %v710 = vmul.f32 %v370, %v370
  %v711 = vmul.f32 %v373, %v373
  %v712 = vmul.f32 %v375, %v375
  %v713 = vmul.f32 %v378, %v378
  %v714 = vmul.f32 %v380, %v380
  %v715 = vmul.f32 %v383, %v383
  %v716 = vmul.f32 %v385, %v385
  %v717 = vmul.f32 %v388, %v388
  %v718 = vmul.f32 %v390, %v390
  %v719 = vmul.f32 %v393, %v393
  %v720 = vmul.f32 %v395, %v395
  %v721 = vmul.f32 %v398, %v398
  %v722 = vmul.f32 %v400, %v400
  %v723 = vmul.f32 %v403, %v403
  %v724 = vmul.f32 %v405, %v405
  %v725 = vmul.f32 %v408, %v408
  %v726 = vmul.f32 %v410, %v410
  %v727 = vmul.f32 %v413, %v413
  %v728 = vmul.f32 %v415, %v415
  %v729 = vmul.f32 %v418, %v418
  %v730 = vmul.f32 %v420, %v420
  %v731 = vmul.f32 %v423, %v423
  %v732 = vmul.f32 %v425, %v425
  %v733 = vmul.f32 %v428, %v428
  %v734 = vmul.f32 %v430, %v430
  %v735 = vmul.f32 %v433, %v433
  %v736 = vmul.f32 %v435, %v435
  %v737 = vmul.f32 %v438, %v438
  %v738 = vmul.f32 %v440, %v440
  %v739 = vmul.f32 %v443, %v443
  %v740 = vmul.f32 %v445, %v445
  %v741 = vmul.f32 %v448, %v448
  %v742 = vmul.f32 %v450, %v450
  %v743 = vmul.f32 %v453, %v453
  %v744 = vmul.f32 %v455, %v455
  %v745 = vmul.f32 %v458, %v458
  %v746 = vmul.f32 %v460, %v460
  %v747 = vmul.f32 %v463, %v463
  %v748 = vmul.f32 %v465, %v465
  %v749 = vmul.f32 %v468, %v468
  %v750 = vmul.f32 %v470, %v470
  %v751 = vmul.f32 %v473, %v473
  %v752 = vmul.f32 %v475, %v475
  %v753 = vmul.f32 %v478, %v478
  %v754 = vmul.f32 %v480, %v480
  %v755 = vmul.f32 %v483, %v483
  %v756 = vmul.f32 %v485, %v485
  %v757 = vmul.f32 %v488, %v488
  %v758 = vmul.f32 %v490, %v490
  %v759 = vmul.f32 %v493, %v493
  %v760 = vmul.f32 %v495, %v495
  %v761 = vmul.f32 %v498, %v498
  %v762 = vmul.f32 %v500, %v500
  %v763 = vadd.f32 %v699, %v700
  %v764 = vadd.f32 %v763, %v701
  %v765 = vadd.f32 %v764, %v702
  %v766 = vadd.f32 %v765, %v703
  %v767 = vadd.f32 %v766, %v704
  %v768 = vadd.f32 %v767, %v705
  %v769 = vadd.f32 %v768, %v706
  %v770 = vadd.f32 %v769, %v707
  %v771 = vadd.f32 %v770, %v708
  %v772 = vadd.f32 %v771, %v709
  %v773 = vadd.f32 %v772, %v710
  %v774 = vadd.f32 %v773, %v711
  %v775 = vadd.f32 %v774, %v712
  %v776 = vadd.f32 %v775, %v713
  %v777 = vadd.f32 %v776, %v714
  %v778 = vadd.f32 %v777, %v715
  %v779 = vadd.f32 %v778, %v716
  %v780 = vadd.f32 %v779, %v717
  %v781 = vadd.f32 %v780, %v718
  %v782 = vadd.f32 %v781, %v719
  %v783 = vadd.f32 %v782, %v720
  %v784 = vadd.f32 %v783, %v721
  %v785 = vadd.f32 %v784, %v722
  %v786 = vadd.f32 %v785, %v723
  %v787 = vadd.f32 %v786, %v724
  %v788 = vadd.f32 %v787, %v725
  %v789 = vadd.f32 %v788, %v726
  %v790 = vadd.f32 %v789, %v727
  %v791 = vadd.f32 %v790, %v728
  %v792 = vadd.f32 %v791, %v729
  %v793 = vadd.f32 %v792, %v730
  %v794 = vadd.f32 %v793, %v731
  %v795 = vadd.f32 %v794, %v732
  %v796 = vadd.f32 %v795, %v733
  %v797 = vadd.f32 %v796, %v734
  %v798 = vadd.f32 %v797, %v735
  %v799 = vadd.f32 %v798, %v736
  %v800 = vadd.f32 %v799, %v737
  %v801 = vadd.f32 %v800, %v738
  %v802 = vadd.f32 %v801, %v739
  %v803 = vadd.f32 %v802, %v740
  %v804 = vadd.f32 %v803, %v741
  %v805 = vadd.f32 %v804, %v742
  %v806 = vadd.f32 %v805, %v743
  %v807 = vadd.f32 %v806, %v744
  %v808 = vadd.f32 %v807, %v745
  %v809 = vadd.f32 %v808, %v746
  %v810 = vadd.f32 %v809, %v747
  %v811 = vadd.f32 %v810, %v748
  %v812 = vadd.f32 %v811, %v749
  %v813 = vadd.f32 %v812, %v750
  %v814 = vadd.f32 %v813, %v751
  %v815 = vadd.f32 %v814, %v752
  %v816 = vadd.f32 %v815, %v753
  %v817 = vadd.f32 %v816, %v754
  %v818 = vadd.f32 %v817, %v755
  %v819 = vadd.f32 %v818, %v756
  %v820 = vadd.f32 %v819, %v757
  %v821 = vadd.f32 %v820, %v758
  %v822 = vadd.f32 %v821, %v759
  %v823 = vadd.f32 %v822, %v760
  %v824 = vadd.f32 %v823, %v761
  %v825 = vadd.f32 %v824, %v762
  %v826 = vrot.slane %v825, 4
  %v827 = vadd.f32 %v825, %v826
  %v828 = vrot.slane %v827, 2
  %v829 = vadd.f32 %v827, %v828
  %v830 = vrot.slane %v829, 1
  %v831 = vadd.f32 %v829, %v830
  %vm832 = vcmask 1040384
  %v833 = vsel %vm832, %v698, %v831
  %834 = vst [vmem:[%s3] sm:$0x3] %v833
  // Predicated region
  $region10: #{bottleneck_forward.6} parent=0 // pred_check
    _
  $region11: #{bottleneck_forward.6} parent=0 // pred_check_branch
    %836 = sbr.rel (0) target = $region13
  $region12: #{bottleneck_forward.6} parent=0 // pred_region
    _
  $region13: #{bottleneck_forward.6} parent=0 // pred_fallthru
    _
  // Predicated region
  $region14: #{bottleneck_forward.6} parent=0 // pred_check
    _
  $region15: #{bottleneck_forward.6} parent=0 // pred_check_branch
    %838 = sbr.rel (0) target = $region17
  $region16: #{bottleneck_forward.6} parent=0 // pred_region
    _
  $region17: #{bottleneck_forward.6} parent=0 // pred_fallthru
    _
  // Predicated region
  $region18: #{bottleneck_forward.6} parent=0 // pred_check
    _
  $region19: #{bottleneck_forward.6} parent=0 // pred_check_branch
    %840 = sbr.rel (0) target = $region21
  $region20: #{bottleneck_forward.6} parent=0 // pred_region
    _
  $region21: #{bottleneck_forward.6} parent=0 // pred_fallthru
    _
  // Predicated region
  $region22: #{bottleneck_forward.6} parent=0 // pred_check
    _
  $region23: #{bottleneck_forward.6} parent=0 // pred_check_branch
    %842 = sbr.rel (0) target = $region25
  $region24: #{bottleneck_forward.6} parent=0 // pred_region
    _
  $region25: #{bottleneck_forward.6} parent=0 // pred_fallthru
    _

// kernel: bottleneck_forward.9
$region0: #{bottleneck_forward.9}
  #allocation0 [shape = 'u32[]', space=smem, size = 0x4, offset = 0x4, fixed_abs, tag = 'smem constant byte address 0x4 - core index']
  #allocation1 [shape = 'u32[72,128]{1,0:T(1,128)}', space=vmem, size = 0x9000, scoped, tag = 'internal scratch']
  %s0 = inlined_call_operand.vmem [shape: bf16[128,128], index: 0, kind: input, shape index: {}]
  %s1 = inlined_call_operand.vmem [shape: f32[1,128], index: 1, kind: input, shape index: {}]
  %s2 = inlined_call_operand.vmem [shape: f32[1,128], index: 2, kind: input, shape index: {}]
  %s3 = inlined_call_operand.vmem [shape: bf16[128,128], index: 3, kind: input, shape index: {}]
  %s4 = inlined_call_operand.vmem [shape: f32[128,128], index: 4, kind: output, shape index: {0}]
  %s5 = inlined_call_operand.vmem [shape: f32[1,2,128], index: 5, kind: output, shape index: {1}]
  %6 = xla_tuple %s4, %s5
  %s7 = sld [smem:[#allocation0]]
  $region34: #{bottleneck_forward.9} parent=0
    _
  %s9 = ssub.s32 1, %s7
  %s10 = scalar_select 0, %s9, %s7
  // Predicated region
  $region2: #{bottleneck_forward.9} parent=0 // pred_check
    _
  $region3: #{bottleneck_forward.9} parent=0 // pred_check_branch
    %12 = sbr.rel (0) target = $region5
  $region4: #{bottleneck_forward.9} parent=0 // pred_region
    _
  $region5: #{bottleneck_forward.9} parent=0 // pred_fallthru
    _
  // Predicated region
  $region6: #{bottleneck_forward.9} parent=0 // pred_check
    _
  $region7: #{bottleneck_forward.9} parent=0 // pred_check_branch
    %14 = sbr.rel (0) target = $region9
  $region8: #{bottleneck_forward.9} parent=0 // pred_region
    _
  $region9: #{bottleneck_forward.9} parent=0 // pred_fallthru
    _
  // Predicated region
  $region10: #{bottleneck_forward.9} parent=0 // pred_check
    _
  $region11: #{bottleneck_forward.9} parent=0 // pred_check_branch
    %16 = sbr.rel (0) target = $region13
  $region12: #{bottleneck_forward.9} parent=0 // pred_region
    _
  $region13: #{bottleneck_forward.9} parent=0 // pred_fallthru
    _
  // Predicated region
  $region14: #{bottleneck_forward.9} parent=0 // pred_check
    _
  $region15: #{bottleneck_forward.9} parent=0 // pred_check_branch
    %18 = sbr.rel (0) target = $region17
  $region16: #{bottleneck_forward.9} parent=0 // pred_region
    _
  $region17: #{bottleneck_forward.9} parent=0 // pred_fallthru
    _
  %v19 = vld [vmem:[%s0] sm:$0xf]
  %v20 = vld [vmem:[%s0 + $0x4] sm:$0xf]
  %v21 = vld [vmem:[%s0 + $0x8] sm:$0xf]
  %v22 = vld [vmem:[%s0 + $0xc] sm:$0xf]
  %v23 = vld [vmem:[%s0 + $0x10] sm:$0xf]
  %v24 = vld [vmem:[%s0 + $0x14] sm:$0xf]
  %v25 = vld [vmem:[%s0 + $0x18] sm:$0xf]
  %v26 = vld [vmem:[%s0 + $0x1c] sm:$0xf]
  %v27 = vld [vmem:[%s0 + $0x20] sm:$0xf]
  %v28 = vld [vmem:[%s0 + $0x24] sm:$0xf]
  %v29 = vld [vmem:[%s0 + $0x28] sm:$0xf]
  %v30 = vld [vmem:[%s0 + $0x2c] sm:$0xf]
  %v31 = vld [vmem:[%s0 + $0x30] sm:$0xf]
  %v32 = vld [vmem:[%s0 + $0x34] sm:$0xf]
  %v33 = vld [vmem:[%s0 + $0x38] sm:$0xf]
  %v34 = vld [vmem:[%s0 + $0x3c] sm:$0xf]
  %v35 = vunpack.c.l.bf16 %v19
  %v36 = vunpack.c.l.bf16 %v20
  %v37 = vunpack.c.l.bf16 %v21
  %v38 = vunpack.c.l.bf16 %v22
  %v39 = vunpack.c.l.bf16 %v23
  %v40 = vunpack.c.l.bf16 %v24
  %v41 = vunpack.c.l.bf16 %v25
  %v42 = vunpack.c.l.bf16 %v26
  %v43 = vunpack.c.l.bf16 %v27
  %v44 = vunpack.c.l.bf16 %v28
  %v45 = vunpack.c.l.bf16 %v29
  %v46 = vunpack.c.l.bf16 %v30
  %v47 = vunpack.c.l.bf16 %v31
  %v48 = vunpack.c.l.bf16 %v32
  %v49 = vunpack.c.l.bf16 %v33
  %v50 = vunpack.c.l.bf16 %v34
  %v51 = vld [vmem:[%s1] sm:$0x1]
  %v53 = vperm.slane %v51, 0
  %v55 = vmul.f32 %v35, %v53
  %v56 = vmul.f32 %v36, %v53
  %v57 = vmul.f32 %v37, %v53
  %v58 = vmul.f32 %v38, %v53
  %v59 = vmul.f32 %v39, %v53
  %v60 = vmul.f32 %v40, %v53
  %v61 = vmul.f32 %v41, %v53
  %v62 = vmul.f32 %v42, %v53
  %v63 = vmul.f32 %v43, %v53
  %v64 = vmul.f32 %v44, %v53
  %v65 = vmul.f32 %v45, %v53
  %v66 = vmul.f32 %v46, %v53
  %v67 = vmul.f32 %v47, %v53
  %v68 = vmul.f32 %v48, %v53
  %v69 = vmul.f32 %v49, %v53
  %v70 = vmul.f32 %v50, %v53
  %v71 = vld [vmem:[%s2] sm:$0x1]
  %v73 = vperm.slane %v71, 0
  %v75 = vadd.f32 %v55, %v73
  %v76 = vadd.f32 %v56, %v73
  %v77 = vadd.f32 %v57, %v73
  %v78 = vadd.f32 %v58, %v73
  %v79 = vadd.f32 %v59, %v73
  %v80 = vadd.f32 %v60, %v73
  %v81 = vadd.f32 %v61, %v73
  %v82 = vadd.f32 %v62, %v73
  %v83 = vadd.f32 %v63, %v73
  %v84 = vadd.f32 %v64, %v73
  %v85 = vadd.f32 %v65, %v73
  %v86 = vadd.f32 %v66, %v73
  %v87 = vadd.f32 %v67, %v73
  %v88 = vadd.f32 %v68, %v73
  %v89 = vadd.f32 %v69, %v73
  %v90 = vadd.f32 %v70, %v73
  %v91 = vmax.f32 %v75, 0.0
  %v92 = vmax.f32 %v76, 0.0
  %v93 = vmax.f32 %v77, 0.0
  %v94 = vmax.f32 %v78, 0.0
  %v95 = vmax.f32 %v79, 0.0
  %v96 = vmax.f32 %v80, 0.0
  %v97 = vmax.f32 %v81, 0.0
  %v98 = vmax.f32 %v82, 0.0
  %v99 = vmax.f32 %v83, 0.0
  %v100 = vmax.f32 %v84, 0.0
  %v101 = vmax.f32 %v85, 0.0
  %v102 = vmax.f32 %v86, 0.0
  %v103 = vmax.f32 %v87, 0.0
  %v104 = vmax.f32 %v88, 0.0
  %v105 = vmax.f32 %v89, 0.0
  %v106 = vmax.f32 %v90, 0.0
  %v107 = vpack.c.bf16 %v92, %v91
  %v108 = vpack.c.bf16 %v94, %v93
  %v109 = vpack.c.bf16 %v96, %v95
  %v110 = vpack.c.bf16 %v98, %v97
  %v111 = vpack.c.bf16 %v100, %v99
  %v112 = vpack.c.bf16 %v102, %v101
  %v113 = vpack.c.bf16 %v104, %v103
  %v114 = vpack.c.bf16 %v106, %v105
  %v115 = vld [vmem:[%s3] sm:$0xf]
  %v116 = vld [vmem:[%s3 + $0x4] sm:$0xf]
  %v117 = vld [vmem:[%s3 + $0x8] sm:$0xf]
  %v118 = vld [vmem:[%s3 + $0xc] sm:$0xf]
  %v119 = vld [vmem:[%s3 + $0x10] sm:$0xf]
  %v120 = vld [vmem:[%s3 + $0x14] sm:$0xf]
  %v121 = vld [vmem:[%s3 + $0x18] sm:$0xf]
  %v122 = vld [vmem:[%s3 + $0x1c] sm:$0xf]
  %v123 = vld [vmem:[%s3 + $0x20] sm:$0xf]
  %v124 = vld [vmem:[%s3 + $0x24] sm:$0xf]
  %v125 = vld [vmem:[%s3 + $0x28] sm:$0xf]
  %v126 = vld [vmem:[%s3 + $0x2c] sm:$0xf]
  %v127 = vld [vmem:[%s3 + $0x30] sm:$0xf]
  %v128 = vld [vmem:[%s3 + $0x34] sm:$0xf]
  %v129 = vld [vmem:[%s3 + $0x38] sm:$0xf]
  %v130 = vld [vmem:[%s3 + $0x3c] sm:$0xf]
  %v147 = vunpack.c.l.b16 %v115
  %v148 = vunpack.c.l.b16 %v116
  %v149 = vunpack.c.l.b16 %v117
  %v150 = vunpack.c.l.b16 %v118
  %v151 = vunpack.c.l.b16 %v119
  %v152 = vunpack.c.l.b16 %v120
  %v153 = vunpack.c.l.b16 %v121
  %v154 = vunpack.c.l.b16 %v122
  %v155 = vunpack.c.l.b16 %v123
  %v156 = vunpack.c.l.b16 %v124
  %v157 = vunpack.c.l.b16 %v125
  %v158 = vunpack.c.l.b16 %v126
  %v159 = vunpack.c.l.b16 %v127
  %v160 = vunpack.c.l.b16 %v128
  %v161 = vunpack.c.l.b16 %v129
  %v162 = vunpack.c.l.b16 %v130
  %v163 = vpack.c.b16 %v148, %v147
  %v164 = vpack.c.b16 %v150, %v149
  %v165 = vpack.c.b16 %v152, %v151
  %v166 = vpack.c.b16 %v154, %v153
  %v167 = vpack.c.b16 %v156, %v155
  %v168 = vpack.c.b16 %v158, %v157
  %v169 = vpack.c.b16 %v160, %v159
  %v170 = vpack.c.b16 %v162, %v161
  %179 = vmatpush.bf16.msra.mxu0 %v170
  %180 = vmatpush.bf16.msra.mxu0 %v169
  %181 = vmatpush.bf16.msra.mxu0 %v168
  %182 = vmatpush.bf16.msra.mxu0 %v167
  %183 = vmatpush.bf16.msra.mxu0 %v166
  %184 = vmatpush.bf16.msra.mxu0 %v165
  %185 = vmatpush.bf16.msra.mxu0 %v164
  %186 = vmatpush.bf16.msra.mxu0 %v163
  %187 = vmatmul.bf16.gmra.mxu0 %v107
  %v188 = vpop.f32.mrf.mxu0
  %v189 = vadd.f32 0.0, %v188
  %v190 = vpop.f32.mrf.mxu0
  %v191 = vadd.f32 0.0, %v190
  %192 = vmatmul.bf16.gmra.mxu0 %v108
  %v193 = vpop.f32.mrf.mxu0
  %v194 = vadd.f32 0.0, %v193
  %v195 = vpop.f32.mrf.mxu0
  %v196 = vadd.f32 0.0, %v195
  %197 = vmatmul.bf16.gmra.mxu0 %v109
  %v198 = vpop.f32.mrf.mxu0
  %v199 = vadd.f32 0.0, %v198
  %v200 = vpop.f32.mrf.mxu0
  %v201 = vadd.f32 0.0, %v200
  %202 = vmatmul.bf16.gmra.mxu0 %v110
  %v203 = vpop.f32.mrf.mxu0
  %v204 = vadd.f32 0.0, %v203
  %v205 = vpop.f32.mrf.mxu0
  %v206 = vadd.f32 0.0, %v205
  %207 = vmatmul.bf16.gmra.mxu0 %v111
  %v208 = vpop.f32.mrf.mxu0
  %v209 = vadd.f32 0.0, %v208
  %v210 = vpop.f32.mrf.mxu0
  %v211 = vadd.f32 0.0, %v210
  %212 = vmatmul.bf16.gmra.mxu0 %v112
  %v213 = vpop.f32.mrf.mxu0
  %v214 = vadd.f32 0.0, %v213
  %v215 = vpop.f32.mrf.mxu0
  %v216 = vadd.f32 0.0, %v215
  %217 = vmatmul.bf16.gmra.mxu0 %v113
  %v218 = vpop.f32.mrf.mxu0
  %v219 = vadd.f32 0.0, %v218
  %v220 = vpop.f32.mrf.mxu0
  %v221 = vadd.f32 0.0, %v220
  %222 = vmatmul.bf16.gmra.mxu0 %v114
  %v223 = vpop.f32.mrf.mxu0
  %v224 = vadd.f32 0.0, %v223
  %v225 = vpop.f32.mrf.mxu0
  %v226 = vadd.f32 0.0, %v225
  %227 = vdwg.mxu0
  %228 = vst [vmem:[%s4] sm:$0xff] %v189
  %229 = vst [vmem:[%s4 + $0x8] sm:$0xff] %v191
  %230 = vst [vmem:[%s4 + $0x10] sm:$0xff] %v194
  %231 = vst [vmem:[%s4 + $0x18] sm:$0xff] %v196
  %232 = vst [vmem:[%s4 + $0x20] sm:$0xff] %v199
  %233 = vst [vmem:[%s4 + $0x28] sm:$0xff] %v201
  %234 = vst [vmem:[%s4 + $0x30] sm:$0xff] %v204
  %235 = vst [vmem:[%s4 + $0x38] sm:$0xff] %v206
  %236 = vst [vmem:[%s4 + $0x40] sm:$0xff] %v209
  %237 = vst [vmem:[%s4 + $0x48] sm:$0xff] %v211
  %238 = vst [vmem:[%s4 + $0x50] sm:$0xff] %v214
  %239 = vst [vmem:[%s4 + $0x58] sm:$0xff] %v216
  %240 = vst [vmem:[%s4 + $0x60] sm:$0xff] %v219
  %241 = vst [vmem:[%s4 + $0x68] sm:$0xff] %v221
  %242 = vst [vmem:[%s4 + $0x70] sm:$0xff] %v224
  %243 = vst [vmem:[%s4 + $0x78] sm:$0xff] %v226
  %v244 = vadd.f32 %v189, %v191
  %v245 = vadd.f32 %v244, %v194
  %v246 = vadd.f32 %v245, %v196
  %v247 = vadd.f32 %v246, %v199
  %v248 = vadd.f32 %v247, %v201
  %v249 = vadd.f32 %v248, %v204
  %v250 = vadd.f32 %v249, %v206
  %v251 = vadd.f32 %v250, %v209
  %v252 = vadd.f32 %v251, %v211
  %v253 = vadd.f32 %v252, %v214
  %v254 = vadd.f32 %v253, %v216
  %v255 = vadd.f32 %v254, %v219
  %v256 = vadd.f32 %v255, %v221
  %v257 = vadd.f32 %v256, %v224
  %v258 = vadd.f32 %v257, %v226
  %v259 = vrot.slane %v258, 4
  %v260 = vadd.f32 %v258, %v259
  %v261 = vrot.slane %v260, 2
  %v262 = vadd.f32 %v260, %v261
  %v263 = vrot.slane %v262, 1
  %v264 = vadd.f32 %v262, %v263
  %v265 = vmul.f32 %v189, %v189
  %v266 = vmul.f32 %v191, %v191
  %v267 = vmul.f32 %v194, %v194
  %v268 = vmul.f32 %v196, %v196
  %v269 = vmul.f32 %v199, %v199
  %v270 = vmul.f32 %v201, %v201
  %v271 = vmul.f32 %v204, %v204
  %v272 = vmul.f32 %v206, %v206
  %v273 = vmul.f32 %v209, %v209
  %v274 = vmul.f32 %v211, %v211
  %v275 = vmul.f32 %v214, %v214
  %v276 = vmul.f32 %v216, %v216
  %v277 = vmul.f32 %v219, %v219
  %v278 = vmul.f32 %v221, %v221
  %v279 = vmul.f32 %v224, %v224
  %v280 = vmul.f32 %v226, %v226
  %v281 = vadd.f32 %v265, %v266
  %v282 = vadd.f32 %v281, %v267
  %v283 = vadd.f32 %v282, %v268
  %v284 = vadd.f32 %v283, %v269
  %v285 = vadd.f32 %v284, %v270
  %v286 = vadd.f32 %v285, %v271
  %v287 = vadd.f32 %v286, %v272
  %v288 = vadd.f32 %v287, %v273
  %v289 = vadd.f32 %v288, %v274
  %v290 = vadd.f32 %v289, %v275
  %v291 = vadd.f32 %v290, %v276
  %v292 = vadd.f32 %v291, %v277
  %v293 = vadd.f32 %v292, %v278
  %v294 = vadd.f32 %v293, %v279
  %v295 = vadd.f32 %v294, %v280
  %v296 = vrot.slane %v295, 4
  %v297 = vadd.f32 %v295, %v296
  %v298 = vrot.slane %v297, 2
  %v299 = vadd.f32 %v297, %v298
  %v300 = vrot.slane %v299, 1
  %v301 = vadd.f32 %v299, %v300
  %vm302 = vcmask 1040384
  %v303 = vsel %vm302, %v264, %v301
  %304 = vst [vmem:[%s5] sm:$0x3] %v303
  // Predicated region
  $region18: #{bottleneck_forward.9} parent=0 // pred_check
    _
  $region19: #{bottleneck_forward.9} parent=0 // pred_check_branch
    %306 = sbr.rel (0) target = $region21
  $region20: #{bottleneck_forward.9} parent=0 // pred_region
    _
  $region21: #{bottleneck_forward.9} parent=0 // pred_fallthru
    _
  // Predicated region
  $region22: #{bottleneck_forward.9} parent=0 // pred_check
    _
  $region23: #{bottleneck_forward.9} parent=0 // pred_check_branch
    %308 = sbr.rel (0) target = $region25
  $region24: #{bottleneck_forward.9} parent=0 // pred_region
    _
  $region25: #{bottleneck_forward.9} parent=0 // pred_fallthru
    _
  // Predicated region
  $region26: #{bottleneck_forward.9} parent=0 // pred_check
    _
  $region27: #{bottleneck_forward.9} parent=0 // pred_check_branch
    %310 = sbr.rel (0) target = $region29
  $region28: #{bottleneck_forward.9} parent=0 // pred_region
    _
  $region29: #{bottleneck_forward.9} parent=0 // pred_fallthru
    _
  // Predicated region
  $region30: #{bottleneck_forward.9} parent=0 // pred_check
    _
  $region31: #{bottleneck_forward.9} parent=0 // pred_check_branch
    %312 = sbr.rel (0) target = $region33
  $region32: #{bottleneck_forward.9} parent=0 // pred_region
    _
  $region33: #{bottleneck_forward.9} parent=0 // pred_fallthru
    _

// kernel: bottleneck_forward.8
$region0: #{bottleneck_forward.8}
  #allocation0 [shape = 'u32[]', space=smem, size = 0x4, offset = 0x4, fixed_abs, tag = 'smem constant byte address 0x4 - core index']
  #allocation1 [shape = 'u32[72,128]{1,0:T(1,128)}', space=vmem, size = 0x9000, scoped, tag = 'internal scratch']
  %s0 = inlined_call_operand.vmem [shape: bf16[2,6,72,128], index: 0, kind: input, shape index: {}]
  %s1 = inlined_call_operand.vmem [shape: bf16[9,128,128], index: 1, kind: input, shape index: {}]
  %s2 = inlined_call_operand.vmem [shape: bf16[2,64,128], index: 2, kind: output, shape index: {0}]
  %s3 = inlined_call_operand.vmem [shape: f32[2,2,128], index: 3, kind: output, shape index: {1}]
  %4 = xla_tuple %s2, %s3
  %s5 = sld [smem:[#allocation0]]
  $region49: #{bottleneck_forward.8} parent=0
    _
  %s7 = ssub.s32 1, %s5
  %s8 = scalar_select 0, %s7, %s5
  loop: start=0, step=1, limit=4
  $region2: #{bottleneck_forward.8} parent=0 // loop_pre_header
    _
  $region3: #{bottleneck_forward.8} parent=0 // loop_header
    %s10 = sphi 0, %s14
    %p11 = scmp.ge.s32.totalorder %s10, 4
    %s20 = sphi 0, %s22
    %s23 = sphi 0, %s20
    %s24 = sphi 0, %s23
    %s40 = sphi 0, %s24
    %s44 = sphi 0, %s44
    %s46 = sphi 0, %s44
    %s47 = sphi 0, %s46
    %s61 = sphi 0, %s47
    %s67 = sphi 0, %s69
    %s70 = sphi 0, %s67
    %s71 = sphi 0, %s70
    %s87 = sphi 0, %s71
    %s93 = sphi 0, %s95
    %s96 = sphi 0, %s93
    %s97 = sphi 0, %s96
    %s113 = sphi 0, %s97
  $region4: #{bottleneck_forward.8} parent=0 // loop_header_branch
    %13 = sbr.rel (%p11) target = $region8
  $region5: #{bottleneck_forward.8} parent=0 // loop_body
    %s15 = ssub.s32 %s10, 1
    %s16 = ssub.s32 %s10, 2
    %s17 = sadd.s32 %s10, 1
    %s18 = ssub.s32 %s10, %s17
    %p19 = scmp.eq.s32.totalorder %s18, 0
    %s21 = sadd.s32 %s20, 1
    %s22 = scalar_select %p19, %s20, %s21
    %p25 = pneg %p19
    %p26 = scmp.eq.s32.totalorder %s10, 1
    %p27 = por %p25, %p26
    %p28 = scmp.ne.s32.totalorder %s20, %s23
    %p29 = scmp.eq.s32.totalorder %s10, 0
    %p30 = por %p28, %p29
    %p31 = scmp.ne.s32.totalorder %s20, %s23
    %p32 = scmp.eq.s32.totalorder %s15, 1
    %p33 = por %p31, %p32
    %p34 = scmp.ne.s32.totalorder %s23, %s24
    %p35 = scmp.eq.s32.totalorder %s15, 0
    %p36 = por %p34, %p35
    %p37 = scmp.ne.s32.totalorder %s23, %s24
    %p38 = scmp.eq.s32.totalorder %s16, 1
    %p39 = por %p37, %p38
    %p41 = scmp.ne.s32.totalorder %s24, %s40
    %p42 = scmp.eq.s32.totalorder %s16, 0
    %p43 = por %p41, %p42
    %s45 = sadd.s32 %s44, 1
    %p48 = scmp.eq.s32.totalorder %s10, 1
    %p49 = scmp.ne.s32.totalorder %s44, %s46
    %p50 = scmp.eq.s32.totalorder %s10, 0
    %p51 = por %p49, %p50
    %p52 = scmp.ne.s32.totalorder %s44, %s46
    %p53 = scmp.eq.s32.totalorder %s15, 1
    %p54 = por %p52, %p53
    %p55 = scmp.ne.s32.totalorder %s46, %s47
    %p56 = scmp.eq.s32.totalorder %s15, 0
    %p57 = por %p55, %p56
    %p58 = scmp.ne.s32.totalorder %s46, %s47
    %p59 = scmp.eq.s32.totalorder %s16, 1
    %p60 = por %p58, %p59
    %p62 = scmp.ne.s32.totalorder %s47, %s61
    %p63 = scmp.eq.s32.totalorder %s16, 0
    %p64 = por %p62, %p63
    %s65 = ssub.s32 %s10, %s17
    %p66 = scmp.eq.s32.totalorder %s65, 0
    %s68 = sadd.s32 %s67, 1
    %s69 = scalar_select %p66, %s67, %s68
    %p72 = pneg %p66
    %p73 = scmp.eq.s32.totalorder %s10, 1
    %p74 = por %p72, %p73
    %p75 = scmp.ne.s32.totalorder %s67, %s70
    %p76 = scmp.eq.s32.totalorder %s10, 0
    %p77 = por %p75, %p76
    %p78 = scmp.ne.s32.totalorder %s67, %s70
    %p79 = scmp.eq.s32.totalorder %s15, 1
    %p80 = por %p78, %p79
    %p81 = scmp.ne.s32.totalorder %s70, %s71
    %p82 = scmp.eq.s32.totalorder %s15, 0
    %p83 = por %p81, %p82
    %p84 = scmp.ne.s32.totalorder %s70, %s71
    %p85 = scmp.eq.s32.totalorder %s16, 1
    %p86 = por %p84, %p85
    %p88 = scmp.ne.s32.totalorder %s71, %s87
    %p89 = scmp.eq.s32.totalorder %s16, 0
    %p90 = por %p88, %p89
    %s91 = ssub.s32 %s10, %s17
    %p92 = scmp.eq.s32.totalorder %s91, 0
    %s94 = sadd.s32 %s93, 1
    %s95 = scalar_select %p92, %s93, %s94
    %p98 = pneg %p92
    %p99 = scmp.eq.s32.totalorder %s10, 1
    %p100 = por %p98, %p99
    %p101 = scmp.ne.s32.totalorder %s93, %s96
    %p102 = scmp.eq.s32.totalorder %s10, 0
    %p103 = por %p101, %p102
    %p104 = scmp.ne.s32.totalorder %s93, %s96
    %p105 = scmp.eq.s32.totalorder %s15, 1
    %p106 = por %p104, %p105
    %p107 = scmp.ne.s32.totalorder %s96, %s97
    %p108 = scmp.eq.s32.totalorder %s15, 0
    %p109 = por %p107, %p108
    %p110 = scmp.ne.s32.totalorder %s96, %s97
    %p111 = scmp.eq.s32.totalorder %s16, 1
    %p112 = por %p110, %p111
    %p114 = scmp.ne.s32.totalorder %s97, %s113
    %p115 = scmp.eq.s32.totalorder %s16, 0
    %p116 = por %p114, %p115
    %p117 = scmp.le.s32.totalorder 1, %s10
    %p118 = scmp.lt.s32.totalorder %s10, 3
    %p119 = pnand %p117, %p118
    %p120 = pneg %p119
    // Predicated region
    $region9: #{bottleneck_forward.8} parent=5 // pred_check
      _
    $region10: #{bottleneck_forward.8} parent=5 // pred_check_branch
      %122 = sbr.rel (%p119) target = $region12
    $region11: #{bottleneck_forward.8} parent=5 // pred_region
      %s123 = ssub.s32 %s10, 1
      // Predicated region
      $region13: #{bottleneck_forward.8} parent=11 // pred_check
        %p124 = pneg %p57
      $region14: #{bottleneck_forward.8} parent=11 // pred_check_branch
        %126 = sbr.rel (%p124) target = $region16
      $region15: #{bottleneck_forward.8} parent=11 // pred_region
        _
      $region16: #{bottleneck_forward.8} parent=11 // pred_fallthru
        _
    $region12: #{bottleneck_forward.8} parent=5 // pred_fallthru
      _
    %p127 = scmp.lt.s32.totalorder %s10, 2
    // Predicated region
    $region17: #{bottleneck_forward.8} parent=5 // pred_check
      %p128 = pneg %p127
    $region18: #{bottleneck_forward.8} parent=5 // pred_check_branch
      %130 = sbr.rel (%p128) target = $region20
    $region19: #{bottleneck_forward.8} parent=5 // pred_region
      // Predicated region
      $region21: #{bottleneck_forward.8} parent=19 // pred_check
        %p131 = pneg %p30
      $region22: #{bottleneck_forward.8} parent=19 // pred_check_branch
        %133 = sbr.rel (%p131) target = $region24
      $region23: #{bottleneck_forward.8} parent=19 // pred_region
        %p134 = scmp.lt.s32.totalorder %s10, 1
        %s135 = scalar_select %p134, %s10, 1
        %s136 = smul.addr %s135, 54
        %s137 = smul.addr %s136, 4
        %s138 = scalar_lea.vmem %s0, %s137
      $region24: #{bottleneck_forward.8} parent=19 // pred_fallthru
        _
    $region20: #{bottleneck_forward.8} parent=5 // pred_fallthru
      _
    %p139 = scmp.le.s32.totalorder 1, %s10
    %p140 = scmp.lt.s32.totalorder %s10, 3
    %p141 = pnand %p139, %p140
    %p142 = pneg %p141
    // Predicated region
    $region25: #{bottleneck_forward.8} parent=5 // pred_check
      _
    $region26: #{bottleneck_forward.8} parent=5 // pred_check_branch
      %144 = sbr.rel (%p141) target = $region28
    $region27: #{bottleneck_forward.8} parent=5 // pred_region
      %s145 = ssub.s32 %s10, 1
      %p146 = scmp.lt.s32.totalorder %s15, 1
      %s147 = scalar_select %p146, %s15, 1
      %s148 = smul.addr %s147, 54
      %s149 = smul.addr %s148, 4
      %s150 = scalar_lea.vmem %s0, %s149
      %p151 = pneg %p36
      %p152 = pneg %p33
      %p153 = pneg %p57
      %p154 = pneg %p54
      %p155 = pneg %p83
      %p156 = pneg %p80
      %p157 = scmp.lt.s32.totalorder %s15, 1
      %s158 = scalar_select %p157, %s15, 1
      %s159 = smul.addr %s158, 8
      %s160 = smul.addr %s159, 4
      %s161 = scalar_lea.vmem %s2, %s160
      %p162 = pneg %p109
      %p163 = pneg %p106
      %p164 = scmp.lt.s32.totalorder %s15, 1
      %s165 = scalar_select %p164, %s15, 1
      %s166 = smul.addr %s165, 2
      %s167 = scalar_lea.vmem %s3, %s166
      %p168 = scmp.lt.s32.totalorder %s15, 1
      %s169 = scalar_select %p168, %s15, 1
      %s170 = smul.addr %s169, 54
      %s171 = smul.addr %s170, 4
      %s172 = scalar_lea.vmem %s0, %s171
      %p173 = scmp.lt.s32.totalorder %s15, 1
      %s174 = scalar_select %p173, %s15, 1
      %s175 = smul.addr %s174, 8
      %s176 = smul.addr %s175, 4
      %s177 = scalar_lea.vmem %s2, %s176
      %p178 = scmp.lt.s32.totalorder %s15, 1
      %s179 = scalar_select %p178, %s15, 1
      %s180 = smul.addr %s179, 2
      %s181 = scalar_lea.vmem %s3, %s180
      %v182 = vld [vmem:[%s172] sm:$0xf]
      %v183 = vld [vmem:[%s172 + $0x4] sm:$0xf]
      %v184 = vld [vmem:[%s172 + $0x8] sm:$0xf]
      %v185 = vld [vmem:[%s172 + $0xc] sm:$0xf]
      %v186 = vld [vmem:[%s172 + $0x10] sm:$0xf]
      %v187 = vld [vmem:[%s172 + $0x14] sm:$0xf]
      %v188 = vld [vmem:[%s172 + $0x18] sm:$0xf]
      %v189 = vld [vmem:[%s172 + $0x1c] sm:$0xf]
      %v190 = vld [vmem:[%s1] sm:$0xf]
      %v191 = vld [vmem:[%s1 + $0x4] sm:$0xf]
      %v192 = vld [vmem:[%s1 + $0x8] sm:$0xf]
      %v193 = vld [vmem:[%s1 + $0xc] sm:$0xf]
      %v194 = vld [vmem:[%s1 + $0x10] sm:$0xf]
      %v195 = vld [vmem:[%s1 + $0x14] sm:$0xf]
      %v196 = vld [vmem:[%s1 + $0x18] sm:$0xf]
      %v197 = vld [vmem:[%s1 + $0x1c] sm:$0xf]
      %v198 = vld [vmem:[%s1 + $0x20] sm:$0xf]
      %v199 = vld [vmem:[%s1 + $0x24] sm:$0xf]
      %v200 = vld [vmem:[%s1 + $0x28] sm:$0xf]
      %v201 = vld [vmem:[%s1 + $0x2c] sm:$0xf]
      %v202 = vld [vmem:[%s1 + $0x30] sm:$0xf]
      %v203 = vld [vmem:[%s1 + $0x34] sm:$0xf]
      %v204 = vld [vmem:[%s1 + $0x38] sm:$0xf]
      %v205 = vld [vmem:[%s1 + $0x3c] sm:$0xf]
      %s206 = scalar_lea.vmem %s172, 72
      %v207 = vld [vmem:[%s206] sm:$0xf]
      %v208 = vld [vmem:[%s206 + $0x4] sm:$0xf]
      %v209 = vld [vmem:[%s206 + $0x8] sm:$0xf]
      %v210 = vld [vmem:[%s206 + $0xc] sm:$0xf]
      %v211 = vld [vmem:[%s206 + $0x10] sm:$0xf]
      %v212 = vld [vmem:[%s206 + $0x14] sm:$0xf]
      %v213 = vld [vmem:[%s206 + $0x18] sm:$0xf]
      %v214 = vld [vmem:[%s206 + $0x1c] sm:$0xf]
      %s215 = scalar_lea.vmem %s1, 64
      %v216 = vld [vmem:[%s215] sm:$0xf]
      %v217 = vld [vmem:[%s215 + $0x4] sm:$0xf]
      %v218 = vld [vmem:[%s215 + $0x8] sm:$0xf]
      %v219 = vld [vmem:[%s215 + $0xc] sm:$0xf]
      %v220 = vld [vmem:[%s215 + $0x10] sm:$0xf]
      %v221 = vld [vmem:[%s215 + $0x14] sm:$0xf]
      %v222 = vld [vmem:[%s215 + $0x18] sm:$0xf]
      %v223 = vld [vmem:[%s215 + $0x1c] sm:$0xf]
      %v224 = vld [vmem:[%s215 + $0x20] sm:$0xf]
      %v225 = vld [vmem:[%s215 + $0x24] sm:$0xf]
      %v226 = vld [vmem:[%s215 + $0x28] sm:$0xf]
      %v227 = vld [vmem:[%s215 + $0x2c] sm:$0xf]
      %v228 = vld [vmem:[%s215 + $0x30] sm:$0xf]
      %v229 = vld [vmem:[%s215 + $0x34] sm:$0xf]
      %v230 = vld [vmem:[%s215 + $0x38] sm:$0xf]
      %v231 = vld [vmem:[%s215 + $0x3c] sm:$0xf]
      %v240 = vunpack.c.l.b16 %v207
      %v241 = vunpack.c.l.b16 %v208
      %v242 = vunpack.c.l.b16 %v209
      %v243 = vunpack.c.l.b16 %v210
      %v244 = vunpack.c.l.b16 %v211
      %v245 = vunpack.c.l.b16 %v212
      %v246 = vunpack.c.l.b16 %v213
      %v247 = vunpack.c.l.b16 %v214
      %v248 = vpack.c.b16 %v241, %v240
      %v249 = vpack.c.b16 %v243, %v242
      %v250 = vpack.c.b16 %v245, %v244
      %v251 = vpack.c.b16 %v247, %v246
      %v272 = vunpack.c.l.b16 %v216
      %v273 = vunpack.c.l.b16 %v217
      %v274 = vunpack.c.l.b16 %v218
      %v275 = vunpack.c.l.b16 %v219
      %v276 = vunpack.c.l.b16 %v220
      %v277 = vunpack.c.l.b16 %v221
      %v278 = vunpack.c.l.b16 %v222
      %v279 = vunpack.c.l.b16 %v223
      %v280 = vunpack.c.l.b16 %v224
      %v281 = vunpack.c.l.b16 %v225
      %v282 = vunpack.c.l.b16 %v226
      %v283 = vunpack.c.l.b16 %v227
      %v284 = vunpack.c.l.b16 %v228
      %v285 = vunpack.c.l.b16 %v229
      %v286 = vunpack.c.l.b16 %v230
      %v287 = vunpack.c.l.b16 %v231
      %v288 = vpack.c.b16 %v273, %v272
      %v289 = vpack.c.b16 %v275, %v274
      %v290 = vpack.c.b16 %v277, %v276
      %v291 = vpack.c.b16 %v279, %v278
      %v292 = vpack.c.b16 %v281, %v280
      %v293 = vpack.c.b16 %v283, %v282
      %v294 = vpack.c.b16 %v285, %v284
      %v295 = vpack.c.b16 %v287, %v286
      %304 = vmatpush.bf16.msra.mxu0 %v295
      %305 = vmatpush.bf16.msra.mxu0 %v294
      %306 = vmatpush.bf16.msra.mxu0 %v293
      %307 = vmatpush.bf16.msra.mxu0 %v292
      %308 = vmatpush.bf16.msra.mxu0 %v291
      %309 = vmatpush.bf16.msra.mxu0 %v290
      %310 = vmatpush.bf16.msra.mxu0 %v289
      %311 = vmatpush.bf16.msra.mxu0 %v288
      %312 = vmatmul.bf16.gmra.mxu0 %v248
      %v313 = vpop.f32.mrf.mxu0
      %v314 = vadd.f32 0.0, %v313
      %v315 = vpop.f32.mrf.mxu0
      %v316 = vadd.f32 0.0, %v315
      %317 = vmatmul.bf16.gmra.mxu0 %v249
      %v318 = vpop.f32.mrf.mxu0
      %v319 = vadd.f32 0.0, %v318
      %v320 = vpop.f32.mrf.mxu0
      %v321 = vadd.f32 0.0, %v320
      %322 = vmatmul.bf16.gmra.mxu0 %v250
      %v323 = vpop.f32.mrf.mxu0
      %v324 = vadd.f32 0.0, %v323
      %v325 = vpop.f32.mrf.mxu0
      %v326 = vadd.f32 0.0, %v325
      %327 = vmatmul.bf16.gmra.mxu0 %v251
      %v328 = vpop.f32.mrf.mxu0
      %v329 = vadd.f32 0.0, %v328
      %v330 = vpop.f32.mrf.mxu0
      %v331 = vadd.f32 0.0, %v330
      %332 = vdwg.mxu0
      %v341 = vunpack.c.l.b16 %v182
      %v342 = vunpack.c.l.b16 %v183
      %v343 = vunpack.c.l.b16 %v184
      %v344 = vunpack.c.l.b16 %v185
      %v345 = vunpack.c.l.b16 %v186
      %v346 = vunpack.c.l.b16 %v187
      %v347 = vunpack.c.l.b16 %v188
      %v348 = vunpack.c.l.b16 %v189
      %v349 = vpack.c.b16 %v342, %v341
      %v350 = vpack.c.b16 %v344, %v343
      %v351 = vpack.c.b16 %v346, %v345
      %v352 = vpack.c.b16 %v348, %v347
      %v373 = vunpack.c.l.b16 %v190
      %v374 = vunpack.c.l.b16 %v191
      %v375 = vunpack.c.l.b16 %v192
      %v376 = vunpack.c.l.b16 %v193
      %v377 = vunpack.c.l.b16 %v194
      %v378 = vunpack.c.l.b16 %v195
      %v379 = vunpack.c.l.b16 %v196
      %v380 = vunpack.c.l.b16 %v197
      %v381 = vunpack.c.l.b16 %v198
      %v382 = vunpack.c.l.b16 %v199
      %v383 = vunpack.c.l.b16 %v200
      %v384 = vunpack.c.l.b16 %v201
      %v385 = vunpack.c.l.b16 %v202
      %v386 = vunpack.c.l.b16 %v203
      %v387 = vunpack.c.l.b16 %v204
      %v388 = vunpack.c.l.b16 %v205
      %v389 = vpack.c.b16 %v374, %v373
      %v390 = vpack.c.b16 %v376, %v375
      %v391 = vpack.c.b16 %v378, %v377
      %v392 = vpack.c.b16 %v380, %v379
      %v393 = vpack.c.b16 %v382, %v381
      %v394 = vpack.c.b16 %v384, %v383
      %v395 = vpack.c.b16 %v386, %v385
      %v396 = vpack.c.b16 %v388, %v387
      %405 = vmatpush.bf16.msra.mxu0 %v396
      %406 = vmatpush.bf16.msra.mxu0 %v395
      %407 = vmatpush.bf16.msra.mxu0 %v394
      %408 = vmatpush.bf16.msra.mxu0 %v393
      %409 = vmatpush.bf16.msra.mxu0 %v392
      %410 = vmatpush.bf16.msra.mxu0 %v391
      %411 = vmatpush.bf16.msra.mxu0 %v390
      %412 = vmatpush.bf16.msra.mxu0 %v389
      %413 = vmatmul.bf16.gmra.mxu0 %v349
      %v414 = vpop.f32.mrf.mxu0
      %v415 = vadd.f32 %v314, %v414
      %v416 = vpop.f32.mrf.mxu0
      %v417 = vadd.f32 %v316, %v416
      %418 = vmatmul.bf16.gmra.mxu0 %v350
      %v419 = vpop.f32.mrf.mxu0
      %v420 = vadd.f32 %v319, %v419
      %v421 = vpop.f32.mrf.mxu0
      %v422 = vadd.f32 %v321, %v421
      %423 = vmatmul.bf16.gmra.mxu0 %v351
      %v424 = vpop.f32.mrf.mxu0
      %v425 = vadd.f32 %v324, %v424
      %v426 = vpop.f32.mrf.mxu0
      %v427 = vadd.f32 %v326, %v426
      %428 = vmatmul.bf16.gmra.mxu0 %v352
      %v429 = vpop.f32.mrf.mxu0
      %v430 = vadd.f32 %v329, %v429
      %v431 = vpop.f32.mrf.mxu0
      %v432 = vadd.f32 %v331, %v431
      %433 = vdwg.mxu0
      %s434 = scalar_lea.vmem %s172, 144
      %v435 = vld [vmem:[%s434] sm:$0xf]
      %v436 = vld [vmem:[%s434 + $0x4] sm:$0xf]
      %v437 = vld [vmem:[%s434 + $0x8] sm:$0xf]
      %v438 = vld [vmem:[%s434 + $0xc] sm:$0xf]
      %v439 = vld [vmem:[%s434 + $0x10] sm:$0xf]
      %v440 = vld [vmem:[%s434 + $0x14] sm:$0xf]
      %v441 = vld [vmem:[%s434 + $0x18] sm:$0xf]
      %v442 = vld [vmem:[%s434 + $0x1c] sm:$0xf]
      %s443 = scalar_lea.vmem %s1, 128
      %v444 = vld [vmem:[%s443] sm:$0xf]
      %v445 = vld [vmem:[%s443 + $0x4] sm:$0xf]
      %v446 = vld [vmem:[%s443 + $0x8] sm:$0xf]
      %v447 = vld [vmem:[%s443 + $0xc] sm:$0xf]
      %v448 = vld [vmem:[%s443 + $0x10] sm:$0xf]
      %v449 = vld [vmem:[%s443 + $0x14] sm:$0xf]
      %v450 = vld [vmem:[%s443 + $0x18] sm:$0xf]
      %v451 = vld [vmem:[%s443 + $0x1c] sm:$0xf]
      %v452 = vld [vmem:[%s443 + $0x20] sm:$0xf]
      %v453 = vld [vmem:[%s443 + $0x24] sm:$0xf]
      %v454 = vld [vmem:[%s443 + $0x28] sm:$0xf]
      %v455 = vld [vmem:[%s443 + $0x2c] sm:$0xf]
      %v456 = vld [vmem:[%s443 + $0x30] sm:$0xf]
      %v457 = vld [vmem:[%s443 + $0x34] sm:$0xf]
      %v458 = vld [vmem:[%s443 + $0x38] sm:$0xf]
      %v459 = vld [vmem:[%s443 + $0x3c] sm:$0xf]
      %v468 = vunpack.c.l.b16 %v435
      %v469 = vunpack.c.l.b16 %v436
      %v470 = vunpack.c.l.b16 %v437
      %v471 = vunpack.c.l.b16 %v438
      %v472 = vunpack.c.l.b16 %v439
      %v473 = vunpack.c.l.b16 %v440
      %v474 = vunpack.c.l.b16 %v441
      %v475 = vunpack.c.l.b16 %v442
      %v476 = vpack.c.b16 %v469, %v468
      %v477 = vpack.c.b16 %v471, %v470
      %v478 = vpack.c.b16 %v473, %v472
      %v479 = vpack.c.b16 %v475, %v474
      %v500 = vunpack.c.l.b16 %v444
      %v501 = vunpack.c.l.b16 %v445
      %v502 = vunpack.c.l.b16 %v446
      %v503 = vunpack.c.l.b16 %v447
      %v504 = vunpack.c.l.b16 %v448
      %v505 = vunpack.c.l.b16 %v449
      %v506 = vunpack.c.l.b16 %v450
      %v507 = vunpack.c.l.b16 %v451
      %v508 = vunpack.c.l.b16 %v452
      %v509 = vunpack.c.l.b16 %v453
      %v510 = vunpack.c.l.b16 %v454
      %v511 = vunpack.c.l.b16 %v455
      %v512 = vunpack.c.l.b16 %v456
      %v513 = vunpack.c.l.b16 %v457
      %v514 = vunpack.c.l.b16 %v458
      %v515 = vunpack.c.l.b16 %v459
      %v516 = vpack.c.b16 %v501, %v500
      %v517 = vpack.c.b16 %v503, %v502
      %v518 = vpack.c.b16 %v505, %v504
      %v519 = vpack.c.b16 %v507, %v506
      %v520 = vpack.c.b16 %v509, %v508
      %v521 = vpack.c.b16 %v511, %v510
      %v522 = vpack.c.b16 %v513, %v512
      %v523 = vpack.c.b16 %v515, %v514
      %532 = vmatpush.bf16.msra.mxu0 %v523
      %533 = vmatpush.bf16.msra.mxu0 %v522
      %534 = vmatpush.bf16.msra.mxu0 %v521
      %535 = vmatpush.bf16.msra.mxu0 %v520
      %536 = vmatpush.bf16.msra.mxu0 %v519
      %537 = vmatpush.bf16.msra.mxu0 %v518
      %538 = vmatpush.bf16.msra.mxu0 %v517
      %539 = vmatpush.bf16.msra.mxu0 %v516
      %540 = vmatmul.bf16.gmra.mxu0 %v476
      %v541 = vpop.f32.mrf.mxu0
      %v542 = vadd.f32 0.0, %v541
      %v543 = vpop.f32.mrf.mxu0
      %v544 = vadd.f32 0.0, %v543
      %545 = vmatmul.bf16.gmra.mxu0 %v477
      %v546 = vpop.f32.mrf.mxu0
      %v547 = vadd.f32 0.0, %v546
      %v548 = vpop.f32.mrf.mxu0
      %v549 = vadd.f32 0.0, %v548
      %550 = vmatmul.bf16.gmra.mxu0 %v478
      %v551 = vpop.f32.mrf.mxu0
      %v552 = vadd.f32 0.0, %v551
      %v553 = vpop.f32.mrf.mxu0
      %v554 = vadd.f32 0.0, %v553
      %555 = vmatmul.bf16.gmra.mxu0 %v479
      %v556 = vpop.f32.mrf.mxu0
      %v557 = vadd.f32 0.0, %v556
      %v558 = vpop.f32.mrf.mxu0
      %v559 = vadd.f32 0.0, %v558
      %560 = vdwg.mxu0
      %v561 = vadd.f32 %v415, %v542
      %v562 = vadd.f32 %v417, %v544
      %v563 = vadd.f32 %v420, %v547
      %v564 = vadd.f32 %v422, %v549
      %v565 = vadd.f32 %v425, %v552
      %v566 = vadd.f32 %v427, %v554
      %v567 = vadd.f32 %v430, %v557
      %v568 = vadd.f32 %v432, %v559
      %s569 = scalar_lea.vmem %s172, 36
      %v570 = vld [vmem:[%s569] sm:$0xf]
      %v571 = vld [vmem:[%s569 + $0x4] sm:$0xf]
      %v572 = vld [vmem:[%s569 + $0x8] sm:$0xf]
      %v573 = vld [vmem:[%s569 + $0xc] sm:$0xf]
      %v574 = vld [vmem:[%s569 + $0x10] sm:$0xf]
      %v575 = vld [vmem:[%s569 + $0x14] sm:$0xf]
      %v576 = vld [vmem:[%s569 + $0x18] sm:$0xf]
      %v577 = vld [vmem:[%s569 + $0x1c] sm:$0xf]
      %s578 = scalar_lea.vmem %s1, 192
      %v579 = vld [vmem:[%s578] sm:$0xf]
      %v580 = vld [vmem:[%s578 + $0x4] sm:$0xf]
      %v581 = vld [vmem:[%s578 + $0x8] sm:$0xf]
      %v582 = vld [vmem:[%s578 + $0xc] sm:$0xf]
      %v583 = vld [vmem:[%s578 + $0x10] sm:$0xf]
      %v584 = vld [vmem:[%s578 + $0x14] sm:$0xf]
      %v585 = vld [vmem:[%s578 + $0x18] sm:$0xf]
      %v586 = vld [vmem:[%s578 + $0x1c] sm:$0xf]
      %v587 = vld [vmem:[%s578 + $0x20] sm:$0xf]
      %v588 = vld [vmem:[%s578 + $0x24] sm:$0xf]
      %v589 = vld [vmem:[%s578 + $0x28] sm:$0xf]
      %v590 = vld [vmem:[%s578 + $0x2c] sm:$0xf]
      %v591 = vld [vmem:[%s578 + $0x30] sm:$0xf]
      %v592 = vld [vmem:[%s578 + $0x34] sm:$0xf]
      %v593 = vld [vmem:[%s578 + $0x38] sm:$0xf]
      %v594 = vld [vmem:[%s578 + $0x3c] sm:$0xf]
      %v603 = vunpack.c.l.b16 %v570
      %v604 = vunpack.c.l.b16 %v571
      %v605 = vunpack.c.l.b16 %v572
      %v606 = vunpack.c.l.b16 %v573
      %v607 = vunpack.c.l.b16 %v574
      %v608 = vunpack.c.l.b16 %v575
      %v609 = vunpack.c.l.b16 %v576
      %v610 = vunpack.c.l.b16 %v577
      %v611 = vpack.c.b16 %v604, %v603
      %v612 = vpack.c.b16 %v606, %v605
      %v613 = vpack.c.b16 %v608, %v607
      %v614 = vpack.c.b16 %v610, %v609
      %v635 = vunpack.c.l.b16 %v579
      %v636 = vunpack.c.l.b16 %v580
      %v637 = vunpack.c.l.b16 %v581
      %v638 = vunpack.c.l.b16 %v582
      %v639 = vunpack.c.l.b16 %v583
      %v640 = vunpack.c.l.b16 %v584
      %v641 = vunpack.c.l.b16 %v585
      %v642 = vunpack.c.l.b16 %v586
      %v643 = vunpack.c.l.b16 %v587
      %v644 = vunpack.c.l.b16 %v588
      %v645 = vunpack.c.l.b16 %v589
      %v646 = vunpack.c.l.b16 %v590
      %v647 = vunpack.c.l.b16 %v591
      %v648 = vunpack.c.l.b16 %v592
      %v649 = vunpack.c.l.b16 %v593
      %v650 = vunpack.c.l.b16 %v594
      %v651 = vpack.c.b16 %v636, %v635
      %v652 = vpack.c.b16 %v638, %v637
      %v653 = vpack.c.b16 %v640, %v639
      %v654 = vpack.c.b16 %v642, %v641
      %v655 = vpack.c.b16 %v644, %v643
      %v656 = vpack.c.b16 %v646, %v645
      %v657 = vpack.c.b16 %v648, %v647
      %v658 = vpack.c.b16 %v650, %v649
      %667 = vmatpush.bf16.msra.mxu0 %v658
      %668 = vmatpush.bf16.msra.mxu0 %v657
      %669 = vmatpush.bf16.msra.mxu0 %v656
      %670 = vmatpush.bf16.msra.mxu0 %v655
      %671 = vmatpush.bf16.msra.mxu0 %v654
      %672 = vmatpush.bf16.msra.mxu0 %v653
      %673 = vmatpush.bf16.msra.mxu0 %v652
      %674 = vmatpush.bf16.msra.mxu0 %v651
      %675 = vmatmul.bf16.gmra.mxu0 %v611
      %v676 = vpop.f32.mrf.mxu0
      %v677 = vadd.f32 0.0, %v676
      %v678 = vpop.f32.mrf.mxu0
      %v679 = vadd.f32 0.0, %v678
      %680 = vmatmul.bf16.gmra.mxu0 %v612
      %v681 = vpop.f32.mrf.mxu0
      %v682 = vadd.f32 0.0, %v681
      %v683 = vpop.f32.mrf.mxu0
      %v684 = vadd.f32 0.0, %v683
      %685 = vmatmul.bf16.gmra.mxu0 %v613
      %v686 = vpop.f32.mrf.mxu0
      %v687 = vadd.f32 0.0, %v686
      %v688 = vpop.f32.mrf.mxu0
      %v689 = vadd.f32 0.0, %v688
      %690 = vmatmul.bf16.gmra.mxu0 %v614
      %v691 = vpop.f32.mrf.mxu0
      %v692 = vadd.f32 0.0, %v691
      %v693 = vpop.f32.mrf.mxu0
      %v694 = vadd.f32 0.0, %v693
      %695 = vdwg.mxu0
      %v696 = vadd.f32 %v561, %v677
      %v697 = vadd.f32 %v562, %v679
      %v698 = vadd.f32 %v563, %v682
      %v699 = vadd.f32 %v564, %v684
      %v700 = vadd.f32 %v565, %v687
      %v701 = vadd.f32 %v566, %v689
      %v702 = vadd.f32 %v567, %v692
      %v703 = vadd.f32 %v568, %v694
      %s704 = scalar_lea.vmem %s172, 108
      %v705 = vld [vmem:[%s704] sm:$0xf]
      %v706 = vld [vmem:[%s704 + $0x4] sm:$0xf]
      %v707 = vld [vmem:[%s704 + $0x8] sm:$0xf]
      %v708 = vld [vmem:[%s704 + $0xc] sm:$0xf]
      %v709 = vld [vmem:[%s704 + $0x10] sm:$0xf]
      %v710 = vld [vmem:[%s704 + $0x14] sm:$0xf]
      %v711 = vld [vmem:[%s704 + $0x18] sm:$0xf]
      %v712 = vld [vmem:[%s704 + $0x1c] sm:$0xf]
      %s713 = scalar_lea.vmem %s1, 256
      %v714 = vld [vmem:[%s713] sm:$0xf]
      %v715 = vld [vmem:[%s713 + $0x4] sm:$0xf]
      %v716 = vld [vmem:[%s713 + $0x8] sm:$0xf]
      %v717 = vld [vmem:[%s713 + $0xc] sm:$0xf]
      %v718 = vld [vmem:[%s713 + $0x10] sm:$0xf]
      %v719 = vld [vmem:[%s713 + $0x14] sm:$0xf]
      %v720 = vld [vmem:[%s713 + $0x18] sm:$0xf]
      %v721 = vld [vmem:[%s713 + $0x1c] sm:$0xf]
      %v722 = vld [vmem:[%s713 + $0x20] sm:$0xf]
      %v723 = vld [vmem:[%s713 + $0x24] sm:$0xf]
      %v724 = vld [vmem:[%s713 + $0x28] sm:$0xf]
      %v725 = vld [vmem:[%s713 + $0x2c] sm:$0xf]
      %v726 = vld [vmem:[%s713 + $0x30] sm:$0xf]
      %v727 = vld [vmem:[%s713 + $0x34] sm:$0xf]
      %v728 = vld [vmem:[%s713 + $0x38] sm:$0xf]
      %v729 = vld [vmem:[%s713 + $0x3c] sm:$0xf]
      %v738 = vunpack.c.l.b16 %v705
      %v739 = vunpack.c.l.b16 %v706
      %v740 = vunpack.c.l.b16 %v707
      %v741 = vunpack.c.l.b16 %v708
      %v742 = vunpack.c.l.b16 %v709
      %v743 = vunpack.c.l.b16 %v710
      %v744 = vunpack.c.l.b16 %v711
      %v745 = vunpack.c.l.b16 %v712
      %v746 = vpack.c.b16 %v739, %v738
      %v747 = vpack.c.b16 %v741, %v740
      %v748 = vpack.c.b16 %v743, %v742
      %v749 = vpack.c.b16 %v745, %v744
      %v770 = vunpack.c.l.b16 %v714
      %v771 = vunpack.c.l.b16 %v715
      %v772 = vunpack.c.l.b16 %v716
      %v773 = vunpack.c.l.b16 %v717
      %v774 = vunpack.c.l.b16 %v718
      %v775 = vunpack.c.l.b16 %v719
      %v776 = vunpack.c.l.b16 %v720
      %v777 = vunpack.c.l.b16 %v721
      %v778 = vunpack.c.l.b16 %v722
      %v779 = vunpack.c.l.b16 %v723
      %v780 = vunpack.c.l.b16 %v724
      %v781 = vunpack.c.l.b16 %v725
      %v782 = vunpack.c.l.b16 %v726
      %v783 = vunpack.c.l.b16 %v727
      %v784 = vunpack.c.l.b16 %v728
      %v785 = vunpack.c.l.b16 %v729
      %v786 = vpack.c.b16 %v771, %v770
      %v787 = vpack.c.b16 %v773, %v772
      %v788 = vpack.c.b16 %v775, %v774
      %v789 = vpack.c.b16 %v777, %v776
      %v790 = vpack.c.b16 %v779, %v778
      %v791 = vpack.c.b16 %v781, %v780
      %v792 = vpack.c.b16 %v783, %v782
      %v793 = vpack.c.b16 %v785, %v784
      %802 = vmatpush.bf16.msra.mxu0 %v793
      %803 = vmatpush.bf16.msra.mxu0 %v792
      %804 = vmatpush.bf16.msra.mxu0 %v791
      %805 = vmatpush.bf16.msra.mxu0 %v790
      %806 = vmatpush.bf16.msra.mxu0 %v789
      %807 = vmatpush.bf16.msra.mxu0 %v788
      %808 = vmatpush.bf16.msra.mxu0 %v787
      %809 = vmatpush.bf16.msra.mxu0 %v786
      %810 = vmatmul.bf16.gmra.mxu0 %v746
      %v811 = vpop.f32.mrf.mxu0
      %v812 = vadd.f32 0.0, %v811
      %v813 = vpop.f32.mrf.mxu0
      %v814 = vadd.f32 0.0, %v813
      %815 = vmatmul.bf16.gmra.mxu0 %v747
      %v816 = vpop.f32.mrf.mxu0
      %v817 = vadd.f32 0.0, %v816
      %v818 = vpop.f32.mrf.mxu0
      %v819 = vadd.f32 0.0, %v818
      %820 = vmatmul.bf16.gmra.mxu0 %v748
      %v821 = vpop.f32.mrf.mxu0
      %v822 = vadd.f32 0.0, %v821
      %v823 = vpop.f32.mrf.mxu0
      %v824 = vadd.f32 0.0, %v823
      %825 = vmatmul.bf16.gmra.mxu0 %v749
      %v826 = vpop.f32.mrf.mxu0
      %v827 = vadd.f32 0.0, %v826
      %v828 = vpop.f32.mrf.mxu0
      %v829 = vadd.f32 0.0, %v828
      %830 = vdwg.mxu0
      %v831 = vadd.f32 %v696, %v812
      %v832 = vadd.f32 %v697, %v814
      %v833 = vadd.f32 %v698, %v817
      %v834 = vadd.f32 %v699, %v819
      %v835 = vadd.f32 %v700, %v822
      %v836 = vadd.f32 %v701, %v824
      %v837 = vadd.f32 %v702, %v827
      %v838 = vadd.f32 %v703, %v829
      %s839 = scalar_lea.vmem %s172, 180
      %v840 = vld [vmem:[%s839] sm:$0xf]
      %v841 = vld [vmem:[%s839 + $0x4] sm:$0xf]
      %v842 = vld [vmem:[%s839 + $0x8] sm:$0xf]
      %v843 = vld [vmem:[%s839 + $0xc] sm:$0xf]
      %v844 = vld [vmem:[%s839 + $0x10] sm:$0xf]
      %v845 = vld [vmem:[%s839 + $0x14] sm:$0xf]
      %v846 = vld [vmem:[%s839 + $0x18] sm:$0xf]
      %v847 = vld [vmem:[%s839 + $0x1c] sm:$0xf]
      %s848 = scalar_lea.vmem %s1, 320
      %v849 = vld [vmem:[%s848] sm:$0xf]
      %v850 = vld [vmem:[%s848 + $0x4] sm:$0xf]
      %v851 = vld [vmem:[%s848 + $0x8] sm:$0xf]
      %v852 = vld [vmem:[%s848 + $0xc] sm:$0xf]
      %v853 = vld [vmem:[%s848 + $0x10] sm:$0xf]
      %v854 = vld [vmem:[%s848 + $0x14] sm:$0xf]
      %v855 = vld [vmem:[%s848 + $0x18] sm:$0xf]
      %v856 = vld [vmem:[%s848 + $0x1c] sm:$0xf]
      %v857 = vld [vmem:[%s848 + $0x20] sm:$0xf]
      %v858 = vld [vmem:[%s848 + $0x24] sm:$0xf]
      %v859 = vld [vmem:[%s848 + $0x28] sm:$0xf]
      %v860 = vld [vmem:[%s848 + $0x2c] sm:$0xf]
      %v861 = vld [vmem:[%s848 + $0x30] sm:$0xf]
      %v862 = vld [vmem:[%s848 + $0x34] sm:$0xf]
      %v863 = vld [vmem:[%s848 + $0x38] sm:$0xf]
      %v864 = vld [vmem:[%s848 + $0x3c] sm:$0xf]
      %v873 = vunpack.c.l.b16 %v840
      %v874 = vunpack.c.l.b16 %v841
      %v875 = vunpack.c.l.b16 %v842
      %v876 = vunpack.c.l.b16 %v843
      %v877 = vunpack.c.l.b16 %v844
      %v878 = vunpack.c.l.b16 %v845
      %v879 = vunpack.c.l.b16 %v846
      %v880 = vunpack.c.l.b16 %v847
      %v881 = vpack.c.b16 %v874, %v873
      %v882 = vpack.c.b16 %v876, %v875
      %v883 = vpack.c.b16 %v878, %v877
      %v884 = vpack.c.b16 %v880, %v879
      %v905 = vunpack.c.l.b16 %v849
      %v906 = vunpack.c.l.b16 %v850
      %v907 = vunpack.c.l.b16 %v851
      %v908 = vunpack.c.l.b16 %v852
      %v909 = vunpack.c.l.b16 %v853
      %v910 = vunpack.c.l.b16 %v854
      %v911 = vunpack.c.l.b16 %v855
      %v912 = vunpack.c.l.b16 %v856
      %v913 = vunpack.c.l.b16 %v857
      %v914 = vunpack.c.l.b16 %v858
      %v915 = vunpack.c.l.b16 %v859
      %v916 = vunpack.c.l.b16 %v860
      %v917 = vunpack.c.l.b16 %v861
      %v918 = vunpack.c.l.b16 %v862
      %v919 = vunpack.c.l.b16 %v863
      %v920 = vunpack.c.l.b16 %v864
      %v921 = vpack.c.b16 %v906, %v905
      %v922 = vpack.c.b16 %v908, %v907
      %v923 = vpack.c.b16 %v910, %v909
      %v924 = vpack.c.b16 %v912, %v911
      %v925 = vpack.c.b16 %v914, %v913
      %v926 = vpack.c.b16 %v916, %v915
      %v927 = vpack.c.b16 %v918, %v917
      %v928 = vpack.c.b16 %v920, %v919
      %937 = vmatpush.bf16.msra.mxu0 %v928
      %938 = vmatpush.bf16.msra.mxu0 %v927
      %939 = vmatpush.bf16.msra.mxu0 %v926
      %940 = vmatpush.bf16.msra.mxu0 %v925
      %941 = vmatpush.bf16.msra.mxu0 %v924
      %942 = vmatpush.bf16.msra.mxu0 %v923
      %943 = vmatpush.bf16.msra.mxu0 %v922
      %944 = vmatpush.bf16.msra.mxu0 %v921
      %945 = vmatmul.bf16.gmra.mxu0 %v881
      %v946 = vpop.f32.mrf.mxu0
      %v947 = vadd.f32 0.0, %v946
      %v948 = vpop.f32.mrf.mxu0
      %v949 = vadd.f32 0.0, %v948
      %950 = vmatmul.bf16.gmra.mxu0 %v882
      %v951 = vpop.f32.mrf.mxu0
      %v952 = vadd.f32 0.0, %v951
      %v953 = vpop.f32.mrf.mxu0
      %v954 = vadd.f32 0.0, %v953
      %955 = vmatmul.bf16.gmra.mxu0 %v883
      %v956 = vpop.f32.mrf.mxu0
      %v957 = vadd.f32 0.0, %v956
      %v958 = vpop.f32.mrf.mxu0
      %v959 = vadd.f32 0.0, %v958
      %960 = vmatmul.bf16.gmra.mxu0 %v884
      %v961 = vpop.f32.mrf.mxu0
      %v962 = vadd.f32 0.0, %v961
      %v963 = vpop.f32.mrf.mxu0
      %v964 = vadd.f32 0.0, %v963
      %965 = vdwg.mxu0
      %v966 = vadd.f32 %v831, %v947
      %v967 = vadd.f32 %v832, %v949
      %v968 = vadd.f32 %v833, %v952
      %v969 = vadd.f32 %v834, %v954
      %v970 = vadd.f32 %v835, %v957
      %v971 = vadd.f32 %v836, %v959
      %v972 = vadd.f32 %v837, %v962
      %v973 = vadd.f32 %v838, %v964
      %v974 = vld [vmem:[%s172 + $0x4] sm:$0xf]
      %v975 = vld [vmem:[%s172 + $0x8] sm:$0xf]
      %v976 = vld [vmem:[%s172 + $0xc] sm:$0xf]
      %v977 = vld [vmem:[%s172 + $0x10] sm:$0xf]
      %v978 = vld [vmem:[%s172 + $0x14] sm:$0xf]
      %v979 = vld [vmem:[%s172 + $0x18] sm:$0xf]
      %v980 = vld [vmem:[%s172 + $0x1c] sm:$0xf]
      %v981 = vld [vmem:[%s172 + $0x20] sm:$0xf]
      %s982 = scalar_lea.vmem %s1, 384
      %v983 = vld [vmem:[%s982] sm:$0xf]
      %v984 = vld [vmem:[%s982 + $0x4] sm:$0xf]
      %v985 = vld [vmem:[%s982 + $0x8] sm:$0xf]
      %v986 = vld [vmem:[%s982 + $0xc] sm:$0xf]
      %v987 = vld [vmem:[%s982 + $0x10] sm:$0xf]
      %v988 = vld [vmem:[%s982 + $0x14] sm:$0xf]
      %v989 = vld [vmem:[%s982 + $0x18] sm:$0xf]
      %v990 = vld [vmem:[%s982 + $0x1c] sm:$0xf]
      %v991 = vld [vmem:[%s982 + $0x20] sm:$0xf]
      %v992 = vld [vmem:[%s982 + $0x24] sm:$0xf]
      %v993 = vld [vmem:[%s982 + $0x28] sm:$0xf]
      %v994 = vld [vmem:[%s982 + $0x2c] sm:$0xf]
      %v995 = vld [vmem:[%s982 + $0x30] sm:$0xf]
      %v996 = vld [vmem:[%s982 + $0x34] sm:$0xf]
      %v997 = vld [vmem:[%s982 + $0x38] sm:$0xf]
      %v998 = vld [vmem:[%s982 + $0x3c] sm:$0xf]
      %v1007 = vunpack.c.l.b16 %v974
      %v1008 = vunpack.c.l.b16 %v975
      %v1009 = vunpack.c.l.b16 %v976
      %v1010 = vunpack.c.l.b16 %v977
      %v1011 = vunpack.c.l.b16 %v978
      %v1012 = vunpack.c.l.b16 %v979
      %v1013 = vunpack.c.l.b16 %v980
      %v1014 = vunpack.c.l.b16 %v981
      %v1015 = vpack.c.b16 %v1008, %v1007
      %v1016 = vpack.c.b16 %v1010, %v1009
      %v1017 = vpack.c.b16 %v1012, %v1011
      %v1018 = vpack.c.b16 %v1014, %v1013
      %v1039 = vunpack.c.l.b16 %v983
      %v1040 = vunpack.c.l.b16 %v984
      %v1041 = vunpack.c.l.b16 %v985
      %v1042 = vunpack.c.l.b16 %v986
      %v1043 = vunpack.c.l.b16 %v987
      %v1044 = vunpack.c.l.b16 %v988
      %v1045 = vunpack.c.l.b16 %v989
      %v1046 = vunpack.c.l.b16 %v990
      %v1047 = vunpack.c.l.b16 %v991
      %v1048 = vunpack.c.l.b16 %v992
      %v1049 = vunpack.c.l.b16 %v993
      %v1050 = vunpack.c.l.b16 %v994
      %v1051 = vunpack.c.l.b16 %v995
      %v1052 = vunpack.c.l.b16 %v996
      %v1053 = vunpack.c.l.b16 %v997
      %v1054 = vunpack.c.l.b16 %v998
      %v1055 = vpack.c.b16 %v1040, %v1039
      %v1056 = vpack.c.b16 %v1042, %v1041
      %v1057 = vpack.c.b16 %v1044, %v1043
      %v1058 = vpack.c.b16 %v1046, %v1045
      %v1059 = vpack.c.b16 %v1048, %v1047
      %v1060 = vpack.c.b16 %v1050, %v1049
      %v1061 = vpack.c.b16 %v1052, %v1051
      %v1062 = vpack.c.b16 %v1054, %v1053
      %1071 = vmatpush.bf16.msra.mxu0 %v1062
      %1072 = vmatpush.bf16.msra.mxu0 %v1061
      %1073 = vmatpush.bf16.msra.mxu0 %v1060
      %1074 = vmatpush.bf16.msra.mxu0 %v1059
      %1075 = vmatpush.bf16.msra.mxu0 %v1058
      %1076 = vmatpush.bf16.msra.mxu0 %v1057
      %1077 = vmatpush.bf16.msra.mxu0 %v1056
      %1078 = vmatpush.bf16.msra.mxu0 %v1055
      %1079 = vmatmul.bf16.gmra.mxu0 %v1015
      %v1080 = vpop.f32.mrf.mxu0
      %v1081 = vadd.f32 0.0, %v1080
      %v1082 = vpop.f32.mrf.mxu0
      %v1083 = vadd.f32 0.0, %v1082
      %1084 = vmatmul.bf16.gmra.mxu0 %v1016
      %v1085 = vpop.f32.mrf.mxu0
      %v1086 = vadd.f32 0.0, %v1085
      %v1087 = vpop.f32.mrf.mxu0
      %v1088 = vadd.f32 0.0, %v1087
      %1089 = vmatmul.bf16.gmra.mxu0 %v1017
      %v1090 = vpop.f32.mrf.mxu0
      %v1091 = vadd.f32 0.0, %v1090
      %v1092 = vpop.f32.mrf.mxu0
      %v1093 = vadd.f32 0.0, %v1092
      %1094 = vmatmul.bf16.gmra.mxu0 %v1018
      %v1095 = vpop.f32.mrf.mxu0
      %v1096 = vadd.f32 0.0, %v1095
      %v1097 = vpop.f32.mrf.mxu0
      %v1098 = vadd.f32 0.0, %v1097
      %1099 = vdwg.mxu0
      %v1100 = vadd.f32 %v966, %v1081
      %v1101 = vadd.f32 %v967, %v1083
      %v1102 = vadd.f32 %v968, %v1086
      %v1103 = vadd.f32 %v969, %v1088
      %v1104 = vadd.f32 %v970, %v1091
      %v1105 = vadd.f32 %v971, %v1093
      %v1106 = vadd.f32 %v972, %v1096
      %v1107 = vadd.f32 %v973, %v1098
      %v1108 = vld [vmem:[%s206 + $0x4] sm:$0xf]
      %v1109 = vld [vmem:[%s206 + $0x8] sm:$0xf]
      %v1110 = vld [vmem:[%s206 + $0xc] sm:$0xf]
      %v1111 = vld [vmem:[%s206 + $0x10] sm:$0xf]
      %v1112 = vld [vmem:[%s206 + $0x14] sm:$0xf]
      %v1113 = vld [vmem:[%s206 + $0x18] sm:$0xf]
      %v1114 = vld [vmem:[%s206 + $0x1c] sm:$0xf]
      %v1115 = vld [vmem:[%s206 + $0x20] sm:$0xf]
      %s1116 = scalar_lea.vmem %s1, 448
      %v1117 = vld [vmem:[%s1116] sm:$0xf]
      %v1118 = vld [vmem:[%s1116 + $0x4] sm:$0xf]
      %v1119 = vld [vmem:[%s1116 + $0x8] sm:$0xf]
      %v1120 = vld [vmem:[%s1116 + $0xc] sm:$0xf]
      %v1121 = vld [vmem:[%s1116 + $0x10] sm:$0xf]
      %v1122 = vld [vmem:[%s1116 + $0x14] sm:$0xf]
      %v1123 = vld [vmem:[%s1116 + $0x18] sm:$0xf]
      %v1124 = vld [vmem:[%s1116 + $0x1c] sm:$0xf]
      %v1125 = vld [vmem:[%s1116 + $0x20] sm:$0xf]
      %v1126 = vld [vmem:[%s1116 + $0x24] sm:$0xf]
      %v1127 = vld [vmem:[%s1116 + $0x28] sm:$0xf]
      %v1128 = vld [vmem:[%s1116 + $0x2c] sm:$0xf]
      %v1129 = vld [vmem:[%s1116 + $0x30] sm:$0xf]
      %v1130 = vld [vmem:[%s1116 + $0x34] sm:$0xf]
      %v1131 = vld [vmem:[%s1116 + $0x38] sm:$0xf]
      %v1132 = vld [vmem:[%s1116 + $0x3c] sm:$0xf]
      %v1141 = vunpack.c.l.b16 %v1108
      %v1142 = vunpack.c.l.b16 %v1109
      %v1143 = vunpack.c.l.b16 %v1110
      %v1144 = vunpack.c.l.b16 %v1111
      %v1145 = vunpack.c.l.b16 %v1112
      %v1146 = vunpack.c.l.b16 %v1113
      %v1147 = vunpack.c.l.b16 %v1114
      %v1148 = vunpack.c.l.b16 %v1115
      %v1149 = vpack.c.b16 %v1142, %v1141
      %v1150 = vpack.c.b16 %v1144, %v1143
      %v1151 = vpack.c.b16 %v1146, %v1145
      %v1152 = vpack.c.b16 %v1148, %v1147
      %v1173 = vunpack.c.l.b16 %v1117
      %v1174 = vunpack.c.l.b16 %v1118
      %v1175 = vunpack.c.l.b16 %v1119
      %v1176 = vunpack.c.l.b16 %v1120
      %v1177 = vunpack.c.l.b16 %v1121
      %v1178 = vunpack.c.l.b16 %v1122
      %v1179 = vunpack.c.l.b16 %v1123
      %v1180 = vunpack.c.l.b16 %v1124
      %v1181 = vunpack.c.l.b16 %v1125
      %v1182 = vunpack.c.l.b16 %v1126
      %v1183 = vunpack.c.l.b16 %v1127
      %v1184 = vunpack.c.l.b16 %v1128
      %v1185 = vunpack.c.l.b16 %v1129
      %v1186 = vunpack.c.l.b16 %v1130
      %v1187 = vunpack.c.l.b16 %v1131
      %v1188 = vunpack.c.l.b16 %v1132
      %v1189 = vpack.c.b16 %v1174, %v1173
      %v1190 = vpack.c.b16 %v1176, %v1175
      %v1191 = vpack.c.b16 %v1178, %v1177
      %v1192 = vpack.c.b16 %v1180, %v1179
      %v1193 = vpack.c.b16 %v1182, %v1181
      %v1194 = vpack.c.b16 %v1184, %v1183
      %v1195 = vpack.c.b16 %v1186, %v1185
      %v1196 = vpack.c.b16 %v1188, %v1187
      %1205 = vmatpush.bf16.msra.mxu0 %v1196
      %1206 = vmatpush.bf16.msra.mxu0 %v1195
      %1207 = vmatpush.bf16.msra.mxu0 %v1194
      %1208 = vmatpush.bf16.msra.mxu0 %v1193
      %1209 = vmatpush.bf16.msra.mxu0 %v1192
      %1210 = vmatpush.bf16.msra.mxu0 %v1191
      %1211 = vmatpush.bf16.msra.mxu0 %v1190
      %1212 = vmatpush.bf16.msra.mxu0 %v1189
      %1213 = vmatmul.bf16.gmra.mxu0 %v1149
      %v1214 = vpop.f32.mrf.mxu0
      %v1215 = vadd.f32 0.0, %v1214
      %v1216 = vpop.f32.mrf.mxu0
      %v1217 = vadd.f32 0.0, %v1216
      %1218 = vmatmul.bf16.gmra.mxu0 %v1150
      %v1219 = vpop.f32.mrf.mxu0
      %v1220 = vadd.f32 0.0, %v1219
      %v1221 = vpop.f32.mrf.mxu0
      %v1222 = vadd.f32 0.0, %v1221
      %1223 = vmatmul.bf16.gmra.mxu0 %v1151
      %v1224 = vpop.f32.mrf.mxu0
      %v1225 = vadd.f32 0.0, %v1224
      %v1226 = vpop.f32.mrf.mxu0
      %v1227 = vadd.f32 0.0, %v1226
      %1228 = vmatmul.bf16.gmra.mxu0 %v1152
      %v1229 = vpop.f32.mrf.mxu0
      %v1230 = vadd.f32 0.0, %v1229
      %v1231 = vpop.f32.mrf.mxu0
      %v1232 = vadd.f32 0.0, %v1231
      %1233 = vdwg.mxu0
      %v1234 = vadd.f32 %v1100, %v1215
      %v1235 = vadd.f32 %v1101, %v1217
      %v1236 = vadd.f32 %v1102, %v1220
      %v1237 = vadd.f32 %v1103, %v1222
      %v1238 = vadd.f32 %v1104, %v1225
      %v1239 = vadd.f32 %v1105, %v1227
      %v1240 = vadd.f32 %v1106, %v1230
      %v1241 = vadd.f32 %v1107, %v1232
      %v1242 = vld [vmem:[%s434 + $0x4] sm:$0xf]
      %v1243 = vld [vmem:[%s434 + $0x8] sm:$0xf]
      %v1244 = vld [vmem:[%s434 + $0xc] sm:$0xf]
      %v1245 = vld [vmem:[%s434 + $0x10] sm:$0xf]
      %v1246 = vld [vmem:[%s434 + $0x14] sm:$0xf]
      %v1247 = vld [vmem:[%s434 + $0x18] sm:$0xf]
      %v1248 = vld [vmem:[%s434 + $0x1c] sm:$0xf]
      %v1249 = vld [vmem:[%s434 + $0x20] sm:$0xf]
      %s1250 = scalar_lea.vmem %s1, 512
      %v1251 = vld [vmem:[%s1250] sm:$0xf]
      %v1252 = vld [vmem:[%s1250 + $0x4] sm:$0xf]
      %v1253 = vld [vmem:[%s1250 + $0x8] sm:$0xf]
      %v1254 = vld [vmem:[%s1250 + $0xc] sm:$0xf]
      %v1255 = vld [vmem:[%s1250 + $0x10] sm:$0xf]
      %v1256 = vld [vmem:[%s1250 + $0x14] sm:$0xf]
      %v1257 = vld [vmem:[%s1250 + $0x18] sm:$0xf]
      %v1258 = vld [vmem:[%s1250 + $0x1c] sm:$0xf]
      %v1259 = vld [vmem:[%s1250 + $0x20] sm:$0xf]
      %v1260 = vld [vmem:[%s1250 + $0x24] sm:$0xf]
      %v1261 = vld [vmem:[%s1250 + $0x28] sm:$0xf]
      %v1262 = vld [vmem:[%s1250 + $0x2c] sm:$0xf]
      %v1263 = vld [vmem:[%s1250 + $0x30] sm:$0xf]
      %v1264 = vld [vmem:[%s1250 + $0x34] sm:$0xf]
      %v1265 = vld [vmem:[%s1250 + $0x38] sm:$0xf]
      %v1266 = vld [vmem:[%s1250 + $0x3c] sm:$0xf]
      %v1275 = vunpack.c.l.b16 %v1242
      %v1276 = vunpack.c.l.b16 %v1243
      %v1277 = vunpack.c.l.b16 %v1244
      %v1278 = vunpack.c.l.b16 %v1245
      %v1279 = vunpack.c.l.b16 %v1246
      %v1280 = vunpack.c.l.b16 %v1247
      %v1281 = vunpack.c.l.b16 %v1248
      %v1282 = vunpack.c.l.b16 %v1249
      %v1283 = vpack.c.b16 %v1276, %v1275
      %v1284 = vpack.c.b16 %v1278, %v1277
      %v1285 = vpack.c.b16 %v1280, %v1279
      %v1286 = vpack.c.b16 %v1282, %v1281
      %v1307 = vunpack.c.l.b16 %v1251
      %v1308 = vunpack.c.l.b16 %v1252
      %v1309 = vunpack.c.l.b16 %v1253
      %v1310 = vunpack.c.l.b16 %v1254
      %v1311 = vunpack.c.l.b16 %v1255
      %v1312 = vunpack.c.l.b16 %v1256
      %v1313 = vunpack.c.l.b16 %v1257
      %v1314 = vunpack.c.l.b16 %v1258
      %v1315 = vunpack.c.l.b16 %v1259
      %v1316 = vunpack.c.l.b16 %v1260
      %v1317 = vunpack.c.l.b16 %v1261
      %v1318 = vunpack.c.l.b16 %v1262
      %v1319 = vunpack.c.l.b16 %v1263
      %v1320 = vunpack.c.l.b16 %v1264
      %v1321 = vunpack.c.l.b16 %v1265
      %v1322 = vunpack.c.l.b16 %v1266
      %v1323 = vpack.c.b16 %v1308, %v1307
      %v1324 = vpack.c.b16 %v1310, %v1309
      %v1325 = vpack.c.b16 %v1312, %v1311
      %v1326 = vpack.c.b16 %v1314, %v1313
      %v1327 = vpack.c.b16 %v1316, %v1315
      %v1328 = vpack.c.b16 %v1318, %v1317
      %v1329 = vpack.c.b16 %v1320, %v1319
      %v1330 = vpack.c.b16 %v1322, %v1321
      %1339 = vmatpush.bf16.msra.mxu0 %v1330
      %1340 = vmatpush.bf16.msra.mxu0 %v1329
      %1341 = vmatpush.bf16.msra.mxu0 %v1328
      %1342 = vmatpush.bf16.msra.mxu0 %v1327
      %1343 = vmatpush.bf16.msra.mxu0 %v1326
      %1344 = vmatpush.bf16.msra.mxu0 %v1325
      %1345 = vmatpush.bf16.msra.mxu0 %v1324
      %1346 = vmatpush.bf16.msra.mxu0 %v1323
      %1347 = vmatmul.bf16.gmra.mxu0 %v1283
      %v1348 = vpop.f32.mrf.mxu0
      %v1349 = vadd.f32 0.0, %v1348
      %v1350 = vpop.f32.mrf.mxu0
      %v1351 = vadd.f32 0.0, %v1350
      %1352 = vmatmul.bf16.gmra.mxu0 %v1284
      %v1353 = vpop.f32.mrf.mxu0
      %v1354 = vadd.f32 0.0, %v1353
      %v1355 = vpop.f32.mrf.mxu0
      %v1356 = vadd.f32 0.0, %v1355
      %1357 = vmatmul.bf16.gmra.mxu0 %v1285
      %v1358 = vpop.f32.mrf.mxu0
      %v1359 = vadd.f32 0.0, %v1358
      %v1360 = vpop.f32.mrf.mxu0
      %v1361 = vadd.f32 0.0, %v1360
      %1362 = vmatmul.bf16.gmra.mxu0 %v1286
      %v1363 = vpop.f32.mrf.mxu0
      %v1364 = vadd.f32 0.0, %v1363
      %v1365 = vpop.f32.mrf.mxu0
      %v1366 = vadd.f32 0.0, %v1365
      %1367 = vdwg.mxu0
      %v1368 = vadd.f32 %v1234, %v1349
      %v1369 = vadd.f32 %v1235, %v1351
      %v1370 = vadd.f32 %v1236, %v1354
      %v1371 = vadd.f32 %v1237, %v1356
      %v1372 = vadd.f32 %v1238, %v1359
      %v1373 = vadd.f32 %v1239, %v1361
      %v1374 = vadd.f32 %v1240, %v1364
      %v1375 = vadd.f32 %v1241, %v1366
      %v1376 = vpack.c.bf16 %v1368, %v1368
      %v1377 = vpack.c.bf16 %v1369, %v1369
      %v1378 = vpack.c.bf16 %v1370, %v1370
      %v1379 = vpack.c.bf16 %v1371, %v1371
      %v1380 = vpack.c.bf16 %v1372, %v1372
      %v1381 = vpack.c.bf16 %v1373, %v1373
      %v1382 = vpack.c.bf16 %v1374, %v1374
      %v1383 = vpack.c.bf16 %v1375, %v1375
      %1384 = vst [vmem:[%s177] sm:$0xf] %v1376
      %1385 = vst [vmem:[%s177 + $0x4] sm:$0xf] %v1377
      %1386 = vst [vmem:[%s177 + $0x8] sm:$0xf] %v1378
      %1387 = vst [vmem:[%s177 + $0xc] sm:$0xf] %v1379
      %1388 = vst [vmem:[%s177 + $0x10] sm:$0xf] %v1380
      %1389 = vst [vmem:[%s177 + $0x14] sm:$0xf] %v1381
      %1390 = vst [vmem:[%s177 + $0x18] sm:$0xf] %v1382
      %1391 = vst [vmem:[%s177 + $0x1c] sm:$0xf] %v1383
      %v1392 = vadd.f32 %v1368, %v1369
      %v1393 = vadd.f32 %v1392, %v1370
      %v1394 = vadd.f32 %v1393, %v1371
      %v1395 = vadd.f32 %v1394, %v1372
      %v1396 = vadd.f32 %v1395, %v1373
      %v1397 = vadd.f32 %v1396, %v1374
      %v1398 = vadd.f32 %v1397, %v1375
      %v1399 = vrot.slane %v1398, 4
      %v1400 = vadd.f32 %v1398, %v1399
      %v1401 = vrot.slane %v1400, 2
      %v1402 = vadd.f32 %v1400, %v1401
      %v1403 = vrot.slane %v1402, 1
      %v1404 = vadd.f32 %v1402, %v1403
      %v1405 = vmul.f32 %v1368, %v1368
      %v1406 = vmul.f32 %v1369, %v1369
      %v1407 = vmul.f32 %v1370, %v1370
      %v1408 = vmul.f32 %v1371, %v1371
      %v1409 = vmul.f32 %v1372, %v1372
      %v1410 = vmul.f32 %v1373, %v1373
      %v1411 = vmul.f32 %v1374, %v1374
      %v1412 = vmul.f32 %v1375, %v1375
      %v1413 = vadd.f32 %v1405, %v1406
      %v1414 = vadd.f32 %v1413, %v1407
      %v1415 = vadd.f32 %v1414, %v1408
      %v1416 = vadd.f32 %v1415, %v1409
      %v1417 = vadd.f32 %v1416, %v1410
      %v1418 = vadd.f32 %v1417, %v1411
      %v1419 = vadd.f32 %v1418, %v1412
      %v1420 = vrot.slane %v1419, 4
      %v1421 = vadd.f32 %v1419, %v1420
      %v1422 = vrot.slane %v1421, 2
      %v1423 = vadd.f32 %v1421, %v1422
      %v1424 = vrot.slane %v1423, 1
      %v1425 = vadd.f32 %v1423, %v1424
      %vm1426 = vcmask 1040384
      %v1427 = vsel %vm1426, %v1404, %v1425
      %1428 = vst [vmem:[%s181] sm:$0x3] %v1427
      %p1429 = scmp.lt.s32.totalorder %s15, 1
      %s1430 = scalar_select %p1429, %s15, 1
      %s1431 = smul.addr %s1430, 8
      %s1432 = smul.addr %s1431, 4
      %s1433 = scalar_lea.vmem %s2, %s1432
      %p1434 = scmp.lt.s32.totalorder %s15, 1
      %s1435 = scalar_select %p1434, %s15, 1
      %s1436 = smul.addr %s1435, 2
      %s1437 = scalar_lea.vmem %s3, %s1436
      // Predicated region
      $region29: #{bottleneck_forward.8} parent=27 // pred_check
        %p1438 = pneg %p80
      $region30: #{bottleneck_forward.8} parent=27 // pred_check_branch
        %1440 = sbr.rel (%p1438) target = $region32
      $region31: #{bottleneck_forward.8} parent=27 // pred_region
        _
      $region32: #{bottleneck_forward.8} parent=27 // pred_fallthru
        _
      // Predicated region
      $region33: #{bottleneck_forward.8} parent=27 // pred_check
        %p1441 = pneg %p106
      $region34: #{bottleneck_forward.8} parent=27 // pred_check_branch
        %1443 = sbr.rel (%p1441) target = $region36
      $region35: #{bottleneck_forward.8} parent=27 // pred_region
        _
      $region36: #{bottleneck_forward.8} parent=27 // pred_fallthru
        _
    $region28: #{bottleneck_forward.8} parent=5 // pred_fallthru
      _
    %p1444 = scmp.le.s32.totalorder 2, %s10
    // Predicated region
    $region37: #{bottleneck_forward.8} parent=5 // pred_check
      %p1445 = pneg %p1444
    $region38: #{bottleneck_forward.8} parent=5 // pred_check_branch
      %1447 = sbr.rel (%p1445) target = $region40
    $region39: #{bottleneck_forward.8} parent=5 // pred_region
      %s1448 = ssub.s32 %s10, 2
      // Predicated region
      $region41: #{bottleneck_forward.8} parent=39 // pred_check
        %p1449 = pneg %p86
      $region42: #{bottleneck_forward.8} parent=39 // pred_check_branch
        %1451 = sbr.rel (%p1449) target = $region44
      $region43: #{bottleneck_forward.8} parent=39 // pred_region
        %p1452 = scmp.lt.s32.totalorder %s16, 1
        %s1453 = scalar_select %p1452, %s16, 1
        %s1454 = smul.addr %s1453, 8
        %s1455 = smul.addr %s1454, 4
        %s1456 = scalar_lea.vmem %s2, %s1455
      $region44: #{bottleneck_forward.8} parent=39 // pred_fallthru
        _
      // Predicated region
      $region45: #{bottleneck_forward.8} parent=39 // pred_check
        %p1457 = pneg %p112
      $region46: #{bottleneck_forward.8} parent=39 // pred_check_branch
        %1459 = sbr.rel (%p1457) target = $region48
      $region47: #{bottleneck_forward.8} parent=39 // pred_region
        %p1460 = scmp.lt.s32.totalorder %s16, 1
        %s1461 = scalar_select %p1460, %s16, 1
        %s1462 = smul.addr %s1461, 2
        %s1463 = scalar_lea.vmem %s3, %s1462
      $region48: #{bottleneck_forward.8} parent=39 // pred_fallthru
        _
    $region40: #{bottleneck_forward.8} parent=5 // pred_fallthru
      _
  $region6: #{bottleneck_forward.8} parent=0 // loop_footer
    %s14 = sadd.s32 1, %s10
  $region7: #{bottleneck_forward.8} parent=0 // loop_footer_branch
    %9 = sbr.rel target = $region3
  $region8: #{bottleneck_forward.8} parent=0 // loop_exit
    _

// kernel: bottleneck_forward.11
$region0: #{bottleneck_forward.11}
  #allocation0 [shape = 'u32[]', space=smem, size = 0x4, offset = 0x4, fixed_abs, tag = 'smem constant byte address 0x4 - core index']
  #allocation1 [shape = 'u32[72,128]{1,0:T(1,128)}', space=vmem, size = 0x9000, scoped, tag = 'internal scratch']
  %s0 = inlined_call_operand.vmem [shape: f32[128,128], index: 0, kind: input, shape index: {}]
  %s1 = inlined_call_operand.vmem [shape: f32[1,128], index: 1, kind: input, shape index: {}]
  %s2 = inlined_call_operand.vmem [shape: f32[1,128], index: 2, kind: input, shape index: {}]
  %s3 = inlined_call_operand.vmem [shape: f32[128,128], index: 3, kind: input, shape index: {}]
  %s4 = inlined_call_operand.vmem [shape: f32[1,128], index: 4, kind: input, shape index: {}]
  %s5 = inlined_call_operand.vmem [shape: f32[1,128], index: 5, kind: input, shape index: {}]
  %s6 = inlined_call_operand.vmem [shape: f32[128,128], index: 6, kind: output, shape index: {}]
  %s7 = sld [smem:[#allocation0]]
  $region34: #{bottleneck_forward.11} parent=0
    _
  %s9 = ssub.s32 1, %s7
  %s10 = scalar_select 0, %s9, %s7
  // Predicated region
  $region2: #{bottleneck_forward.11} parent=0 // pred_check
    _
  $region3: #{bottleneck_forward.11} parent=0 // pred_check_branch
    %12 = sbr.rel (0) target = $region5
  $region4: #{bottleneck_forward.11} parent=0 // pred_region
    _
  $region5: #{bottleneck_forward.11} parent=0 // pred_fallthru
    _
  // Predicated region
  $region6: #{bottleneck_forward.11} parent=0 // pred_check
    _
  $region7: #{bottleneck_forward.11} parent=0 // pred_check_branch
    %14 = sbr.rel (0) target = $region9
  $region8: #{bottleneck_forward.11} parent=0 // pred_region
    _
  $region9: #{bottleneck_forward.11} parent=0 // pred_fallthru
    _
  // Predicated region
  $region10: #{bottleneck_forward.11} parent=0 // pred_check
    _
  $region11: #{bottleneck_forward.11} parent=0 // pred_check_branch
    %16 = sbr.rel (0) target = $region13
  $region12: #{bottleneck_forward.11} parent=0 // pred_region
    _
  $region13: #{bottleneck_forward.11} parent=0 // pred_fallthru
    _
  // Predicated region
  $region14: #{bottleneck_forward.11} parent=0 // pred_check
    _
  $region15: #{bottleneck_forward.11} parent=0 // pred_check_branch
    %18 = sbr.rel (0) target = $region17
  $region16: #{bottleneck_forward.11} parent=0 // pred_region
    _
  $region17: #{bottleneck_forward.11} parent=0 // pred_fallthru
    _
  // Predicated region
  $region18: #{bottleneck_forward.11} parent=0 // pred_check
    _
  $region19: #{bottleneck_forward.11} parent=0 // pred_check_branch
    %20 = sbr.rel (0) target = $region21
  $region20: #{bottleneck_forward.11} parent=0 // pred_region
    _
  $region21: #{bottleneck_forward.11} parent=0 // pred_fallthru
    _
  // Predicated region
  $region22: #{bottleneck_forward.11} parent=0 // pred_check
    _
  $region23: #{bottleneck_forward.11} parent=0 // pred_check_branch
    %22 = sbr.rel (0) target = $region25
  $region24: #{bottleneck_forward.11} parent=0 // pred_region
    _
  $region25: #{bottleneck_forward.11} parent=0 // pred_fallthru
    _
  %v23 = vld [vmem:[%s0] sm:$0xff]
  %v24 = vld [vmem:[%s0 + $0x8] sm:$0xff]
  %v25 = vld [vmem:[%s0 + $0x10] sm:$0xff]
  %v26 = vld [vmem:[%s0 + $0x18] sm:$0xff]
  %v27 = vld [vmem:[%s0 + $0x20] sm:$0xff]
  %v28 = vld [vmem:[%s0 + $0x28] sm:$0xff]
  %v29 = vld [vmem:[%s0 + $0x30] sm:$0xff]
  %v30 = vld [vmem:[%s0 + $0x38] sm:$0xff]
  %v31 = vld [vmem:[%s0 + $0x40] sm:$0xff]
  %v32 = vld [vmem:[%s0 + $0x48] sm:$0xff]
  %v33 = vld [vmem:[%s0 + $0x50] sm:$0xff]
  %v34 = vld [vmem:[%s0 + $0x58] sm:$0xff]
  %v35 = vld [vmem:[%s0 + $0x60] sm:$0xff]
  %v36 = vld [vmem:[%s0 + $0x68] sm:$0xff]
  %v37 = vld [vmem:[%s0 + $0x70] sm:$0xff]
  %v38 = vld [vmem:[%s0 + $0x78] sm:$0xff]
  %v39 = vld [vmem:[%s1] sm:$0x1]
  %v41 = vperm.slane %v39, 0
  %v43 = vmul.f32 %v23, %v41
  %v44 = vmul.f32 %v24, %v41
  %v45 = vmul.f32 %v25, %v41
  %v46 = vmul.f32 %v26, %v41
  %v47 = vmul.f32 %v27, %v41
  %v48 = vmul.f32 %v28, %v41
  %v49 = vmul.f32 %v29, %v41
  %v50 = vmul.f32 %v30, %v41
  %v51 = vmul.f32 %v31, %v41
  %v52 = vmul.f32 %v32, %v41
  %v53 = vmul.f32 %v33, %v41
  %v54 = vmul.f32 %v34, %v41
  %v55 = vmul.f32 %v35, %v41
  %v56 = vmul.f32 %v36, %v41
  %v57 = vmul.f32 %v37, %v41
  %v58 = vmul.f32 %v38, %v41
  %v59 = vld [vmem:[%s2] sm:$0x1]
  %v61 = vperm.slane %v59, 0
  %v63 = vadd.f32 %v43, %v61
  %v64 = vadd.f32 %v44, %v61
  %v65 = vadd.f32 %v45, %v61
  %v66 = vadd.f32 %v46, %v61
  %v67 = vadd.f32 %v47, %v61
  %v68 = vadd.f32 %v48, %v61
  %v69 = vadd.f32 %v49, %v61
  %v70 = vadd.f32 %v50, %v61
  %v71 = vadd.f32 %v51, %v61
  %v72 = vadd.f32 %v52, %v61
  %v73 = vadd.f32 %v53, %v61
  %v74 = vadd.f32 %v54, %v61
  %v75 = vadd.f32 %v55, %v61
  %v76 = vadd.f32 %v56, %v61
  %v77 = vadd.f32 %v57, %v61
  %v78 = vadd.f32 %v58, %v61
  %v79 = vld [vmem:[%s3] sm:$0xff]
  %v80 = vld [vmem:[%s3 + $0x8] sm:$0xff]
  %v81 = vld [vmem:[%s3 + $0x10] sm:$0xff]
  %v82 = vld [vmem:[%s3 + $0x18] sm:$0xff]
  %v83 = vld [vmem:[%s3 + $0x20] sm:$0xff]
  %v84 = vld [vmem:[%s3 + $0x28] sm:$0xff]
  %v85 = vld [vmem:[%s3 + $0x30] sm:$0xff]
  %v86 = vld [vmem:[%s3 + $0x38] sm:$0xff]
  %v87 = vld [vmem:[%s3 + $0x40] sm:$0xff]
  %v88 = vld [vmem:[%s3 + $0x48] sm:$0xff]
  %v89 = vld [vmem:[%s3 + $0x50] sm:$0xff]
  %v90 = vld [vmem:[%s3 + $0x58] sm:$0xff]
  %v91 = vld [vmem:[%s3 + $0x60] sm:$0xff]
  %v92 = vld [vmem:[%s3 + $0x68] sm:$0xff]
  %v93 = vld [vmem:[%s3 + $0x70] sm:$0xff]
  %v94 = vld [vmem:[%s3 + $0x78] sm:$0xff]
  %v95 = vld [vmem:[%s4] sm:$0x1]
  %v97 = vperm.slane %v95, 0
  %v99 = vmul.f32 %v79, %v97
  %v100 = vmul.f32 %v80, %v97
  %v101 = vmul.f32 %v81, %v97
  %v102 = vmul.f32 %v82, %v97
  %v103 = vmul.f32 %v83, %v97
  %v104 = vmul.f32 %v84, %v97
  %v105 = vmul.f32 %v85, %v97
  %v106 = vmul.f32 %v86, %v97
  %v107 = vmul.f32 %v87, %v97
  %v108 = vmul.f32 %v88, %v97
  %v109 = vmul.f32 %v89, %v97
  %v110 = vmul.f32 %v90, %v97
  %v111 = vmul.f32 %v91, %v97
  %v112 = vmul.f32 %v92, %v97
  %v113 = vmul.f32 %v93, %v97
  %v114 = vmul.f32 %v94, %v97
  %v115 = vadd.f32 %v63, %v99
  %v116 = vadd.f32 %v64, %v100
  %v117 = vadd.f32 %v65, %v101
  %v118 = vadd.f32 %v66, %v102
  %v119 = vadd.f32 %v67, %v103
  %v120 = vadd.f32 %v68, %v104
  %v121 = vadd.f32 %v69, %v105
  %v122 = vadd.f32 %v70, %v106
  %v123 = vadd.f32 %v71, %v107
  %v124 = vadd.f32 %v72, %v108
  %v125 = vadd.f32 %v73, %v109
  %v126 = vadd.f32 %v74, %v110
  %v127 = vadd.f32 %v75, %v111
  %v128 = vadd.f32 %v76, %v112
  %v129 = vadd.f32 %v77, %v113
  %v130 = vadd.f32 %v78, %v114
  %v131 = vld [vmem:[%s5] sm:$0x1]
  %v133 = vperm.slane %v131, 0
  %v135 = vadd.f32 %v115, %v133
  %v136 = vadd.f32 %v116, %v133
  %v137 = vadd.f32 %v117, %v133
  %v138 = vadd.f32 %v118, %v133
  %v139 = vadd.f32 %v119, %v133
  %v140 = vadd.f32 %v120, %v133
  %v141 = vadd.f32 %v121, %v133
  %v142 = vadd.f32 %v122, %v133
  %v143 = vadd.f32 %v123, %v133
  %v144 = vadd.f32 %v124, %v133
  %v145 = vadd.f32 %v125, %v133
  %v146 = vadd.f32 %v126, %v133
  %v147 = vadd.f32 %v127, %v133
  %v148 = vadd.f32 %v128, %v133
  %v149 = vadd.f32 %v129, %v133
  %v150 = vadd.f32 %v130, %v133
  %v151 = vmax.f32 %v135, 0.0
  %v152 = vmax.f32 %v136, 0.0
  %v153 = vmax.f32 %v137, 0.0
  %v154 = vmax.f32 %v138, 0.0
  %v155 = vmax.f32 %v139, 0.0
  %v156 = vmax.f32 %v140, 0.0
  %v157 = vmax.f32 %v141, 0.0
  %v158 = vmax.f32 %v142, 0.0
  %v159 = vmax.f32 %v143, 0.0
  %v160 = vmax.f32 %v144, 0.0
  %v161 = vmax.f32 %v145, 0.0
  %v162 = vmax.f32 %v146, 0.0
  %v163 = vmax.f32 %v147, 0.0
  %v164 = vmax.f32 %v148, 0.0
  %v165 = vmax.f32 %v149, 0.0
  %v166 = vmax.f32 %v150, 0.0
  %167 = vst [vmem:[%s6] sm:$0xff] %v151
  %168 = vst [vmem:[%s6 + $0x8] sm:$0xff] %v152
  %169 = vst [vmem:[%s6 + $0x10] sm:$0xff] %v153
  %170 = vst [vmem:[%s6 + $0x18] sm:$0xff] %v154
  %171 = vst [vmem:[%s6 + $0x20] sm:$0xff] %v155
  %172 = vst [vmem:[%s6 + $0x28] sm:$0xff] %v156
  %173 = vst [vmem:[%s6 + $0x30] sm:$0xff] %v157
  %174 = vst [vmem:[%s6 + $0x38] sm:$0xff] %v158
  %175 = vst [vmem:[%s6 + $0x40] sm:$0xff] %v159
  %176 = vst [vmem:[%s6 + $0x48] sm:$0xff] %v160
  %177 = vst [vmem:[%s6 + $0x50] sm:$0xff] %v161
  %178 = vst [vmem:[%s6 + $0x58] sm:$0xff] %v162
  %179 = vst [vmem:[%s6 + $0x60] sm:$0xff] %v163
  %180 = vst [vmem:[%s6 + $0x68] sm:$0xff] %v164
  %181 = vst [vmem:[%s6 + $0x70] sm:$0xff] %v165
  %182 = vst [vmem:[%s6 + $0x78] sm:$0xff] %v166
  // Predicated region
  $region26: #{bottleneck_forward.11} parent=0 // pred_check
    _
  $region27: #{bottleneck_forward.11} parent=0 // pred_check_branch
    %184 = sbr.rel (0) target = $region29
  $region28: #{bottleneck_forward.11} parent=0 // pred_region
    _
  $region29: #{bottleneck_forward.11} parent=0 // pred_fallthru
    _
  // Predicated region
  $region30: #{bottleneck_forward.11} parent=0 // pred_check
    _
  $region31: #{bottleneck_forward.11} parent=0 // pred_check_branch
    %186 = sbr.rel (0) target = $region33
  $region32: #{bottleneck_forward.11} parent=0 // pred_region
    _
  $region33: #{bottleneck_forward.11} parent=0 // pred_fallthru
    _

// kernel: bottleneck_forward.10
$region0: #{bottleneck_forward.10}
  #allocation0 [shape = 'u32[]', space=smem, size = 0x4, offset = 0x4, fixed_abs, tag = 'smem constant byte address 0x4 - core index']
  #allocation1 [shape = 'u32[72,128]{1,0:T(1,128)}', space=vmem, size = 0x9000, scoped, tag = 'internal scratch']
  %s0 = inlined_call_operand.vmem [shape: bf16[128,128], index: 0, kind: input, shape index: {}]
  %s1 = inlined_call_operand.vmem [shape: bf16[128,128], index: 1, kind: input, shape index: {}]
  %s2 = inlined_call_operand.vmem [shape: f32[128,128], index: 2, kind: output, shape index: {0}]
  %s3 = inlined_call_operand.vmem [shape: f32[1,2,128], index: 3, kind: output, shape index: {1}]
  %4 = xla_tuple %s2, %s3
  %s5 = sld [smem:[#allocation0]]
  $region26: #{bottleneck_forward.10} parent=0
    _
  %s7 = ssub.s32 1, %s5
  %s8 = scalar_select 0, %s7, %s5
  // Predicated region
  $region2: #{bottleneck_forward.10} parent=0 // pred_check
    _
  $region3: #{bottleneck_forward.10} parent=0 // pred_check_branch
    %10 = sbr.rel (0) target = $region5
  $region4: #{bottleneck_forward.10} parent=0 // pred_region
    _
  $region5: #{bottleneck_forward.10} parent=0 // pred_fallthru
    _
  // Predicated region
  $region6: #{bottleneck_forward.10} parent=0 // pred_check
    _
  $region7: #{bottleneck_forward.10} parent=0 // pred_check_branch
    %12 = sbr.rel (0) target = $region9
  $region8: #{bottleneck_forward.10} parent=0 // pred_region
    _
  $region9: #{bottleneck_forward.10} parent=0 // pred_fallthru
    _
  %v13 = vld [vmem:[%s0] sm:$0xf]
  %v14 = vld [vmem:[%s0 + $0x4] sm:$0xf]
  %v15 = vld [vmem:[%s0 + $0x8] sm:$0xf]
  %v16 = vld [vmem:[%s0 + $0xc] sm:$0xf]
  %v17 = vld [vmem:[%s0 + $0x10] sm:$0xf]
  %v18 = vld [vmem:[%s0 + $0x14] sm:$0xf]
  %v19 = vld [vmem:[%s0 + $0x18] sm:$0xf]
  %v20 = vld [vmem:[%s0 + $0x1c] sm:$0xf]
  %v21 = vld [vmem:[%s0 + $0x20] sm:$0xf]
  %v22 = vld [vmem:[%s0 + $0x24] sm:$0xf]
  %v23 = vld [vmem:[%s0 + $0x28] sm:$0xf]
  %v24 = vld [vmem:[%s0 + $0x2c] sm:$0xf]
  %v25 = vld [vmem:[%s0 + $0x30] sm:$0xf]
  %v26 = vld [vmem:[%s0 + $0x34] sm:$0xf]
  %v27 = vld [vmem:[%s0 + $0x38] sm:$0xf]
  %v28 = vld [vmem:[%s0 + $0x3c] sm:$0xf]
  %v29 = vld [vmem:[%s1] sm:$0xf]
  %v30 = vld [vmem:[%s1 + $0x4] sm:$0xf]
  %v31 = vld [vmem:[%s1 + $0x8] sm:$0xf]
  %v32 = vld [vmem:[%s1 + $0xc] sm:$0xf]
  %v33 = vld [vmem:[%s1 + $0x10] sm:$0xf]
  %v34 = vld [vmem:[%s1 + $0x14] sm:$0xf]
  %v35 = vld [vmem:[%s1 + $0x18] sm:$0xf]
  %v36 = vld [vmem:[%s1 + $0x1c] sm:$0xf]
  %v37 = vld [vmem:[%s1 + $0x20] sm:$0xf]
  %v38 = vld [vmem:[%s1 + $0x24] sm:$0xf]
  %v39 = vld [vmem:[%s1 + $0x28] sm:$0xf]
  %v40 = vld [vmem:[%s1 + $0x2c] sm:$0xf]
  %v41 = vld [vmem:[%s1 + $0x30] sm:$0xf]
  %v42 = vld [vmem:[%s1 + $0x34] sm:$0xf]
  %v43 = vld [vmem:[%s1 + $0x38] sm:$0xf]
  %v44 = vld [vmem:[%s1 + $0x3c] sm:$0xf]
  %v61 = vunpack.c.l.b16 %v13
  %v62 = vunpack.c.l.b16 %v14
  %v63 = vunpack.c.l.b16 %v15
  %v64 = vunpack.c.l.b16 %v16
  %v65 = vunpack.c.l.b16 %v17
  %v66 = vunpack.c.l.b16 %v18
  %v67 = vunpack.c.l.b16 %v19
  %v68 = vunpack.c.l.b16 %v20
  %v69 = vunpack.c.l.b16 %v21
  %v70 = vunpack.c.l.b16 %v22
  %v71 = vunpack.c.l.b16 %v23
  %v72 = vunpack.c.l.b16 %v24
  %v73 = vunpack.c.l.b16 %v25
  %v74 = vunpack.c.l.b16 %v26
  %v75 = vunpack.c.l.b16 %v27
  %v76 = vunpack.c.l.b16 %v28
  %v77 = vpack.c.b16 %v62, %v61
  %v78 = vpack.c.b16 %v64, %v63
  %v79 = vpack.c.b16 %v66, %v65
  %v80 = vpack.c.b16 %v68, %v67
  %v81 = vpack.c.b16 %v70, %v69
  %v82 = vpack.c.b16 %v72, %v71
  %v83 = vpack.c.b16 %v74, %v73
  %v84 = vpack.c.b16 %v76, %v75
  %v109 = vunpack.c.l.b16 %v29
  %v110 = vunpack.c.l.b16 %v30
  %v111 = vunpack.c.l.b16 %v31
  %v112 = vunpack.c.l.b16 %v32
  %v113 = vunpack.c.l.b16 %v33
  %v114 = vunpack.c.l.b16 %v34
  %v115 = vunpack.c.l.b16 %v35
  %v116 = vunpack.c.l.b16 %v36
  %v117 = vunpack.c.l.b16 %v37
  %v118 = vunpack.c.l.b16 %v38
  %v119 = vunpack.c.l.b16 %v39
  %v120 = vunpack.c.l.b16 %v40
  %v121 = vunpack.c.l.b16 %v41
  %v122 = vunpack.c.l.b16 %v42
  %v123 = vunpack.c.l.b16 %v43
  %v124 = vunpack.c.l.b16 %v44
  %v125 = vpack.c.b16 %v110, %v109
  %v126 = vpack.c.b16 %v112, %v111
  %v127 = vpack.c.b16 %v114, %v113
  %v128 = vpack.c.b16 %v116, %v115
  %v129 = vpack.c.b16 %v118, %v117
  %v130 = vpack.c.b16 %v120, %v119
  %v131 = vpack.c.b16 %v122, %v121
  %v132 = vpack.c.b16 %v124, %v123
  %141 = vmatpush.bf16.msra.mxu0 %v132
  %142 = vmatpush.bf16.msra.mxu0 %v131
  %143 = vmatpush.bf16.msra.mxu0 %v130
  %144 = vmatpush.bf16.msra.mxu0 %v129
  %145 = vmatpush.bf16.msra.mxu0 %v128
  %146 = vmatpush.bf16.msra.mxu0 %v127
  %147 = vmatpush.bf16.msra.mxu0 %v126
  %148 = vmatpush.bf16.msra.mxu0 %v125
  %149 = vmatmul.bf16.gmra.mxu0 %v77
  %v150 = vpop.f32.mrf.mxu0
  %v151 = vadd.f32 0.0, %v150
  %v152 = vpop.f32.mrf.mxu0
  %v153 = vadd.f32 0.0, %v152
  %154 = vmatmul.bf16.gmra.mxu0 %v78
  %v155 = vpop.f32.mrf.mxu0
  %v156 = vadd.f32 0.0, %v155
  %v157 = vpop.f32.mrf.mxu0
  %v158 = vadd.f32 0.0, %v157
  %159 = vmatmul.bf16.gmra.mxu0 %v79
  %v160 = vpop.f32.mrf.mxu0
  %v161 = vadd.f32 0.0, %v160
  %v162 = vpop.f32.mrf.mxu0
  %v163 = vadd.f32 0.0, %v162
  %164 = vmatmul.bf16.gmra.mxu0 %v80
  %v165 = vpop.f32.mrf.mxu0
  %v166 = vadd.f32 0.0, %v165
  %v167 = vpop.f32.mrf.mxu0
  %v168 = vadd.f32 0.0, %v167
  %169 = vmatmul.bf16.gmra.mxu0 %v81
  %v170 = vpop.f32.mrf.mxu0
  %v171 = vadd.f32 0.0, %v170
  %v172 = vpop.f32.mrf.mxu0
  %v173 = vadd.f32 0.0, %v172
  %174 = vmatmul.bf16.gmra.mxu0 %v82
  %v175 = vpop.f32.mrf.mxu0
  %v176 = vadd.f32 0.0, %v175
  %v177 = vpop.f32.mrf.mxu0
  %v178 = vadd.f32 0.0, %v177
  %179 = vmatmul.bf16.gmra.mxu0 %v83
  %v180 = vpop.f32.mrf.mxu0
  %v181 = vadd.f32 0.0, %v180
  %v182 = vpop.f32.mrf.mxu0
  %v183 = vadd.f32 0.0, %v182
  %184 = vmatmul.bf16.gmra.mxu0 %v84
  %v185 = vpop.f32.mrf.mxu0
  %v186 = vadd.f32 0.0, %v185
  %v187 = vpop.f32.mrf.mxu0
  %v188 = vadd.f32 0.0, %v187
  %189 = vdwg.mxu0
  %190 = vst [vmem:[%s2] sm:$0xff] %v151
  %191 = vst [vmem:[%s2 + $0x8] sm:$0xff] %v153
  %192 = vst [vmem:[%s2 + $0x10] sm:$0xff] %v156
  %193 = vst [vmem:[%s2 + $0x18] sm:$0xff] %v158
  %194 = vst [vmem:[%s2 + $0x20] sm:$0xff] %v161
  %195 = vst [vmem:[%s2 + $0x28] sm:$0xff] %v163
  %196 = vst [vmem:[%s2 + $0x30] sm:$0xff] %v166
  %197 = vst [vmem:[%s2 + $0x38] sm:$0xff] %v168
  %198 = vst [vmem:[%s2 + $0x40] sm:$0xff] %v171
  %199 = vst [vmem:[%s2 + $0x48] sm:$0xff] %v173
  %200 = vst [vmem:[%s2 + $0x50] sm:$0xff] %v176
  %201 = vst [vmem:[%s2 + $0x58] sm:$0xff] %v178
  %202 = vst [vmem:[%s2 + $0x60] sm:$0xff] %v181
  %203 = vst [vmem:[%s2 + $0x68] sm:$0xff] %v183
  %204 = vst [vmem:[%s2 + $0x70] sm:$0xff] %v186
  %205 = vst [vmem:[%s2 + $0x78] sm:$0xff] %v188
  %v206 = vadd.f32 %v151, %v153
  %v207 = vadd.f32 %v206, %v156
  %v208 = vadd.f32 %v207, %v158
  %v209 = vadd.f32 %v208, %v161
  %v210 = vadd.f32 %v209, %v163
  %v211 = vadd.f32 %v210, %v166
  %v212 = vadd.f32 %v211, %v168
  %v213 = vadd.f32 %v212, %v171
  %v214 = vadd.f32 %v213, %v173
  %v215 = vadd.f32 %v214, %v176
  %v216 = vadd.f32 %v215, %v178
  %v217 = vadd.f32 %v216, %v181
  %v218 = vadd.f32 %v217, %v183
  %v219 = vadd.f32 %v218, %v186
  %v220 = vadd.f32 %v219, %v188
  %v221 = vrot.slane %v220, 4
  %v222 = vadd.f32 %v220, %v221
  %v223 = vrot.slane %v222, 2
  %v224 = vadd.f32 %v222, %v223
  %v225 = vrot.slane %v224, 1
  %v226 = vadd.f32 %v224, %v225
  %v227 = vmul.f32 %v151, %v151
  %v228 = vmul.f32 %v153, %v153
  %v229 = vmul.f32 %v156, %v156
  %v230 = vmul.f32 %v158, %v158
  %v231 = vmul.f32 %v161, %v161
  %v232 = vmul.f32 %v163, %v163
  %v233 = vmul.f32 %v166, %v166
  %v234 = vmul.f32 %v168, %v168
  %v235 = vmul.f32 %v171, %v171
  %v236 = vmul.f32 %v173, %v173
  %v237 = vmul.f32 %v176, %v176
  %v238 = vmul.f32 %v178, %v178
  %v239 = vmul.f32 %v181, %v181
  %v240 = vmul.f32 %v183, %v183
  %v241 = vmul.f32 %v186, %v186
  %v242 = vmul.f32 %v188, %v188
  %v243 = vadd.f32 %v227, %v228
  %v244 = vadd.f32 %v243, %v229
  %v245 = vadd.f32 %v244, %v230
  %v246 = vadd.f32 %v245, %v231
  %v247 = vadd.f32 %v246, %v232
  %v248 = vadd.f32 %v247, %v233
  %v249 = vadd.f32 %v248, %v234
  %v250 = vadd.f32 %v249, %v235
  %v251 = vadd.f32 %v250, %v236
  %v252 = vadd.f32 %v251, %v237
  %v253 = vadd.f32 %v252, %v238
  %v254 = vadd.f32 %v253, %v239
  %v255 = vadd.f32 %v254, %v240
  %v256 = vadd.f32 %v255, %v241
  %v257 = vadd.f32 %v256, %v242
  %v258 = vrot.slane %v257, 4
  %v259 = vadd.f32 %v257, %v258
  %v260 = vrot.slane %v259, 2
  %v261 = vadd.f32 %v259, %v260
  %v262 = vrot.slane %v261, 1
  %v263 = vadd.f32 %v261, %v262
  %vm264 = vcmask 1040384
  %v265 = vsel %vm264, %v226, %v263
  %266 = vst [vmem:[%s3] sm:$0x3] %v265
  // Predicated region
  $region10: #{bottleneck_forward.10} parent=0 // pred_check
    _
  $region11: #{bottleneck_forward.10} parent=0 // pred_check_branch
    %268 = sbr.rel (0) target = $region13
  $region12: #{bottleneck_forward.10} parent=0 // pred_region
    _
  $region13: #{bottleneck_forward.10} parent=0 // pred_fallthru
    _
  // Predicated region
  $region14: #{bottleneck_forward.10} parent=0 // pred_check
    _
  $region15: #{bottleneck_forward.10} parent=0 // pred_check_branch
    %270 = sbr.rel (0) target = $region17
  $region16: #{bottleneck_forward.10} parent=0 // pred_region
    _
  $region17: #{bottleneck_forward.10} parent=0 // pred_fallthru
    _
  // Predicated region
  $region18: #{bottleneck_forward.10} parent=0 // pred_check
    _
  $region19: #{bottleneck_forward.10} parent=0 // pred_check_branch
    %272 = sbr.rel (0) target = $region21
  $region20: #{bottleneck_forward.10} parent=0 // pred_region
    _
  $region21: #{bottleneck_forward.10} parent=0 // pred_fallthru
    _
  // Predicated region
  $region22: #{bottleneck_forward.10} parent=0 // pred_check
    _
  $region23: #{bottleneck_forward.10} parent=0 // pred_check_branch
    %274 = sbr.rel (0) target = $region25
  $region24: #{bottleneck_forward.10} parent=0 // pred_region
    _
  $region25: #{bottleneck_forward.10} parent=0 // pred_fallthru
    _

</llo_original>
